<compile_context>
chip_gen: v6e
topology: v6e:2x2x1
jax: 0.10.0
libtpu: 0.0.40
codegen_flags: <defaults>
</compile_context>

<pallas_src>
import jax
import jax.numpy as jnp
from jax.experimental import pallas as pl
from jax.experimental.pallas import tpu as pltpu

HIDDEN_DIMS = (128, 256, 512, 1024)
LANE = 128
SUBLANE_BF16 = 16  # bf16 rows pack in pairs -> second-minor tile is 16


def _round_up(x, m):
    return (x + m - 1) // m * m


def _cdiv(a, b):
    return -(-a // b)


def _mlp_kernel(z_ref,
                w1, b1, w2, b2, w3, b3, w4, b4, w5, b5,
                out_ref):
    """Fused 5-layer MLP for one batch tile.

    z and weights are bf16, matmuls accumulate in f32 on the MXU; bias add,
    LeakyReLU(0.2) and tanh run in f32 on the VPU/EUP. Inter-layer activations
    are materialized in bf16 to halve VMEM traffic between layers.
    """
    def linear(x_bf16, w_ref, b_ref):
        acc = jnp.dot(x_bf16, w_ref[...], preferred_element_type=jnp.float32)
        return acc + b_ref[...]

    def leaky_relu_bf16(x_f32):
        # max(x, 0.2*x) == LeakyReLU(0.2); store activation as bf16.
        return jnp.maximum(x_f32, 0.2 * x_f32).astype(jnp.bfloat16)

    h = leaky_relu_bf16(linear(z_ref[...], w1, b1))      # (TB, 128)
    h = leaky_relu_bf16(linear(h, w2, b2))               # (TB, 256)
    h = leaky_relu_bf16(linear(h, w3, b3))               # (TB, 512)
    h = leaky_relu_bf16(linear(h, w4, b4))               # (TB, 1024)
    out_ref[...] = jnp.tanh(linear(h, w5, b5)).astype(out_ref.dtype)  # (TB, D_pad)


def prepare_params(params, latent_dim, domain_size):
    """One-time preprocessing: zero-pad to lane-dense shapes, cast weights to
    bf16 (biases stay f32). Call once; reuse the result for every forward."""
    L_pad = _round_up(latent_dim, LANE)
    D_pad = _round_up(domain_size, LANE)
    dims_in = [latent_dim] + list(HIDDEN_DIMS)
    dims_out = list(HIDDEN_DIMS) + [domain_size]
    pad_in = [L_pad] + list(HIDDEN_DIMS)
    pad_out = list(HIDDEN_DIMS) + [D_pad]

    flat = []
    for (w, b), din, dout, pdin, pdout in zip(params, dims_in, dims_out,
                                              pad_in, pad_out):
        w_p = jnp.zeros((pdin, pdout), jnp.float32).at[:din, :dout].set(
            w.astype(jnp.float32))
        b_p = jnp.zeros((1, pdout), jnp.float32).at[:, :dout].set(
            jnp.reshape(b, (1, -1)).astype(jnp.float32))
        flat.extend([w_p.astype(jnp.bfloat16), b_p])
    flat = tuple(jax.block_until_ready(a) for a in flat)
    return {
        "flat": flat,
        "latent_dim": latent_dim,
        "domain_size": domain_size,
        "L_pad": L_pad,
        "D_pad": D_pad,
    }


def normal_generator_forward(z, prepared, *, batch_tile=512):
    """Run the generator on already-prepared params.

    z: (B, latent_dim) float. Returns (B, domain_size) f32.
    """
    B, latent = z.shape
    assert latent == prepared["latent_dim"], (latent, prepared["latent_dim"])
    domain = prepared["domain_size"]
    L_pad, D_pad = prepared["L_pad"], prepared["D_pad"]
    flat = prepared["flat"]

    # Batch tiling: >=2 grid steps when B is large enough (lets "parallel"
    # shard across v7x's two TensorCores), tiles evened out so padding waste
    # is <16 rows per tile, TB bounded by batch_tile.
    if B > SUBLANE_BF16:
        num_tiles = max(2, _cdiv(B, batch_tile))
    else:
        num_tiles = 1
    TB = _round_up(_cdiv(B, num_tiles), SUBLANE_BF16)
    B_pad = TB * num_tiles
    grid = (num_tiles,)

    # Zero-pad z to a lane/sublane-dense bf16 slab (halves the z DMA stream).
    z_p = jnp.zeros((B_pad, L_pad), jnp.bfloat16).at[:B, :latent].set(
        z.astype(jnp.bfloat16))

    z_spec = pl.BlockSpec((TB, L_pad), lambda i: (i, 0))
    out_spec = pl.BlockSpec((TB, D_pad), lambda i: (i, 0))

    # VMEM budget pieces.
    param_bytes = sum(int(a.size) * a.dtype.itemsize for a in flat)
    io_bytes = 2 * (TB * L_pad * 2 + TB * D_pad * 4)          # dbl-buffered z(bf16)/out(f32)
    act_bytes = TB * (sum(HIDDEN_DIMS) + D_pad) * 2 + TB * HIDDEN_DIMS[-1] * 4

    flops = 2 * B_pad * (L_pad * HIDDEN_DIMS[0]
                         + sum(a * b for a, b in zip(HIDDEN_DIMS[:-1], HIDDEN_DIMS[1:]))
                         + HIDDEN_DIMS[-1] * D_pad)
    cost = pl.CostEstimate(
        flops=flops,
        transcendentals=B_pad * D_pad,
        bytes_accessed=param_bytes + int(z_p.size) * 2 + B_pad * D_pad * 4,
    )

    def build(single_buffer_weights):
        if single_buffer_weights:
            # Constant index_map across the grid -> one resident buffer suffices.
            w_specs = [pl.BlockSpec(a.shape, lambda i: (0, 0),
                                    pipeline_mode=pl.Buffered(1)) for a in flat]
            weight_mult = 1
        else:
            w_specs = [pl.BlockSpec(a.shape, lambda i: (0, 0)) for a in flat]
            weight_mult = 2
        vmem_limit = max(
            16 << 20,
            min(48 << 20,
                _round_up(weight_mult * param_bytes + io_bytes + act_bytes
                          + (4 << 20), 1 << 20)))
        return pl.pallas_call(
            _mlp_kernel,
            out_shape=jax.ShapeDtypeStruct((B_pad, D_pad), jnp.float32),
            grid=grid,
            in_specs=[z_spec] + w_specs,
            out_specs=out_spec,
            compiler_params=pltpu.CompilerParams(
                dimension_semantics=("parallel",),
                vmem_limit_bytes=vmem_limit,
            ),
            cost_estimate=cost,
        )

    # TODO(synk): for very large domain_size (D_pad >= ~8K) split the final
    # 1024 -> D_pad layer into its own pallas_call tiled over N so w5 + the
    # out double-buffer stay inside v7x's 64 MiB VMEM.
    try:
        out_p = build(True)(z_p, *flat)
    except Exception:
        # pipeline_mode=Buffered(1) unsupported on this jax build: fall back to
        # default double-buffered resident weights (VMEM limit adjusted).
        out_p = build(False)(z_p, *flat)

    return out_p[:B, :domain]


def init_params(key, latent_dim, domain_size):
    """Deterministic init matching nn.Linear's default U(-1/sqrt(in), 1/sqrt(in)).

    Returns weights already transposed to (in, out) and biases as (1, out)."""
    dims = [latent_dim, *HIDDEN_DIMS, domain_size]
    params = []
    for i in range(len(dims) - 1):
        fan_in, fan_out = dims[i], dims[i + 1]
        key, kw, kb = jax.random.split(key, 3)
        bound = 1.0 / (fan_in ** 0.5)
        w = jax.random.uniform(kw, (fan_in, fan_out), jnp.float32, -bound, bound)
        b = jax.random.uniform(kb, (1, fan_out), jnp.float32, -bound, bound)
        params.append((w, b))
    return params


def reference_forward_f32(z, params):
    """Pure-f32 pure-JAX reference."""
    h = z
    for i, (w, b) in enumerate(params):
        h = h @ w + jnp.reshape(b, (1, -1))
        if i < len(params) - 1:
            h = jnp.maximum(h, 0.2 * h)
        else:
            h = jnp.tanh(h)
    return h


def reference_forward_matched(z, params):
    """Pure-JAX reference with the same precision recipe as the kernel
    (bf16 matmul operands, f32 accumulation, f32 elementwise)."""
    h = z.astype(jnp.float32)
    for i, (w, b) in enumerate(params):
        h = jnp.dot(h.astype(jnp.bfloat16), w.astype(jnp.bfloat16),
                    preferred_element_type=jnp.float32) + jnp.reshape(b, (1, -1))
        if i < len(params) - 1:
            h = jnp.maximum(h, 0.2 * h)
        else:
            h = jnp.tanh(h)
    return h


if __name__ == "__main__":
    key = jax.random.PRNGKey(0)
    k_params, k_z = jax.random.split(key)

    B = 2
    LATENT_DIM = 32
    DOMAIN_SIZE = 64

    params = init_params(k_params, LATENT_DIM, DOMAIN_SIZE)
    z = jax.random.normal(k_z, (B, LATENT_DIM), jnp.float32)

    # One-time preprocessing (pad + bf16 cast), reused across forwards.
    prepared = prepare_params(params, LATENT_DIM, DOMAIN_SIZE)

    out = normal_generator_forward(z, prepared)
    out = jax.block_until_ready(out)
    assert out.shape == (B, DOMAIN_SIZE), out.shape

    # Matched-precision reference (bf16 matmul operands, f32 accumulation).
    ref_matched = reference_forward_matched(z, params)
    assert jnp.allclose(out, ref_matched, atol=2e-2, rtol=2e-2), \
        "mismatch vs matched-precision reference"

    # Full-f32 reference — loose check (bf16 quantization error only).
    ref_f32 = reference_forward_f32(z, params)
    assert jnp.allclose(out, ref_f32, atol=5e-2, rtol=5e-2), \
        "mismatch vs f32 reference"

    print("KERNEL_OK")
</pallas_src>

<mosaic_0001>
module attributes {stable_mosaic.version = 11 : i64} {
  func.func @_mlp_kernel(%arg0: i32, %arg1: memref<16x128xbf16, #tpu.memory_space<vmem>>, %arg2: memref<128x128xbf16, #tpu.memory_space<vmem>>, %arg3: memref<1x128xf32, #tpu.memory_space<vmem>>, %arg4: memref<128x256xbf16, #tpu.memory_space<vmem>>, %arg5: memref<1x256xf32, #tpu.memory_space<vmem>>, %arg6: memref<256x512xbf16, #tpu.memory_space<vmem>>, %arg7: memref<1x512xf32, #tpu.memory_space<vmem>>, %arg8: memref<512x1024xbf16, #tpu.memory_space<vmem>>, %arg9: memref<1x1024xf32, #tpu.memory_space<vmem>>, %arg10: memref<1024x128xbf16, #tpu.memory_space<vmem>>, %arg11: memref<1x128xf32, #tpu.memory_space<vmem>>, %arg12: memref<16x128xf32, #tpu.memory_space<vmem>>) attributes {dimension_semantics = [#tpu.dimension_semantics<parallel>], iteration_bounds = array<i64: 1>, scalar_prefetch = 0 : i64, scratch_operands = 0 : i64, tpu.core_type = #tpu.core_type<tc>, window_params = [{transform_indices = @transform_0, window_bounds = array<i64: 16, 128>}, {pipeline_mode = #tpu.pipeline_mode<synchronous>, transform_indices = @transform_1, window_bounds = array<i64: 128, 128>}, {pipeline_mode = #tpu.pipeline_mode<synchronous>, transform_indices = @transform_2, window_bounds = array<i64: 1, 128>}, {pipeline_mode = #tpu.pipeline_mode<synchronous>, transform_indices = @transform_3, window_bounds = array<i64: 128, 256>}, {pipeline_mode = #tpu.pipeline_mode<synchronous>, transform_indices = @transform_4, window_bounds = array<i64: 1, 256>}, {pipeline_mode = #tpu.pipeline_mode<synchronous>, transform_indices = @transform_5, window_bounds = array<i64: 256, 512>}, {pipeline_mode = #tpu.pipeline_mode<synchronous>, transform_indices = @transform_6, window_bounds = array<i64: 1, 512>}, {pipeline_mode = #tpu.pipeline_mode<synchronous>, transform_indices = @transform_7, window_bounds = array<i64: 512, 1024>}, {pipeline_mode = #tpu.pipeline_mode<synchronous>, transform_indices = @transform_8, window_bounds = array<i64: 1, 1024>}, {pipeline_mode = #tpu.pipeline_mode<synchronous>, transform_indices = @transform_9, window_bounds = array<i64: 1024, 128>}, {pipeline_mode = #tpu.pipeline_mode<synchronous>, transform_indices = @transform_10, window_bounds = array<i64: 1, 128>}, {transform_indices = @transform_11, window_bounds = array<i64: 16, 128>}]} {
    %c0 = arith.constant 0 : index
    %c0_0 = arith.constant 0 : index
    %0 = vector.load %arg1[%c0, %c0_0] : memref<16x128xbf16, #tpu.memory_space<vmem>>, vector<16x128xbf16>
    %c0_1 = arith.constant 0 : index
    %c0_2 = arith.constant 0 : index
    %1 = vector.load %arg2[%c0_1, %c0_2] : memref<128x128xbf16, #tpu.memory_space<vmem>>, vector<128x128xbf16>
    %cst = arith.constant dense<0.000000e+00> : vector<16x128xf32>
    %2 = tpu.matmul %0, %1, %cst {dimension_numbers = #tpu.dot_dimension_numbers<[1], [0], [0], [1], [0, 0, 1, 1], [], []>} : vector<16x128xbf16>, vector<128x128xbf16>, vector<16x128xf32> -> vector<16x128xf32>
    %c0_3 = arith.constant 0 : index
    %c0_4 = arith.constant 0 : index
    %3 = vector.load %arg3[%c0_3, %c0_4] : memref<1x128xf32, #tpu.memory_space<vmem>>, vector<1x128xf32>
    %4 = vector.broadcast %3 : vector<1x128xf32> to vector<16x128xf32>
    %5 = arith.addf %2, %4 : vector<16x128xf32>
    %cst_5 = arith.constant 2.000000e-01 : f32
    %6 = vector.broadcast %cst_5 : f32 to vector<16x128xf32>
    %7 = arith.mulf %6, %5 : vector<16x128xf32>
    %8 = arith.maximumf %5, %7 : vector<16x128xf32>
    %9 = arith.truncf %8 : vector<16x128xf32> to vector<16x128xbf16>
    %c0_6 = arith.constant 0 : index
    %c0_7 = arith.constant 0 : index
    %10 = vector.load %arg4[%c0_6, %c0_7] : memref<128x256xbf16, #tpu.memory_space<vmem>>, vector<128x256xbf16>
    %cst_8 = arith.constant dense<0.000000e+00> : vector<16x256xf32>
    %11 = tpu.matmul %9, %10, %cst_8 {dimension_numbers = #tpu.dot_dimension_numbers<[1], [0], [0], [1], [0, 0, 1, 1], [], []>} : vector<16x128xbf16>, vector<128x256xbf16>, vector<16x256xf32> -> vector<16x256xf32>
    %c0_9 = arith.constant 0 : index
    %c0_10 = arith.constant 0 : index
    %12 = vector.load %arg5[%c0_9, %c0_10] : memref<1x256xf32, #tpu.memory_space<vmem>>, vector<1x256xf32>
    %13 = vector.broadcast %12 : vector<1x256xf32> to vector<16x256xf32>
    %14 = arith.addf %11, %13 : vector<16x256xf32>
    %cst_11 = arith.constant 2.000000e-01 : f32
    %15 = vector.broadcast %cst_11 : f32 to vector<16x256xf32>
    %16 = arith.mulf %15, %14 : vector<16x256xf32>
    %17 = arith.maximumf %14, %16 : vector<16x256xf32>
    %18 = arith.truncf %17 : vector<16x256xf32> to vector<16x256xbf16>
    %c0_12 = arith.constant 0 : index
    %c0_13 = arith.constant 0 : index
    %19 = vector.load %arg6[%c0_12, %c0_13] : memref<256x512xbf16, #tpu.memory_space<vmem>>, vector<256x512xbf16>
    %cst_14 = arith.constant dense<0.000000e+00> : vector<16x512xf32>
    %20 = tpu.matmul %18, %19, %cst_14 {dimension_numbers = #tpu.dot_dimension_numbers<[1], [0], [0], [1], [0, 0, 1, 1], [], []>} : vector<16x256xbf16>, vector<256x512xbf16>, vector<16x512xf32> -> vector<16x512xf32>
    %c0_15 = arith.constant 0 : index
    %c0_16 = arith.constant 0 : index
    %21 = vector.load %arg7[%c0_15, %c0_16] : memref<1x512xf32, #tpu.memory_space<vmem>>, vector<1x512xf32>
    %22 = vector.broadcast %21 : vector<1x512xf32> to vector<16x512xf32>
    %23 = arith.addf %20, %22 : vector<16x512xf32>
    %cst_17 = arith.constant 2.000000e-01 : f32
    %24 = vector.broadcast %cst_17 : f32 to vector<16x512xf32>
    %25 = arith.mulf %24, %23 : vector<16x512xf32>
    %26 = arith.maximumf %23, %25 : vector<16x512xf32>
    %27 = arith.truncf %26 : vector<16x512xf32> to vector<16x512xbf16>
    %c0_18 = arith.constant 0 : index
    %c0_19 = arith.constant 0 : index
    %28 = vector.load %arg8[%c0_18, %c0_19] : memref<512x1024xbf16, #tpu.memory_space<vmem>>, vector<512x1024xbf16>
    %cst_20 = arith.constant dense<0.000000e+00> : vector<16x1024xf32>
    %29 = tpu.matmul %27, %28, %cst_20 {dimension_numbers = #tpu.dot_dimension_numbers<[1], [0], [0], [1], [0, 0, 1, 1], [], []>} : vector<16x512xbf16>, vector<512x1024xbf16>, vector<16x1024xf32> -> vector<16x1024xf32>
    %c0_21 = arith.constant 0 : index
    %c0_22 = arith.constant 0 : index
    %30 = vector.load %arg9[%c0_21, %c0_22] : memref<1x1024xf32, #tpu.memory_space<vmem>>, vector<1x1024xf32>
    %31 = vector.broadcast %30 : vector<1x1024xf32> to vector<16x1024xf32>
    %32 = arith.addf %29, %31 : vector<16x1024xf32>
    %cst_23 = arith.constant 2.000000e-01 : f32
    %33 = vector.broadcast %cst_23 : f32 to vector<16x1024xf32>
    %34 = arith.mulf %33, %32 : vector<16x1024xf32>
    %35 = arith.maximumf %32, %34 : vector<16x1024xf32>
    %36 = arith.truncf %35 : vector<16x1024xf32> to vector<16x1024xbf16>
    %c0_24 = arith.constant 0 : index
    %c0_25 = arith.constant 0 : index
    %37 = vector.load %arg10[%c0_24, %c0_25] : memref<1024x128xbf16, #tpu.memory_space<vmem>>, vector<1024x128xbf16>
    %cst_26 = arith.constant dense<0.000000e+00> : vector<16x128xf32>
    %38 = tpu.matmul %36, %37, %cst_26 {dimension_numbers = #tpu.dot_dimension_numbers<[1], [0], [0], [1], [0, 0, 1, 1], [], []>} : vector<16x1024xbf16>, vector<1024x128xbf16>, vector<16x128xf32> -> vector<16x128xf32>
    %c0_27 = arith.constant 0 : index
    %c0_28 = arith.constant 0 : index
    %39 = vector.load %arg11[%c0_27, %c0_28] : memref<1x128xf32, #tpu.memory_space<vmem>>, vector<1x128xf32>
    %40 = vector.broadcast %39 : vector<1x128xf32> to vector<16x128xf32>
    %41 = arith.addf %38, %40 : vector<16x128xf32>
    %42 = math.tanh %41 : vector<16x128xf32>
    %c0_29 = arith.constant 0 : index
    %c0_30 = arith.constant 0 : index
    %43 = vector.load %arg12[%c0_29, %c0_30] : memref<16x128xf32, #tpu.memory_space<vmem>>, vector<16x128xf32>
    tpu.vector_store %arg12[%c0_29, %c0_30], %42 {strides = array<i32>} : memref<16x128xf32, #tpu.memory_space<vmem>>, vector<16x128xf32>,
    return
  }
  func.func @transform_0(%arg0: i32) -> (i32, i32) {
    %c0_i32 = arith.constant 0 : i32
    %c0_i32_0 = arith.constant 0 : i32
    return %arg0, %c0_i32 : i32, i32
  }
  func.func @transform_1(%arg0: i32) -> (i32, i32) {
    %c0_i32 = arith.constant 0 : i32
    %c0_i32_0 = arith.constant 0 : i32
    %c0_i32_1 = arith.constant 0 : i32
    return %c0_i32, %c0_i32_0 : i32, i32
  }
  func.func @transform_2(%arg0: i32) -> (i32, i32) {
    %c0_i32 = arith.constant 0 : i32
    %c0_i32_0 = arith.constant 0 : i32
    %c0_i32_1 = arith.constant 0 : i32
    return %c0_i32, %c0_i32_0 : i32, i32
  }
  func.func @transform_3(%arg0: i32) -> (i32, i32) {
    %c0_i32 = arith.constant 0 : i32
    %c0_i32_0 = arith.constant 0 : i32
    %c0_i32_1 = arith.constant 0 : i32
    return %c0_i32, %c0_i32_0 : i32, i32
  }
  func.func @transform_4(%arg0: i32) -> (i32, i32) {
    %c0_i32 = arith.constant 0 : i32
    %c0_i32_0 = arith.constant 0 : i32
    %c0_i32_1 = arith.constant 0 : i32
    return %c0_i32, %c0_i32_0 : i32, i32
  }
  func.func @transform_5(%arg0: i32) -> (i32, i32) {
    %c0_i32 = arith.constant 0 : i32
    %c0_i32_0 = arith.constant 0 : i32
    %c0_i32_1 = arith.constant 0 : i32
    return %c0_i32, %c0_i32_0 : i32, i32
  }
  func.func @transform_6(%arg0: i32) -> (i32, i32) {
    %c0_i32 = arith.constant 0 : i32
    %c0_i32_0 = arith.constant 0 : i32
    %c0_i32_1 = arith.constant 0 : i32
    return %c0_i32, %c0_i32_0 : i32, i32
  }
  func.func @transform_7(%arg0: i32) -> (i32, i32) {
    %c0_i32 = arith.constant 0 : i32
    %c0_i32_0 = arith.constant 0 : i32
    %c0_i32_1 = arith.constant 0 : i32
    return %c0_i32, %c0_i32_0 : i32, i32
  }
  func.func @transform_8(%arg0: i32) -> (i32, i32) {
    %c0_i32 = arith.constant 0 : i32
    %c0_i32_0 = arith.constant 0 : i32
    %c0_i32_1 = arith.constant 0 : i32
    return %c0_i32, %c0_i32_0 : i32, i32
  }
  func.func @transform_9(%arg0: i32) -> (i32, i32) {
    %c0_i32 = arith.constant 0 : i32
    %c0_i32_0 = arith.constant 0 : i32
    %c0_i32_1 = arith.constant 0 : i32
    return %c0_i32, %c0_i32_0 : i32, i32
  }
  func.func @transform_10(%arg0: i32) -> (i32, i32) {
    %c0_i32 = arith.constant 0 : i32
    %c0_i32_0 = arith.constant 0 : i32
    %c0_i32_1 = arith.constant 0 : i32
    return %c0_i32, %c0_i32_0 : i32, i32
  }
  func.func @transform_11(%arg0: i32) -> (i32, i32) {
    %c0_i32 = arith.constant 0 : i32
    %c0_i32_0 = arith.constant 0 : i32
    return %arg0, %c0_i32 : i32, i32
  }
}

module attributes {stable_mosaic.version = 11 : i64} {
  func.func @_mlp_kernel(%arg0: i32, %arg1: memref<16x128xbf16, #tpu.memory_space<vmem>>, %arg2: memref<128x128xbf16, #tpu.memory_space<vmem>>, %arg3: memref<1x128xf32, #tpu.memory_space<vmem>>, %arg4: memref<128x256xbf16, #tpu.memory_space<vmem>>, %arg5: memref<1x256xf32, #tpu.memory_space<vmem>>, %arg6: memref<256x512xbf16, #tpu.memory_space<vmem>>, %arg7: memref<1x512xf32, #tpu.memory_space<vmem>>, %arg8: memref<512x1024xbf16, #tpu.memory_space<vmem>>, %arg9: memref<1x1024xf32, #tpu.memory_space<vmem>>, %arg10: memref<1024x128xbf16, #tpu.memory_space<vmem>>, %arg11: memref<1x128xf32, #tpu.memory_space<vmem>>, %arg12: memref<16x128xf32, #tpu.memory_space<vmem>>) attributes {dimension_semantics = [#tpu.dimension_semantics<parallel>], iteration_bounds = array<i64: 1>, scalar_prefetch = 0 : i64, scratch_operands = 0 : i64, tpu.core_type = #tpu.core_type<tc>, window_params = [{transform_indices = @transform_0, window_bounds = array<i64: 16, 128>}, {pipeline_mode = #tpu.pipeline_mode<synchronous>, transform_indices = @transform_1, window_bounds = array<i64: 128, 128>}, {pipeline_mode = #tpu.pipeline_mode<synchronous>, transform_indices = @transform_2, window_bounds = array<i64: 1, 128>}, {pipeline_mode = #tpu.pipeline_mode<synchronous>, transform_indices = @transform_3, window_bounds = array<i64: 128, 256>}, {pipeline_mode = #tpu.pipeline_mode<synchronous>, transform_indices = @transform_4, window_bounds = array<i64: 1, 256>}, {pipeline_mode = #tpu.pipeline_mode<synchronous>, transform_indices = @transform_5, window_bounds = array<i64: 256, 512>}, {pipeline_mode = #tpu.pipeline_mode<synchronous>, transform_indices = @transform_6, window_bounds = array<i64: 1, 512>}, {pipeline_mode = #tpu.pipeline_mode<synchronous>, transform_indices = @transform_7, window_bounds = array<i64: 512, 1024>}, {pipeline_mode = #tpu.pipeline_mode<synchronous>, transform_indices = @transform_8, window_bounds = array<i64: 1, 1024>}, {pipeline_mode = #tpu.pipeline_mode<synchronous>, transform_indices = @transform_9, window_bounds = array<i64: 1024, 128>}, {pipeline_mode = #tpu.pipeline_mode<synchronous>, transform_indices = @transform_10, window_bounds = array<i64: 1, 128>}, {transform_indices = @transform_11, window_bounds = array<i64: 16, 128>}]} {
    %c0 = arith.constant 0 : index
    %c0_0 = arith.constant 0 : index
    %0 = vector.load %arg1[%c0, %c0_0] : memref<16x128xbf16, #tpu.memory_space<vmem>>, vector<16x128xbf16>
    %c0_1 = arith.constant 0 : index
    %c0_2 = arith.constant 0 : index
    %1 = vector.load %arg2[%c0_1, %c0_2] : memref<128x128xbf16, #tpu.memory_space<vmem>>, vector<128x128xbf16>
    %cst = arith.constant dense<0.000000e+00> : vector<16x128xf32>
    %2 = tpu.matmul %0, %1, %cst {dimension_numbers = #tpu.dot_dimension_numbers<[1], [0], [0], [1], [0, 0, 1, 1], [], []>} : vector<16x128xbf16>, vector<128x128xbf16>, vector<16x128xf32> -> vector<16x128xf32>
    %c0_3 = arith.constant 0 : index
    %c0_4 = arith.constant 0 : index
    %3 = vector.load %arg3[%c0_3, %c0_4] : memref<1x128xf32, #tpu.memory_space<vmem>>, vector<1x128xf32>
    %4 = vector.broadcast %3 : vector<1x128xf32> to vector<16x128xf32>
    %5 = arith.addf %2, %4 : vector<16x128xf32>
    %cst_5 = arith.constant 2.000000e-01 : f32
    %6 = vector.broadcast %cst_5 : f32 to vector<16x128xf32>
    %7 = arith.mulf %6, %5 : vector<16x128xf32>
    %8 = arith.maximumf %5, %7 : vector<16x128xf32>
    %9 = arith.truncf %8 : vector<16x128xf32> to vector<16x128xbf16>
    %c0_6 = arith.constant 0 : index
    %c0_7 = arith.constant 0 : index
    %10 = vector.load %arg4[%c0_6, %c0_7] : memref<128x256xbf16, #tpu.memory_space<vmem>>, vector<128x256xbf16>
    %cst_8 = arith.constant dense<0.000000e+00> : vector<16x256xf32>
    %11 = tpu.matmul %9, %10, %cst_8 {dimension_numbers = #tpu.dot_dimension_numbers<[1], [0], [0], [1], [0, 0, 1, 1], [], []>} : vector<16x128xbf16>, vector<128x256xbf16>, vector<16x256xf32> -> vector<16x256xf32>
    %c0_9 = arith.constant 0 : index
    %c0_10 = arith.constant 0 : index
    %12 = vector.load %arg5[%c0_9, %c0_10] : memref<1x256xf32, #tpu.memory_space<vmem>>, vector<1x256xf32>
    %13 = vector.broadcast %12 : vector<1x256xf32> to vector<16x256xf32>
    %14 = arith.addf %11, %13 : vector<16x256xf32>
    %cst_11 = arith.constant 2.000000e-01 : f32
    %15 = vector.broadcast %cst_11 : f32 to vector<16x256xf32>
    %16 = arith.mulf %15, %14 : vector<16x256xf32>
    %17 = arith.maximumf %14, %16 : vector<16x256xf32>
    %18 = arith.truncf %17 : vector<16x256xf32> to vector<16x256xbf16>
    %c0_12 = arith.constant 0 : index
    %c0_13 = arith.constant 0 : index
    %19 = vector.load %arg6[%c0_12, %c0_13] : memref<256x512xbf16, #tpu.memory_space<vmem>>, vector<256x512xbf16>
    %cst_14 = arith.constant dense<0.000000e+00> : vector<16x512xf32>
    %20 = tpu.matmul %18, %19, %cst_14 {dimension_numbers = #tpu.dot_dimension_numbers<[1], [0], [0], [1], [0, 0, 1, 1], [], []>} : vector<16x256xbf16>, vector<256x512xbf16>, vector<16x512xf32> -> vector<16x512xf32>
    %c0_15 = arith.constant 0 : index
    %c0_16 = arith.constant 0 : index
    %21 = vector.load %arg7[%c0_15, %c0_16] : memref<1x512xf32, #tpu.memory_space<vmem>>, vector<1x512xf32>
    %22 = vector.broadcast %21 : vector<1x512xf32> to vector<16x512xf32>
    %23 = arith.addf %20, %22 : vector<16x512xf32>
    %cst_17 = arith.constant 2.000000e-01 : f32
    %24 = vector.broadcast %cst_17 : f32 to vector<16x512xf32>
    %25 = arith.mulf %24, %23 : vector<16x512xf32>
    %26 = arith.maximumf %23, %25 : vector<16x512xf32>
    %27 = arith.truncf %26 : vector<16x512xf32> to vector<16x512xbf16>
    %c0_18 = arith.constant 0 : index
    %c0_19 = arith.constant 0 : index
    %28 = vector.load %arg8[%c0_18, %c0_19] : memref<512x1024xbf16, #tpu.memory_space<vmem>>, vector<512x1024xbf16>
    %cst_20 = arith.constant dense<0.000000e+00> : vector<16x1024xf32>
    %29 = tpu.matmul %27, %28, %cst_20 {dimension_numbers = #tpu.dot_dimension_numbers<[1], [0], [0], [1], [0, 0, 1, 1], [], []>} : vector<16x512xbf16>, vector<512x1024xbf16>, vector<16x1024xf32> -> vector<16x1024xf32>
    %c0_21 = arith.constant 0 : index
    %c0_22 = arith.constant 0 : index
    %30 = vector.load %arg9[%c0_21, %c0_22] : memref<1x1024xf32, #tpu.memory_space<vmem>>, vector<1x1024xf32>
    %31 = vector.broadcast %30 : vector<1x1024xf32> to vector<16x1024xf32>
    %32 = arith.addf %29, %31 : vector<16x1024xf32>
    %cst_23 = arith.constant 2.000000e-01 : f32
    %33 = vector.broadcast %cst_23 : f32 to vector<16x1024xf32>
    %34 = arith.mulf %33, %32 : vector<16x1024xf32>
    %35 = arith.maximumf %32, %34 : vector<16x1024xf32>
    %36 = arith.truncf %35 : vector<16x1024xf32> to vector<16x1024xbf16>
    %c0_24 = arith.constant 0 : index
    %c0_25 = arith.constant 0 : index
    %37 = vector.load %arg10[%c0_24, %c0_25] : memref<1024x128xbf16, #tpu.memory_space<vmem>>, vector<1024x128xbf16>
    %cst_26 = arith.constant dense<0.000000e+00> : vector<16x128xf32>
    %38 = tpu.matmul %36, %37, %cst_26 {dimension_numbers = #tpu.dot_dimension_numbers<[1], [0], [0], [1], [0, 0, 1, 1], [], []>} : vector<16x1024xbf16>, vector<1024x128xbf16>, vector<16x128xf32> -> vector<16x128xf32>
    %c0_27 = arith.constant 0 : index
    %c0_28 = arith.constant 0 : index
    %39 = vector.load %arg11[%c0_27, %c0_28] : memref<1x128xf32, #tpu.memory_space<vmem>>, vector<1x128xf32>
    %40 = vector.broadcast %39 : vector<1x128xf32> to vector<16x128xf32>
    %41 = arith.addf %38, %40 : vector<16x128xf32>
    %42 = math.tanh %41 : vector<16x128xf32>
    %c0_29 = arith.constant 0 : index
    %c0_30 = arith.constant 0 : index
    %43 = vector.load %arg12[%c0_29, %c0_30] : memref<16x128xf32, #tpu.memory_space<vmem>>, vector<16x128xf32>
    tpu.vector_store %arg12[%c0_29, %c0_30], %42 {strides = array<i32>} : memref<16x128xf32, #tpu.memory_space<vmem>>, vector<16x128xf32>,
    return
  }
  func.func @transform_0(%arg0: i32) -> (i32, i32) {
    %c0_i32 = arith.constant 0 : i32
    %c0_i32_0 = arith.constant 0 : i32
    return %arg0, %c0_i32 : i32, i32
  }
  func.func @transform_1(%arg0: i32) -> (i32, i32) {
    %c0_i32 = arith.constant 0 : i32
    %c0_i32_0 = arith.constant 0 : i32
    %c0_i32_1 = arith.constant 0 : i32
    return %c0_i32, %c0_i32_0 : i32, i32
  }
  func.func @transform_2(%arg0: i32) -> (i32, i32) {
    %c0_i32 = arith.constant 0 : i32
    %c0_i32_0 = arith.constant 0 : i32
    %c0_i32_1 = arith.constant 0 : i32
    return %c0_i32, %c0_i32_0 : i32, i32
  }
  func.func @transform_3(%arg0: i32) -> (i32, i32) {
    %c0_i32 = arith.constant 0 : i32
    %c0_i32_0 = arith.constant 0 : i32
    %c0_i32_1 = arith.constant 0 : i32
    return %c0_i32, %c0_i32_0 : i32, i32
  }
  func.func @transform_4(%arg0: i32) -> (i32, i32) {
    %c0_i32 = arith.constant 0 : i32
    %c0_i32_0 = arith.constant 0 : i32
    %c0_i32_1 = arith.constant 0 : i32
    return %c0_i32, %c0_i32_0 : i32, i32
  }
  func.func @transform_5(%arg0: i32) -> (i32, i32) {
    %c0_i32 = arith.constant 0 : i32
    %c0_i32_0 = arith.constant 0 : i32
    %c0_i32_1 = arith.constant 0 : i32
    return %c0_i32, %c0_i32_0 : i32, i32
  }
  func.func @transform_6(%arg0: i32) -> (i32, i32) {
    %c0_i32 = arith.constant 0 : i32
    %c0_i32_0 = arith.constant 0 : i32
    %c0_i32_1 = arith.constant 0 : i32
    return %c0_i32, %c0_i32_0 : i32, i32
  }
  func.func @transform_7(%arg0: i32) -> (i32, i32) {
    %c0_i32 = arith.constant 0 : i32
    %c0_i32_0 = arith.constant 0 : i32
    %c0_i32_1 = arith.constant 0 : i32
    return %c0_i32, %c0_i32_0 : i32, i32
  }
  func.func @transform_8(%arg0: i32) -> (i32, i32) {
    %c0_i32 = arith.constant 0 : i32
    %c0_i32_0 = arith.constant 0 : i32
    %c0_i32_1 = arith.constant 0 : i32
    return %c0_i32, %c0_i32_0 : i32, i32
  }
  func.func @transform_9(%arg0: i32) -> (i32, i32) {
    %c0_i32 = arith.constant 0 : i32
    %c0_i32_0 = arith.constant 0 : i32
    %c0_i32_1 = arith.constant 0 : i32
    return %c0_i32, %c0_i32_0 : i32, i32
  }
  func.func @transform_10(%arg0: i32) -> (i32, i32) {
    %c0_i32 = arith.constant 0 : i32
    %c0_i32_0 = arith.constant 0 : i32
    %c0_i32_1 = arith.constant 0 : i32
    return %c0_i32, %c0_i32_0 : i32, i32
  }
  func.func @transform_11(%arg0: i32) -> (i32, i32) {
    %c0_i32 = arith.constant 0 : i32
    %c0_i32_0 = arith.constant 0 : i32
    return %arg0, %c0_i32 : i32, i32
  }
}

</mosaic_0001>

<llo_original>
// kernel: tpu_custom_call.1
$region0: #{tpu_custom_call.1}
  #allocation0 [shape = 'u32[]', space=smem, size = 0x4, offset = 0x4, fixed_abs, tag = 'smem constant byte address 0x4 - core index']
  #allocation1 [shape = 'u32[144,128]{1,0:T(1,128)}', space=vmem, size = 0x12000, scoped, tag = 'internal scratch']
  %s0 = inlined_call_operand.hbm [shape: bf16[16,128], index: 0, kind: input, shape index: {}]
  %s1 = inlined_call_operand.hbm [shape: bf16[128,128], index: 1, kind: input, shape index: {}]
  %s2 = inlined_call_operand.hbm [shape: f32[1,128], index: 2, kind: input, shape index: {}]
  %s3 = inlined_call_operand.hbm [shape: bf16[128,256], index: 3, kind: input, shape index: {}]
  %s4 = inlined_call_operand.vmem [shape: f32[1,256], index: 4, kind: input, shape index: {}]
  %s5 = inlined_call_operand.hbm [shape: bf16[256,512], index: 5, kind: input, shape index: {}]
  %s6 = inlined_call_operand.vmem [shape: f32[1,512], index: 6, kind: input, shape index: {}]
  %s7 = inlined_call_operand.hbm [shape: bf16[512,1024], index: 7, kind: input, shape index: {}]
  %s8 = inlined_call_operand.vmem [shape: f32[1,1024], index: 8, kind: input, shape index: {}]
  %s9 = inlined_call_operand.hbm [shape: bf16[1024,128], index: 9, kind: input, shape index: {}]
  %s10 = inlined_call_operand.vmem [shape: f32[1,128], index: 10, kind: input, shape index: {}]
  %s11 = inlined_call_operand.hbm [shape: f32[16,128], index: 11, kind: output, shape index: {}]
  %s12 = sld [smem:[#allocation0]]
  $region82: #{tpu_custom_call.1} parent=0
    _
  %s14 = ssub.s32 1, %s12
  %s15 = scalar_select 0, %s14, %s12
  $region1: #{tpu_custom_call.1} parent=0
    #allocation2 [shape = 'u8[4096]{0}', space=vmem, size = 0x1000, scoped, tag = 'input window, operand 0, single buffered']
    #allocation3 [shape = 's32[1]{0}', space=sflag, size = 0x4, scoped, tag = 'scoped memory for tpu_custom_call.1']
    #allocation4 [shape = 's32[1]{0}', space=sflag, size = 0x4, scoped, tag = 'scoped memory for tpu_custom_call.1']
    #allocation5 [shape = 'u8[32768]{0}', space=vmem, size = 0x8000, scoped, tag = 'input window, operand 1, single buffered']
    #allocation6 [shape = 's32[1]{0}', space=sflag, size = 0x4, scoped, tag = 'scoped memory for tpu_custom_call.1']
    #allocation7 [shape = 'u8[512]{0}', space=vmem, size = 0x400, scoped, tag = 'input window, operand 2, single buffered']
    #allocation8 [shape = 'u8[65536]{0}', space=vmem, size = 0x10000, scoped, tag = 'input window, operand 3, single buffered']
    #allocation9 [shape = 's32[1]{0}', space=sflag, size = 0x4, scoped, tag = 'scoped memory for tpu_custom_call.1']
    #allocation10 [shape = 'u8[262144]{0}', space=vmem, size = 0x40000, scoped, tag = 'input window, operand 5, single buffered']
    #allocation11 [shape = 'u8[1048576]{0}', space=vmem, size = 0x100000, scoped, tag = 'input window, operand 7, single buffered']
    #allocation12 [shape = 's32[1]{0}', space=sflag, size = 0x4, scoped, tag = 'scoped memory for tpu_custom_call.1']
    #allocation13 [shape = 'u8[262144]{0}', space=vmem, size = 0x40000, scoped, tag = 'input window, operand 9, single buffered']
    #allocation14 [shape = 'u8[8192]{0}', space=vmem, size = 0x2000, scoped, tag = 'output window, operand 0, single buffered']
    %16 = vsyncpa [#allocation3], 0
    %17 = vsyncpa [#allocation6], 0
    %18 = vsyncpa [#allocation9], 0
    %19 = vsyncpa [#allocation12], 0
    %20 = vsyncpa [#allocation4], 0
    // Predicated region
    $region2: #{tpu_custom_call.1} parent=1 // pred_check
      _
    $region3: #{tpu_custom_call.1} parent=1 // pred_check_branch
      %22 = sbr.rel (0) target = $region5
    $region4: #{tpu_custom_call.1} parent=1 // pred_region
      %s24 = ssub.s32 128, 128
      %25 = vsyncadd [#allocation3], %s24
      %s26 = sshll.u32 [#allocation2], 4
      %s27 = int_to_ptr.vmem [resolvable:$true] %s26
      %32 = dma.hbm_to_vmem [thread:$0]  %s0, 128, %s27, [#allocation3], 64, 64, 4
    $region5: #{tpu_custom_call.1} parent=1 // pred_fallthru
      _
    // Predicated region
    $region6: #{tpu_custom_call.1} parent=1 // pred_check
      _
    $region7: #{tpu_custom_call.1} parent=1 // pred_check_branch
      %34 = sbr.rel (0) target = $region9
    $region8: #{tpu_custom_call.1} parent=1 // pred_region
      %s36 = ssub.s32 1024, 1024
      %37 = vsyncadd [#allocation6], %s36
      %s38 = sshll.u32 [#allocation5], 4
      %s39 = int_to_ptr.vmem [resolvable:$true] %s38
      %44 = dma.hbm_to_vmem [thread:$0]  %s1, 1024, %s39, [#allocation6], 64, 64, 4
    $region9: #{tpu_custom_call.1} parent=1 // pred_fallthru
      _
    // Predicated region
    $region10: #{tpu_custom_call.1} parent=1 // pred_check
      _
    $region11: #{tpu_custom_call.1} parent=1 // pred_check_branch
      %46 = sbr.rel (0) target = $region13
    $region12: #{tpu_custom_call.1} parent=1 // pred_region
      %s48 = ssub.s32 16, 16
      %49 = vsyncadd [#allocation6], %s48
      %s51 = sshll.u32 [#allocation7], 4
      %s52 = int_to_ptr.vmem [resolvable:$true] %s51
      %54 = dma.hbm_to_vmem [thread:$0]  %s2, 16, %s52, [#allocation6]
    $region13: #{tpu_custom_call.1} parent=1 // pred_fallthru
      _
    // Predicated region
    $region14: #{tpu_custom_call.1} parent=1 // pred_check
      _
    $region15: #{tpu_custom_call.1} parent=1 // pred_check_branch
      %56 = sbr.rel (0) target = $region17
    $region16: #{tpu_custom_call.1} parent=1 // pred_region
      %s58 = ssub.s32 2048, 2048
      %59 = vsyncadd [#allocation9], %s58
      %s60 = sshll.u32 [#allocation8], 4
      %s61 = int_to_ptr.vmem [resolvable:$true] %s60
      %66 = dma.hbm_to_vmem [thread:$0]  %s3, 2048, %s61, [#allocation9], 128, 128, 8
    $region17: #{tpu_custom_call.1} parent=1 // pred_fallthru
      _
    // Predicated region
    $region18: #{tpu_custom_call.1} parent=1 // pred_check
      _
    $region19: #{tpu_custom_call.1} parent=1 // pred_check_branch
      %68 = sbr.rel (0) target = $region21
    $region20: #{tpu_custom_call.1} parent=1 // pred_region
      _
    $region21: #{tpu_custom_call.1} parent=1 // pred_fallthru
      _
    // Predicated region
    $region22: #{tpu_custom_call.1} parent=1 // pred_check
      _
    $region23: #{tpu_custom_call.1} parent=1 // pred_check_branch
      %70 = sbr.rel (0) target = $region25
    $region24: #{tpu_custom_call.1} parent=1 // pred_region
      %s72 = ssub.s32 8192, 8192
      %73 = vsyncadd [#allocation9], %s72
      %s74 = sshll.u32 [#allocation10], 4
      %s75 = int_to_ptr.vmem [resolvable:$true] %s74
      %80 = dma.hbm_to_vmem [thread:$0]  %s5, 8192, %s75, [#allocation9], 256, 256, 16
    $region25: #{tpu_custom_call.1} parent=1 // pred_fallthru
      _
    // Predicated region
    $region26: #{tpu_custom_call.1} parent=1 // pred_check
      _
    $region27: #{tpu_custom_call.1} parent=1 // pred_check_branch
      %82 = sbr.rel (0) target = $region29
    $region28: #{tpu_custom_call.1} parent=1 // pred_region
      _
    $region29: #{tpu_custom_call.1} parent=1 // pred_fallthru
      _
    // Predicated region
    $region30: #{tpu_custom_call.1} parent=1 // pred_check
      _
    $region31: #{tpu_custom_call.1} parent=1 // pred_check_branch
      %84 = sbr.rel (0) target = $region33
    $region32: #{tpu_custom_call.1} parent=1 // pred_region
      %s86 = ssub.s32 32768, 32768
      %87 = vsyncadd [#allocation12], %s86
      %s88 = sshll.u32 [#allocation11], 4
      %s89 = int_to_ptr.vmem [resolvable:$true] %s88
      %94 = dma.hbm_to_vmem [thread:$0]  %s7, 32768, %s89, [#allocation12], 512, 512, 32
    $region33: #{tpu_custom_call.1} parent=1 // pred_fallthru
      _
    // Predicated region
    $region34: #{tpu_custom_call.1} parent=1 // pred_check
      _
    $region35: #{tpu_custom_call.1} parent=1 // pred_check_branch
      %96 = sbr.rel (0) target = $region37
    $region36: #{tpu_custom_call.1} parent=1 // pred_region
      _
    $region37: #{tpu_custom_call.1} parent=1 // pred_fallthru
      _
    // Predicated region
    $region38: #{tpu_custom_call.1} parent=1 // pred_check
      _
    $region39: #{tpu_custom_call.1} parent=1 // pred_check_branch
      %98 = sbr.rel (0) target = $region41
    $region40: #{tpu_custom_call.1} parent=1 // pred_region
      %s100 = ssub.s32 8192, 8192
      %101 = vsyncadd [#allocation12], %s100
      %s102 = sshll.u32 [#allocation13], 4
      %s103 = int_to_ptr.vmem [resolvable:$true] %s102
      %108 = dma.hbm_to_vmem [thread:$0]  %s9, 8192, %s103, [#allocation12], 64, 64, 4
    $region41: #{tpu_custom_call.1} parent=1 // pred_fallthru
      _
    // Predicated region
    $region42: #{tpu_custom_call.1} parent=1 // pred_check
      _
    $region43: #{tpu_custom_call.1} parent=1 // pred_check_branch
      %110 = sbr.rel (0) target = $region45
    $region44: #{tpu_custom_call.1} parent=1 // pred_region
      _
    $region45: #{tpu_custom_call.1} parent=1 // pred_fallthru
      _
    // Predicated region
    $region46: #{tpu_custom_call.1} parent=1 // pred_check
      _
    $region47: #{tpu_custom_call.1} parent=1 // pred_check_branch
      %112 = sbr.rel (0) target = $region49
    $region48: #{tpu_custom_call.1} parent=1 // pred_region
      %113 = dma.done [#allocation3], 128
    $region49: #{tpu_custom_call.1} parent=1 // pred_fallthru
      _
    // Predicated region
    $region50: #{tpu_custom_call.1} parent=1 // pred_check
      _
    $region51: #{tpu_custom_call.1} parent=1 // pred_check_branch
      %115 = sbr.rel (0) target = $region53
    $region52: #{tpu_custom_call.1} parent=1 // pred_region
      %116 = dma.done [#allocation6], 1024
    $region53: #{tpu_custom_call.1} parent=1 // pred_fallthru
      _
    // Predicated region
    $region54: #{tpu_custom_call.1} parent=1 // pred_check
      _
    $region55: #{tpu_custom_call.1} parent=1 // pred_check_branch
      %118 = sbr.rel (0) target = $region57
    $region56: #{tpu_custom_call.1} parent=1 // pred_region
      %119 = dma.done [#allocation6], 16
    $region57: #{tpu_custom_call.1} parent=1 // pred_fallthru
      _
    // Predicated region
    $region58: #{tpu_custom_call.1} parent=1 // pred_check
      _
    $region59: #{tpu_custom_call.1} parent=1 // pred_check_branch
      %121 = sbr.rel (0) target = $region61
    $region60: #{tpu_custom_call.1} parent=1 // pred_region
      %122 = dma.done [#allocation9], 2048
    $region61: #{tpu_custom_call.1} parent=1 // pred_fallthru
      _
    // Predicated region
    $region62: #{tpu_custom_call.1} parent=1 // pred_check
      _
    $region63: #{tpu_custom_call.1} parent=1 // pred_check_branch
      %124 = sbr.rel (0) target = $region65
    $region64: #{tpu_custom_call.1} parent=1 // pred_region
      %125 = dma.done [#allocation9], 8192
    $region65: #{tpu_custom_call.1} parent=1 // pred_fallthru
      _
    // Predicated region
    $region66: #{tpu_custom_call.1} parent=1 // pred_check
      _
    $region67: #{tpu_custom_call.1} parent=1 // pred_check_branch
      %127 = sbr.rel (0) target = $region69
    $region68: #{tpu_custom_call.1} parent=1 // pred_region
      %128 = dma.done [#allocation12], 32768
    $region69: #{tpu_custom_call.1} parent=1 // pred_fallthru
      _
    // Predicated region
    $region70: #{tpu_custom_call.1} parent=1 // pred_check
      _
    $region71: #{tpu_custom_call.1} parent=1 // pred_check_branch
      %130 = sbr.rel (0) target = $region73
    $region72: #{tpu_custom_call.1} parent=1 // pred_region
      %131 = dma.done [#allocation12], 8192
    $region73: #{tpu_custom_call.1} parent=1 // pred_fallthru
      _
    %v133 = vld [vmem:[#allocation2] sm:$0xf]
    %v134 = vld [vmem:[#allocation2 + $0x4] sm:$0xf]
    %v135 = vld [vmem:[#allocation5] sm:$0xf]
    %v136 = vld [vmem:[#allocation5 + $0x4] sm:$0xf]
    %v137 = vld [vmem:[#allocation5 + $0x8] sm:$0xf]
    %v138 = vld [vmem:[#allocation5 + $0xc] sm:$0xf]
    %v139 = vld [vmem:[#allocation5 + $0x10] sm:$0xf]
    %v140 = vld [vmem:[#allocation5 + $0x14] sm:$0xf]
    %v141 = vld [vmem:[#allocation5 + $0x18] sm:$0xf]
    %v142 = vld [vmem:[#allocation5 + $0x1c] sm:$0xf]
    %v143 = vld [vmem:[#allocation5 + $0x20] sm:$0xf]
    %v144 = vld [vmem:[#allocation5 + $0x24] sm:$0xf]
    %v145 = vld [vmem:[#allocation5 + $0x28] sm:$0xf]
    %v146 = vld [vmem:[#allocation5 + $0x2c] sm:$0xf]
    %v147 = vld [vmem:[#allocation5 + $0x30] sm:$0xf]
    %v148 = vld [vmem:[#allocation5 + $0x34] sm:$0xf]
    %v149 = vld [vmem:[#allocation5 + $0x38] sm:$0xf]
    %v150 = vld [vmem:[#allocation5 + $0x3c] sm:$0xf]
    %v151 = vld [vmem:[#allocation7] sm:$0x1]
    %v153 = vlaneseq
    %v154 = vshrl.u32 %v153, 7
    %v155 = vsub.s32 0, %v154
    %v156 = vrot.slane %v151, %v155
    %v160 = vunpack.c.l.b16 %v133
    %v161 = vunpack.c.l.b16 %v134
    %v162 = vpack.c.b16 %v161, %v160
    %v180 = vunpack.c.l.b16 %v135
    %v181 = vunpack.c.l.b16 %v136
    %v182 = vunpack.c.l.b16 %v137
    %v183 = vunpack.c.l.b16 %v138
    %v184 = vunpack.c.l.b16 %v139
    %v185 = vunpack.c.l.b16 %v140
    %v186 = vunpack.c.l.b16 %v141
    %v187 = vunpack.c.l.b16 %v142
    %v188 = vunpack.c.l.b16 %v143
    %v189 = vunpack.c.l.b16 %v144
    %v190 = vunpack.c.l.b16 %v145
    %v191 = vunpack.c.l.b16 %v146
    %v192 = vunpack.c.l.b16 %v147
    %v193 = vunpack.c.l.b16 %v148
    %v194 = vunpack.c.l.b16 %v149
    %v195 = vunpack.c.l.b16 %v150
    %v196 = vpack.c.b16 %v181, %v180
    %v197 = vpack.c.b16 %v183, %v182
    %v198 = vpack.c.b16 %v185, %v184
    %v199 = vpack.c.b16 %v187, %v186
    %v200 = vpack.c.b16 %v189, %v188
    %v201 = vpack.c.b16 %v191, %v190
    %v202 = vpack.c.b16 %v193, %v192
    %v203 = vpack.c.b16 %v195, %v194
    %212 = vmatprep.subr.bf16.mxu0 0
    %213 = vmatpush1.bf16.msra.mxu0 %v203
    %214 = vmatprep.subr.bf16.mxu0 0
    %215 = vmatpush1.bf16.msra.mxu0 %v202
    %216 = vmatprep.subr.bf16.mxu0 0
    %217 = vmatpush1.bf16.msra.mxu0 %v201
    %218 = vmatprep.subr.bf16.mxu0 0
    %219 = vmatpush1.bf16.msra.mxu0 %v200
    %220 = vmatprep.subr.bf16.mxu0 0
    %221 = vmatpush1.bf16.msra.mxu0 %v199
    %222 = vmatprep.subr.bf16.mxu0 0
    %223 = vmatpush1.bf16.msra.mxu0 %v198
    %224 = vmatprep.subr.bf16.mxu0 0
    %225 = vmatpush1.bf16.msra.mxu0 %v197
    %226 = vmatprep.subr.bf16.mxu0 0
    %227 = vmatpush1.bf16.msra.mxu0 %v196
    %228 = vmatprep.subr.bf16.mxu0 0
    %229 = vmatpush2.bf16.msra.mxu0 0
    %230 = vmatprep.subr.bf16.mxu0 0
    %231 = vmatpush2.bf16.msra.mxu0 0
    %232 = vmatprep.subr.bf16.mxu0 0
    %233 = vmatpush2.bf16.msra.mxu0 0
    %234 = vmatprep.subr.bf16.mxu0 0
    %235 = vmatpush2.bf16.msra.mxu0 0
    %236 = vmatprep.subr.bf16.mxu0 0
    %237 = vmatpush2.bf16.msra.mxu0 0
    %238 = vmatprep.subr.bf16.mxu0 0
    %239 = vmatpush2.bf16.msra.mxu0 0
    %240 = vmatprep.subr.bf16.mxu0 0
    %241 = vmatpush2.bf16.msra.mxu0 0
    %242 = vmatprep.subr.bf16.mxu0 0
    %243 = vmatpush2.bf16.msra.mxu0 0
    %244 = vmatprep.mubr.bf16.mxu0 0
    %245 = vmatmul.mubr.bf16.gmra.mxu0 %v162
    %v246 = vpop.f32.mrf.mxu0
    %v247 = vadd.f32 %v156, %v246
    %v248 = vpop.f32.mrf.mxu0
    %v249 = vpop.f32.mrf.mxu0
    %v250 = vadd.f32 %v156, %v249
    %v251 = vpop.f32.mrf.mxu0
    %252 = vdwg.mxu0
    %v253 = vmul.f32 %v247, 0.2
    %v254 = vmul.f32 %v250, 0.2
    %v255 = vmax.f32 %v247, %v253
    %v256 = vmax.f32 %v250, %v254
    %v257 = vpack.c.bf16 %v256, %v255
    %v258 = vld [vmem:[#allocation8] sm:$0xff]
    %v259 = vld [vmem:[#allocation8 + $0x8] sm:$0xff]
    %v260 = vld [vmem:[#allocation8 + $0x10] sm:$0xff]
    %v261 = vld [vmem:[#allocation8 + $0x18] sm:$0xff]
    %v262 = vld [vmem:[#allocation8 + $0x20] sm:$0xff]
    %v263 = vld [vmem:[#allocation8 + $0x28] sm:$0xff]
    %v264 = vld [vmem:[#allocation8 + $0x30] sm:$0xff]
    %v265 = vld [vmem:[#allocation8 + $0x38] sm:$0xff]
    %v266 = vld [vmem:[#allocation8 + $0x40] sm:$0xff]
    %v267 = vld [vmem:[#allocation8 + $0x48] sm:$0xff]
    %v268 = vld [vmem:[#allocation8 + $0x50] sm:$0xff]
    %v269 = vld [vmem:[#allocation8 + $0x58] sm:$0xff]
    %v270 = vld [vmem:[#allocation8 + $0x60] sm:$0xff]
    %v271 = vld [vmem:[#allocation8 + $0x68] sm:$0xff]
    %v272 = vld [vmem:[#allocation8 + $0x70] sm:$0xff]
    %v273 = vld [vmem:[#allocation8 + $0x78] sm:$0xff]
    %v274 = vld [vmem:[%s4] sm:$0x3]
    %v276 = vlaneseq
    %v277 = vshrl.u32 %v276, 7
    %v278 = vsub.s32 0, %v277
    %v279 = vrot.slane %v274, %v278
    %v280 = vlaneseq
    %v281 = vshrl.u32 %v280, 7
    %v282 = vsub.s32 1, %v281
    %v283 = vrot.slane %v274, %v282
    %v302 = vunpack.c.l.b16 %v258
    %v303 = vunpack.c.h.b16 %v258
    %v304 = vunpack.c.l.b16 %v259
    %v305 = vunpack.c.h.b16 %v259
    %v306 = vunpack.c.l.b16 %v260
    %v307 = vunpack.c.h.b16 %v260
    %v308 = vunpack.c.l.b16 %v261
    %v309 = vunpack.c.h.b16 %v261
    %v310 = vunpack.c.l.b16 %v262
    %v311 = vunpack.c.h.b16 %v262
    %v312 = vunpack.c.l.b16 %v263
    %v313 = vunpack.c.h.b16 %v263
    %v314 = vunpack.c.l.b16 %v264
    %v315 = vunpack.c.h.b16 %v264
    %v316 = vunpack.c.l.b16 %v265
    %v317 = vunpack.c.h.b16 %v265
    %v318 = vunpack.c.l.b16 %v266
    %v319 = vunpack.c.h.b16 %v266
    %v320 = vunpack.c.l.b16 %v267
    %v321 = vunpack.c.h.b16 %v267
    %v322 = vunpack.c.l.b16 %v268
    %v323 = vunpack.c.h.b16 %v268
    %v324 = vunpack.c.l.b16 %v269
    %v325 = vunpack.c.h.b16 %v269
    %v326 = vunpack.c.l.b16 %v270
    %v327 = vunpack.c.h.b16 %v270
    %v328 = vunpack.c.l.b16 %v271
    %v329 = vunpack.c.h.b16 %v271
    %v330 = vunpack.c.l.b16 %v272
    %v331 = vunpack.c.h.b16 %v272
    %v332 = vunpack.c.l.b16 %v273
    %v333 = vunpack.c.h.b16 %v273
    %v334 = vpack.c.b16 %v304, %v302
    %v335 = vpack.c.b16 %v305, %v303
    %v336 = vpack.c.b16 %v308, %v306
    %v337 = vpack.c.b16 %v309, %v307
    %v338 = vpack.c.b16 %v312, %v310
    %v339 = vpack.c.b16 %v313, %v311
    %v340 = vpack.c.b16 %v316, %v314
    %v341 = vpack.c.b16 %v317, %v315
    %v342 = vpack.c.b16 %v320, %v318
    %v343 = vpack.c.b16 %v321, %v319
    %v344 = vpack.c.b16 %v324, %v322
    %v345 = vpack.c.b16 %v325, %v323
    %v346 = vpack.c.b16 %v328, %v326
    %v347 = vpack.c.b16 %v329, %v327
    %v348 = vpack.c.b16 %v332, %v330
    %v349 = vpack.c.b16 %v333, %v331
    %366 = vmatprep.subr.bf16.mxu0 %v349
    %367 = vmatpush1.bf16.msra.mxu0 %v348
    %368 = vmatprep.subr.bf16.mxu0 %v347
    %369 = vmatpush1.bf16.msra.mxu0 %v346
    %370 = vmatprep.subr.bf16.mxu0 %v345
    %371 = vmatpush1.bf16.msra.mxu0 %v344
    %372 = vmatprep.subr.bf16.mxu0 %v343
    %373 = vmatpush1.bf16.msra.mxu0 %v342
    %374 = vmatprep.subr.bf16.mxu0 %v341
    %375 = vmatpush1.bf16.msra.mxu0 %v340
    %376 = vmatprep.subr.bf16.mxu0 %v339
    %377 = vmatpush1.bf16.msra.mxu0 %v338
    %378 = vmatprep.subr.bf16.mxu0 %v337
    %379 = vmatpush1.bf16.msra.mxu0 %v336
    %380 = vmatprep.subr.bf16.mxu0 %v335
    %381 = vmatpush1.bf16.msra.mxu0 %v334
    %382 = vmatprep.subr.bf16.mxu0 0
    %383 = vmatpush2.bf16.msra.mxu0 0
    %384 = vmatprep.subr.bf16.mxu0 0
    %385 = vmatpush2.bf16.msra.mxu0 0
    %386 = vmatprep.subr.bf16.mxu0 0
    %387 = vmatpush2.bf16.msra.mxu0 0
    %388 = vmatprep.subr.bf16.mxu0 0
    %389 = vmatpush2.bf16.msra.mxu0 0
    %390 = vmatprep.subr.bf16.mxu0 0
    %391 = vmatpush2.bf16.msra.mxu0 0
    %392 = vmatprep.subr.bf16.mxu0 0
    %393 = vmatpush2.bf16.msra.mxu0 0
    %394 = vmatprep.subr.bf16.mxu0 0
    %395 = vmatpush2.bf16.msra.mxu0 0
    %396 = vmatprep.subr.bf16.mxu0 0
    %397 = vmatpush2.bf16.msra.mxu0 0
    %398 = vmatprep.mubr.bf16.mxu0 0
    %399 = vmatmul.mubr.bf16.gmra.mxu0 %v257
    %v400 = vpop.f32.mrf.mxu0
    %v401 = vadd.f32 %v279, %v400
    %v402 = vpop.f32.mrf.mxu0
    %v403 = vadd.f32 %v283, %v402
    %v404 = vpop.f32.mrf.mxu0
    %v405 = vadd.f32 %v279, %v404
    %v406 = vpop.f32.mrf.mxu0
    %v407 = vadd.f32 %v283, %v406
    %408 = vdwg.mxu0
    %v409 = vmul.f32 %v401, 0.2
    %v410 = vmul.f32 %v403, 0.2
    %v411 = vmul.f32 %v405, 0.2
    %v412 = vmul.f32 %v407, 0.2
    %v413 = vmax.f32 %v401, %v409
    %v414 = vmax.f32 %v403, %v410
    %v415 = vmax.f32 %v405, %v411
    %v416 = vmax.f32 %v407, %v412
    %v417 = vpack.c.bf16 %v415, %v413
    %v418 = vpack.c.bf16 %v416, %v414
    %v419 = vld [vmem:[#allocation10] sm:$0xff]
    %v420 = vld [vmem:[#allocation10 + $0x8] sm:$0xff]
    %v421 = vld [vmem:[#allocation10 + $0x10] sm:$0xff]
    %v422 = vld [vmem:[#allocation10 + $0x18] sm:$0xff]
    %v423 = vld [vmem:[#allocation10 + $0x20] sm:$0xff]
    %v424 = vld [vmem:[#allocation10 + $0x28] sm:$0xff]
    %v425 = vld [vmem:[#allocation10 + $0x30] sm:$0xff]
    %v426 = vld [vmem:[#allocation10 + $0x38] sm:$0xff]
    %v427 = vld [vmem:[#allocation10 + $0x40] sm:$0xff]
    %v428 = vld [vmem:[#allocation10 + $0x48] sm:$0xff]
    %v429 = vld [vmem:[#allocation10 + $0x50] sm:$0xff]
    %v430 = vld [vmem:[#allocation10 + $0x58] sm:$0xff]
    %v431 = vld [vmem:[#allocation10 + $0x60] sm:$0xff]
    %v432 = vld [vmem:[#allocation10 + $0x68] sm:$0xff]
    %v433 = vld [vmem:[#allocation10 + $0x70] sm:$0xff]
    %v434 = vld [vmem:[#allocation10 + $0x78] sm:$0xff]
    %v435 = vld [vmem:[#allocation10 + $0x80] sm:$0xff]
    %v436 = vld [vmem:[#allocation10 + $0x88] sm:$0xff]
    %v437 = vld [vmem:[#allocation10 + $0x90] sm:$0xff]
    %v438 = vld [vmem:[#allocation10 + $0x98] sm:$0xff]
    %v439 = vld [vmem:[#allocation10 + $0xa0] sm:$0xff]
    %v440 = vld [vmem:[#allocation10 + $0xa8] sm:$0xff]
    %v441 = vld [vmem:[#allocation10 + $0xb0] sm:$0xff]
    %v442 = vld [vmem:[#allocation10 + $0xb8] sm:$0xff]
    %v443 = vld [vmem:[#allocation10 + $0xc0] sm:$0xff]
    %v444 = vld [vmem:[#allocation10 + $0xc8] sm:$0xff]
    %v445 = vld [vmem:[#allocation10 + $0xd0] sm:$0xff]
    %v446 = vld [vmem:[#allocation10 + $0xd8] sm:$0xff]
    %v447 = vld [vmem:[#allocation10 + $0xe0] sm:$0xff]
    %v448 = vld [vmem:[#allocation10 + $0xe8] sm:$0xff]
    %v449 = vld [vmem:[#allocation10 + $0xf0] sm:$0xff]
    %v450 = vld [vmem:[#allocation10 + $0xf8] sm:$0xff]
    %v451 = vld [vmem:[#allocation10 + $0x100] sm:$0xff]
    %v452 = vld [vmem:[#allocation10 + $0x108] sm:$0xff]
    %v453 = vld [vmem:[#allocation10 + $0x110] sm:$0xff]
    %v454 = vld [vmem:[#allocation10 + $0x118] sm:$0xff]
    %v455 = vld [vmem:[#allocation10 + $0x120] sm:$0xff]
    %v456 = vld [vmem:[#allocation10 + $0x128] sm:$0xff]
    %v457 = vld [vmem:[#allocation10 + $0x130] sm:$0xff]
    %v458 = vld [vmem:[#allocation10 + $0x138] sm:$0xff]
    %v459 = vld [vmem:[#allocation10 + $0x140] sm:$0xff]
    %v460 = vld [vmem:[#allocation10 + $0x148] sm:$0xff]
    %v461 = vld [vmem:[#allocation10 + $0x150] sm:$0xff]
    %v462 = vld [vmem:[#allocation10 + $0x158] sm:$0xff]
    %v463 = vld [vmem:[#allocation10 + $0x160] sm:$0xff]
    %v464 = vld [vmem:[#allocation10 + $0x168] sm:$0xff]
    %v465 = vld [vmem:[#allocation10 + $0x170] sm:$0xff]
    %v466 = vld [vmem:[#allocation10 + $0x178] sm:$0xff]
    %v467 = vld [vmem:[#allocation10 + $0x180] sm:$0xff]
    %v468 = vld [vmem:[#allocation10 + $0x188] sm:$0xff]
    %v469 = vld [vmem:[#allocation10 + $0x190] sm:$0xff]
    %v470 = vld [vmem:[#allocation10 + $0x198] sm:$0xff]
    %v471 = vld [vmem:[#allocation10 + $0x1a0] sm:$0xff]
    %v472 = vld [vmem:[#allocation10 + $0x1a8] sm:$0xff]
    %v473 = vld [vmem:[#allocation10 + $0x1b0] sm:$0xff]
    %v474 = vld [vmem:[#allocation10 + $0x1b8] sm:$0xff]
    %v475 = vld [vmem:[#allocation10 + $0x1c0] sm:$0xff]
    %v476 = vld [vmem:[#allocation10 + $0x1c8] sm:$0xff]
    %v477 = vld [vmem:[#allocation10 + $0x1d0] sm:$0xff]
    %v478 = vld [vmem:[#allocation10 + $0x1d8] sm:$0xff]
    %v479 = vld [vmem:[#allocation10 + $0x1e0] sm:$0xff]
    %v480 = vld [vmem:[#allocation10 + $0x1e8] sm:$0xff]
    %v481 = vld [vmem:[#allocation10 + $0x1f0] sm:$0xff]
    %v482 = vld [vmem:[#allocation10 + $0x1f8] sm:$0xff]
    %v483 = vld [vmem:[%s6] sm:$0xf]
    %v485 = vlaneseq
    %v486 = vshrl.u32 %v485, 7
    %v487 = vsub.s32 0, %v486
    %v488 = vrot.slane %v483, %v487
    %v489 = vlaneseq
    %v490 = vshrl.u32 %v489, 7
    %v491 = vsub.s32 1, %v490
    %v492 = vrot.slane %v483, %v491
    %v493 = vlaneseq
    %v494 = vshrl.u32 %v493, 7
    %v495 = vsub.s32 2, %v494
    %v496 = vrot.slane %v483, %v495
    %v497 = vlaneseq
    %v498 = vshrl.u32 %v497, 7
    %v499 = vsub.s32 3, %v498
    %v500 = vrot.slane %v483, %v499
    %v569 = vunpack.c.l.b16 %v419
    %v570 = vunpack.c.h.b16 %v419
    %v571 = vunpack.c.l.b16 %v420
    %v572 = vunpack.c.h.b16 %v420
    %v573 = vunpack.c.l.b16 %v421
    %v574 = vunpack.c.h.b16 %v421
    %v575 = vunpack.c.l.b16 %v422
    %v576 = vunpack.c.h.b16 %v422
    %v577 = vunpack.c.l.b16 %v423
    %v578 = vunpack.c.h.b16 %v423
    %v579 = vunpack.c.l.b16 %v424
    %v580 = vunpack.c.h.b16 %v424
    %v581 = vunpack.c.l.b16 %v425
    %v582 = vunpack.c.h.b16 %v425
    %v583 = vunpack.c.l.b16 %v426
    %v584 = vunpack.c.h.b16 %v426
    %v585 = vunpack.c.l.b16 %v427
    %v586 = vunpack.c.h.b16 %v427
    %v587 = vunpack.c.l.b16 %v428
    %v588 = vunpack.c.h.b16 %v428
    %v589 = vunpack.c.l.b16 %v429
    %v590 = vunpack.c.h.b16 %v429
    %v591 = vunpack.c.l.b16 %v430
    %v592 = vunpack.c.h.b16 %v430
    %v593 = vunpack.c.l.b16 %v431
    %v594 = vunpack.c.h.b16 %v431
    %v595 = vunpack.c.l.b16 %v432
    %v596 = vunpack.c.h.b16 %v432
    %v597 = vunpack.c.l.b16 %v433
    %v598 = vunpack.c.h.b16 %v433
    %v599 = vunpack.c.l.b16 %v434
    %v600 = vunpack.c.h.b16 %v434
    %v601 = vunpack.c.l.b16 %v435
    %v602 = vunpack.c.h.b16 %v435
    %v603 = vunpack.c.l.b16 %v436
    %v604 = vunpack.c.h.b16 %v436
    %v605 = vunpack.c.l.b16 %v437
    %v606 = vunpack.c.h.b16 %v437
    %v607 = vunpack.c.l.b16 %v438
    %v608 = vunpack.c.h.b16 %v438
    %v609 = vunpack.c.l.b16 %v439
    %v610 = vunpack.c.h.b16 %v439
    %v611 = vunpack.c.l.b16 %v440
    %v612 = vunpack.c.h.b16 %v440
    %v613 = vunpack.c.l.b16 %v441
    %v614 = vunpack.c.h.b16 %v441
    %v615 = vunpack.c.l.b16 %v442
    %v616 = vunpack.c.h.b16 %v442
    %v617 = vunpack.c.l.b16 %v443
    %v618 = vunpack.c.h.b16 %v443
    %v619 = vunpack.c.l.b16 %v444
    %v620 = vunpack.c.h.b16 %v444
    %v621 = vunpack.c.l.b16 %v445
    %v622 = vunpack.c.h.b16 %v445
    %v623 = vunpack.c.l.b16 %v446
    %v624 = vunpack.c.h.b16 %v446
    %v625 = vunpack.c.l.b16 %v447
    %v626 = vunpack.c.h.b16 %v447
    %v627 = vunpack.c.l.b16 %v448
    %v628 = vunpack.c.h.b16 %v448
    %v629 = vunpack.c.l.b16 %v449
    %v630 = vunpack.c.h.b16 %v449
    %v631 = vunpack.c.l.b16 %v450
    %v632 = vunpack.c.h.b16 %v450
    %v633 = vunpack.c.l.b16 %v451
    %v634 = vunpack.c.h.b16 %v451
    %v635 = vunpack.c.l.b16 %v452
    %v636 = vunpack.c.h.b16 %v452
    %v637 = vunpack.c.l.b16 %v453
    %v638 = vunpack.c.h.b16 %v453
    %v639 = vunpack.c.l.b16 %v454
    %v640 = vunpack.c.h.b16 %v454
    %v641 = vunpack.c.l.b16 %v455
    %v642 = vunpack.c.h.b16 %v455
    %v643 = vunpack.c.l.b16 %v456
    %v644 = vunpack.c.h.b16 %v456
    %v645 = vunpack.c.l.b16 %v457
    %v646 = vunpack.c.h.b16 %v457
    %v647 = vunpack.c.l.b16 %v458
    %v648 = vunpack.c.h.b16 %v458
    %v649 = vunpack.c.l.b16 %v459
    %v650 = vunpack.c.h.b16 %v459
    %v651 = vunpack.c.l.b16 %v460
    %v652 = vunpack.c.h.b16 %v460
    %v653 = vunpack.c.l.b16 %v461
    %v654 = vunpack.c.h.b16 %v461
    %v655 = vunpack.c.l.b16 %v462
    %v656 = vunpack.c.h.b16 %v462
    %v657 = vunpack.c.l.b16 %v463
    %v658 = vunpack.c.h.b16 %v463
    %v659 = vunpack.c.l.b16 %v464
    %v660 = vunpack.c.h.b16 %v464
    %v661 = vunpack.c.l.b16 %v465
    %v662 = vunpack.c.h.b16 %v465
    %v663 = vunpack.c.l.b16 %v466
    %v664 = vunpack.c.h.b16 %v466
    %v665 = vunpack.c.l.b16 %v467
    %v666 = vunpack.c.h.b16 %v467
    %v667 = vunpack.c.l.b16 %v468
    %v668 = vunpack.c.h.b16 %v468
    %v669 = vunpack.c.l.b16 %v469
    %v670 = vunpack.c.h.b16 %v469
    %v671 = vunpack.c.l.b16 %v470
    %v672 = vunpack.c.h.b16 %v470
    %v673 = vunpack.c.l.b16 %v471
    %v674 = vunpack.c.h.b16 %v471
    %v675 = vunpack.c.l.b16 %v472
    %v676 = vunpack.c.h.b16 %v472
    %v677 = vunpack.c.l.b16 %v473
    %v678 = vunpack.c.h.b16 %v473
    %v679 = vunpack.c.l.b16 %v474
    %v680 = vunpack.c.h.b16 %v474
    %v681 = vunpack.c.l.b16 %v475
    %v682 = vunpack.c.h.b16 %v475
    %v683 = vunpack.c.l.b16 %v476
    %v684 = vunpack.c.h.b16 %v476
    %v685 = vunpack.c.l.b16 %v477
    %v686 = vunpack.c.h.b16 %v477
    %v687 = vunpack.c.l.b16 %v478
    %v688 = vunpack.c.h.b16 %v478
    %v689 = vunpack.c.l.b16 %v479
    %v690 = vunpack.c.h.b16 %v479
    %v691 = vunpack.c.l.b16 %v480
    %v692 = vunpack.c.h.b16 %v480
    %v693 = vunpack.c.l.b16 %v481
    %v694 = vunpack.c.h.b16 %v481
    %v695 = vunpack.c.l.b16 %v482
    %v696 = vunpack.c.h.b16 %v482
    %v697 = vpack.c.b16 %v573, %v569
    %v698 = vpack.c.b16 %v574, %v570
    %v699 = vpack.c.b16 %v575, %v571
    %v700 = vpack.c.b16 %v576, %v572
    %v701 = vpack.c.b16 %v581, %v577
    %v702 = vpack.c.b16 %v582, %v578
    %v703 = vpack.c.b16 %v583, %v579
    %v704 = vpack.c.b16 %v584, %v580
    %v705 = vpack.c.b16 %v589, %v585
    %v706 = vpack.c.b16 %v590, %v586
    %v707 = vpack.c.b16 %v591, %v587
    %v708 = vpack.c.b16 %v592, %v588
    %v709 = vpack.c.b16 %v597, %v593
    %v710 = vpack.c.b16 %v598, %v594
    %v711 = vpack.c.b16 %v599, %v595
    %v712 = vpack.c.b16 %v600, %v596
    %v713 = vpack.c.b16 %v605, %v601
    %v714 = vpack.c.b16 %v606, %v602
    %v715 = vpack.c.b16 %v607, %v603
    %v716 = vpack.c.b16 %v608, %v604
    %v717 = vpack.c.b16 %v613, %v609
    %v718 = vpack.c.b16 %v614, %v610
    %v719 = vpack.c.b16 %v615, %v611
    %v720 = vpack.c.b16 %v616, %v612
    %v721 = vpack.c.b16 %v621, %v617
    %v722 = vpack.c.b16 %v622, %v618
    %v723 = vpack.c.b16 %v623, %v619
    %v724 = vpack.c.b16 %v624, %v620
    %v725 = vpack.c.b16 %v629, %v625
    %v726 = vpack.c.b16 %v630, %v626
    %v727 = vpack.c.b16 %v631, %v627
    %v728 = vpack.c.b16 %v632, %v628
    %v729 = vpack.c.b16 %v637, %v633
    %v730 = vpack.c.b16 %v638, %v634
    %v731 = vpack.c.b16 %v639, %v635
    %v732 = vpack.c.b16 %v640, %v636
    %v733 = vpack.c.b16 %v645, %v641
    %v734 = vpack.c.b16 %v646, %v642
    %v735 = vpack.c.b16 %v647, %v643
    %v736 = vpack.c.b16 %v648, %v644
    %v737 = vpack.c.b16 %v653, %v649
    %v738 = vpack.c.b16 %v654, %v650
    %v739 = vpack.c.b16 %v655, %v651
    %v740 = vpack.c.b16 %v656, %v652
    %v741 = vpack.c.b16 %v661, %v657
    %v742 = vpack.c.b16 %v662, %v658
    %v743 = vpack.c.b16 %v663, %v659
    %v744 = vpack.c.b16 %v664, %v660
    %v745 = vpack.c.b16 %v669, %v665
    %v746 = vpack.c.b16 %v670, %v666
    %v747 = vpack.c.b16 %v671, %v667
    %v748 = vpack.c.b16 %v672, %v668
    %v749 = vpack.c.b16 %v677, %v673
    %v750 = vpack.c.b16 %v678, %v674
    %v751 = vpack.c.b16 %v679, %v675
    %v752 = vpack.c.b16 %v680, %v676
    %v753 = vpack.c.b16 %v685, %v681
    %v754 = vpack.c.b16 %v686, %v682
    %v755 = vpack.c.b16 %v687, %v683
    %v756 = vpack.c.b16 %v688, %v684
    %v757 = vpack.c.b16 %v693, %v689
    %v758 = vpack.c.b16 %v694, %v690
    %v759 = vpack.c.b16 %v695, %v691
    %v760 = vpack.c.b16 %v696, %v692
    %825 = vmatprep.subr.bf16.mxu0 %v726
    %826 = vmatpush1.bf16.msra.mxu0 %v725
    %827 = vmatprep.subr.bf16.mxu0 %v722
    %828 = vmatpush1.bf16.msra.mxu0 %v721
    %829 = vmatprep.subr.bf16.mxu0 %v718
    %830 = vmatpush1.bf16.msra.mxu0 %v717
    %831 = vmatprep.subr.bf16.mxu0 %v714
    %832 = vmatpush1.bf16.msra.mxu0 %v713
    %833 = vmatprep.subr.bf16.mxu0 %v710
    %834 = vmatpush1.bf16.msra.mxu0 %v709
    %835 = vmatprep.subr.bf16.mxu0 %v706
    %836 = vmatpush1.bf16.msra.mxu0 %v705
    %837 = vmatprep.subr.bf16.mxu0 %v702
    %838 = vmatpush1.bf16.msra.mxu0 %v701
    %839 = vmatprep.subr.bf16.mxu0 %v698
    %840 = vmatpush1.bf16.msra.mxu0 %v697
    %841 = vmatprep.subr.bf16.mxu0 %v758
    %842 = vmatpush2.bf16.msra.mxu0 %v757
    %843 = vmatprep.subr.bf16.mxu0 %v754
    %844 = vmatpush2.bf16.msra.mxu0 %v753
    %845 = vmatprep.subr.bf16.mxu0 %v750
    %846 = vmatpush2.bf16.msra.mxu0 %v749
    %847 = vmatprep.subr.bf16.mxu0 %v746
    %848 = vmatpush2.bf16.msra.mxu0 %v745
    %849 = vmatprep.subr.bf16.mxu0 %v742
    %850 = vmatpush2.bf16.msra.mxu0 %v741
    %851 = vmatprep.subr.bf16.mxu0 %v738
    %852 = vmatpush2.bf16.msra.mxu0 %v737
    %853 = vmatprep.subr.bf16.mxu0 %v734
    %854 = vmatpush2.bf16.msra.mxu0 %v733
    %855 = vmatprep.subr.bf16.mxu0 %v730
    %856 = vmatpush2.bf16.msra.mxu0 %v729
    %857 = vmatprep.mubr.bf16.mxu0 %v418
    %858 = vmatmul.mubr.bf16.gmra.mxu0 %v417
    %v859 = vpop.f32.mrf.mxu0
    %v860 = vadd.f32 %v488, %v859
    %v861 = vpop.f32.mrf.mxu0
    %v862 = vadd.f32 %v492, %v861
    %v863 = vpop.f32.mrf.mxu0
    %v864 = vadd.f32 %v488, %v863
    %v865 = vpop.f32.mrf.mxu0
    %v866 = vadd.f32 %v492, %v865
    %867 = vdwg.mxu0
    %868 = vmatprep.subr.bf16.mxu0 %v728
    %869 = vmatpush1.bf16.msra.mxu0 %v727
    %870 = vmatprep.subr.bf16.mxu0 %v724
    %871 = vmatpush1.bf16.msra.mxu0 %v723
    %872 = vmatprep.subr.bf16.mxu0 %v720
    %873 = vmatpush1.bf16.msra.mxu0 %v719
    %874 = vmatprep.subr.bf16.mxu0 %v716
    %875 = vmatpush1.bf16.msra.mxu0 %v715
    %876 = vmatprep.subr.bf16.mxu0 %v712
    %877 = vmatpush1.bf16.msra.mxu0 %v711
    %878 = vmatprep.subr.bf16.mxu0 %v708
    %879 = vmatpush1.bf16.msra.mxu0 %v707
    %880 = vmatprep.subr.bf16.mxu0 %v704
    %881 = vmatpush1.bf16.msra.mxu0 %v703
    %882 = vmatprep.subr.bf16.mxu0 %v700
    %883 = vmatpush1.bf16.msra.mxu0 %v699
    %884 = vmatprep.subr.bf16.mxu0 %v760
    %885 = vmatpush2.bf16.msra.mxu0 %v759
    %886 = vmatprep.subr.bf16.mxu0 %v756
    %887 = vmatpush2.bf16.msra.mxu0 %v755
    %888 = vmatprep.subr.bf16.mxu0 %v752
    %889 = vmatpush2.bf16.msra.mxu0 %v751
    %890 = vmatprep.subr.bf16.mxu0 %v748
    %891 = vmatpush2.bf16.msra.mxu0 %v747
    %892 = vmatprep.subr.bf16.mxu0 %v744
    %893 = vmatpush2.bf16.msra.mxu0 %v743
    %894 = vmatprep.subr.bf16.mxu0 %v740
    %895 = vmatpush2.bf16.msra.mxu0 %v739
    %896 = vmatprep.subr.bf16.mxu0 %v736
    %897 = vmatpush2.bf16.msra.mxu0 %v735
    %898 = vmatprep.subr.bf16.mxu0 %v732
    %899 = vmatpush2.bf16.msra.mxu0 %v731
    %900 = vmatprep.mubr.bf16.mxu0 %v418
    %901 = vmatmul.mubr.bf16.gmra.mxu0 %v417
    %v902 = vpop.f32.mrf.mxu0
    %v903 = vadd.f32 %v496, %v902
    %v904 = vpop.f32.mrf.mxu0
    %v905 = vadd.f32 %v500, %v904
    %v906 = vpop.f32.mrf.mxu0
    %v907 = vadd.f32 %v496, %v906
    %v908 = vpop.f32.mrf.mxu0
    %v909 = vadd.f32 %v500, %v908
    %910 = vdwg.mxu0
    %v911 = vmul.f32 %v860, 0.2
    %v912 = vmul.f32 %v862, 0.2
    %v913 = vmul.f32 %v903, 0.2
    %v914 = vmul.f32 %v905, 0.2
    %v915 = vmul.f32 %v864, 0.2
    %v916 = vmul.f32 %v866, 0.2
    %v917 = vmul.f32 %v907, 0.2
    %v918 = vmul.f32 %v909, 0.2
    %v919 = vmax.f32 %v860, %v911
    %v920 = vmax.f32 %v862, %v912
    %v921 = vmax.f32 %v903, %v913
    %v922 = vmax.f32 %v905, %v914
    %v923 = vmax.f32 %v864, %v915
    %v924 = vmax.f32 %v866, %v916
    %v925 = vmax.f32 %v907, %v917
    %v926 = vmax.f32 %v909, %v918
    %v927 = vpack.c.bf16 %v923, %v919
    %v928 = vpack.c.bf16 %v924, %v920
    %v929 = vpack.c.bf16 %v925, %v921
    %v930 = vpack.c.bf16 %v926, %v922
    %v931 = vld [vmem:[#allocation11] sm:$0xff]
    %v932 = vld [vmem:[#allocation11 + $0x8] sm:$0xff]
    %v933 = vld [vmem:[#allocation11 + $0x10] sm:$0xff]
    %v934 = vld [vmem:[#allocation11 + $0x18] sm:$0xff]
    %v935 = vld [vmem:[#allocation11 + $0x20] sm:$0xff]
    %v936 = vld [vmem:[#allocation11 + $0x28] sm:$0xff]
    %v937 = vld [vmem:[#allocation11 + $0x30] sm:$0xff]
    %v938 = vld [vmem:[#allocation11 + $0x38] sm:$0xff]
    %v939 = vld [vmem:[#allocation11 + $0x40] sm:$0xff]
    %v940 = vld [vmem:[#allocation11 + $0x48] sm:$0xff]
    %v941 = vld [vmem:[#allocation11 + $0x50] sm:$0xff]
    %v942 = vld [vmem:[#allocation11 + $0x58] sm:$0xff]
    %v943 = vld [vmem:[#allocation11 + $0x60] sm:$0xff]
    %v944 = vld [vmem:[#allocation11 + $0x68] sm:$0xff]
    %v945 = vld [vmem:[#allocation11 + $0x70] sm:$0xff]
    %v946 = vld [vmem:[#allocation11 + $0x78] sm:$0xff]
    %v947 = vld [vmem:[#allocation11 + $0x80] sm:$0xff]
    %v948 = vld [vmem:[#allocation11 + $0x88] sm:$0xff]
    %v949 = vld [vmem:[#allocation11 + $0x90] sm:$0xff]
    %v950 = vld [vmem:[#allocation11 + $0x98] sm:$0xff]
    %v951 = vld [vmem:[#allocation11 + $0xa0] sm:$0xff]
    %v952 = vld [vmem:[#allocation11 + $0xa8] sm:$0xff]
    %v953 = vld [vmem:[#allocation11 + $0xb0] sm:$0xff]
    %v954 = vld [vmem:[#allocation11 + $0xb8] sm:$0xff]
    %v955 = vld [vmem:[#allocation11 + $0xc0] sm:$0xff]
    %v956 = vld [vmem:[#allocation11 + $0xc8] sm:$0xff]
    %v957 = vld [vmem:[#allocation11 + $0xd0] sm:$0xff]
    %v958 = vld [vmem:[#allocation11 + $0xd8] sm:$0xff]
    %v959 = vld [vmem:[#allocation11 + $0xe0] sm:$0xff]
    %v960 = vld [vmem:[#allocation11 + $0xe8] sm:$0xff]
    %v961 = vld [vmem:[#allocation11 + $0xf0] sm:$0xff]
    %v962 = vld [vmem:[#allocation11 + $0xf8] sm:$0xff]
    %v963 = vld [vmem:[#allocation11 + $0x100] sm:$0xff]
    %v964 = vld [vmem:[#allocation11 + $0x108] sm:$0xff]
    %v965 = vld [vmem:[#allocation11 + $0x110] sm:$0xff]
    %v966 = vld [vmem:[#allocation11 + $0x118] sm:$0xff]
    %v967 = vld [vmem:[#allocation11 + $0x120] sm:$0xff]
    %v968 = vld [vmem:[#allocation11 + $0x128] sm:$0xff]
    %v969 = vld [vmem:[#allocation11 + $0x130] sm:$0xff]
    %v970 = vld [vmem:[#allocation11 + $0x138] sm:$0xff]
    %v971 = vld [vmem:[#allocation11 + $0x140] sm:$0xff]
    %v972 = vld [vmem:[#allocation11 + $0x148] sm:$0xff]
    %v973 = vld [vmem:[#allocation11 + $0x150] sm:$0xff]
    %v974 = vld [vmem:[#allocation11 + $0x158] sm:$0xff]
    %v975 = vld [vmem:[#allocation11 + $0x160] sm:$0xff]
    %v976 = vld [vmem:[#allocation11 + $0x168] sm:$0xff]
    %v977 = vld [vmem:[#allocation11 + $0x170] sm:$0xff]
    %v978 = vld [vmem:[#allocation11 + $0x178] sm:$0xff]
    %v979 = vld [vmem:[#allocation11 + $0x180] sm:$0xff]
    %v980 = vld [vmem:[#allocation11 + $0x188] sm:$0xff]
    %v981 = vld [vmem:[#allocation11 + $0x190] sm:$0xff]
    %v982 = vld [vmem:[#allocation11 + $0x198] sm:$0xff]
    %v983 = vld [vmem:[#allocation11 + $0x1a0] sm:$0xff]
    %v984 = vld [vmem:[#allocation11 + $0x1a8] sm:$0xff]
    %v985 = vld [vmem:[#allocation11 + $0x1b0] sm:$0xff]
    %v986 = vld [vmem:[#allocation11 + $0x1b8] sm:$0xff]
    %v987 = vld [vmem:[#allocation11 + $0x1c0] sm:$0xff]
    %v988 = vld [vmem:[#allocation11 + $0x1c8] sm:$0xff]
    %v989 = vld [vmem:[#allocation11 + $0x1d0] sm:$0xff]
    %v990 = vld [vmem:[#allocation11 + $0x1d8] sm:$0xff]
    %v991 = vld [vmem:[#allocation11 + $0x1e0] sm:$0xff]
    %v992 = vld [vmem:[#allocation11 + $0x1e8] sm:$0xff]
    %v993 = vld [vmem:[#allocation11 + $0x1f0] sm:$0xff]
    %v994 = vld [vmem:[#allocation11 + $0x1f8] sm:$0xff]
    %v995 = vld [vmem:[#allocation11 + $0x200] sm:$0xff]
    %v996 = vld [vmem:[#allocation11 + $0x208] sm:$0xff]
    %v997 = vld [vmem:[#allocation11 + $0x210] sm:$0xff]
    %v998 = vld [vmem:[#allocation11 + $0x218] sm:$0xff]
    %v999 = vld [vmem:[#allocation11 + $0x220] sm:$0xff]
    %v1000 = vld [vmem:[#allocation11 + $0x228] sm:$0xff]
    %v1001 = vld [vmem:[#allocation11 + $0x230] sm:$0xff]
    %v1002 = vld [vmem:[#allocation11 + $0x238] sm:$0xff]
    %v1003 = vld [vmem:[#allocation11 + $0x240] sm:$0xff]
    %v1004 = vld [vmem:[#allocation11 + $0x248] sm:$0xff]
    %v1005 = vld [vmem:[#allocation11 + $0x250] sm:$0xff]
    %v1006 = vld [vmem:[#allocation11 + $0x258] sm:$0xff]
    %v1007 = vld [vmem:[#allocation11 + $0x260] sm:$0xff]
    %v1008 = vld [vmem:[#allocation11 + $0x268] sm:$0xff]
    %v1009 = vld [vmem:[#allocation11 + $0x270] sm:$0xff]
    %v1010 = vld [vmem:[#allocation11 + $0x278] sm:$0xff]
    %v1011 = vld [vmem:[#allocation11 + $0x280] sm:$0xff]
    %v1012 = vld [vmem:[#allocation11 + $0x288] sm:$0xff]
    %v1013 = vld [vmem:[#allocation11 + $0x290] sm:$0xff]
    %v1014 = vld [vmem:[#allocation11 + $0x298] sm:$0xff]
    %v1015 = vld [vmem:[#allocation11 + $0x2a0] sm:$0xff]
    %v1016 = vld [vmem:[#allocation11 + $0x2a8] sm:$0xff]
    %v1017 = vld [vmem:[#allocation11 + $0x2b0] sm:$0xff]
    %v1018 = vld [vmem:[#allocation11 + $0x2b8] sm:$0xff]
    %v1019 = vld [vmem:[#allocation11 + $0x2c0] sm:$0xff]
    %v1020 = vld [vmem:[#allocation11 + $0x2c8] sm:$0xff]
    %v1021 = vld [vmem:[#allocation11 + $0x2d0] sm:$0xff]
    %v1022 = vld [vmem:[#allocation11 + $0x2d8] sm:$0xff]
    %v1023 = vld [vmem:[#allocation11 + $0x2e0] sm:$0xff]
    %v1024 = vld [vmem:[#allocation11 + $0x2e8] sm:$0xff]
    %v1025 = vld [vmem:[#allocation11 + $0x2f0] sm:$0xff]
    %v1026 = vld [vmem:[#allocation11 + $0x2f8] sm:$0xff]
    %v1027 = vld [vmem:[#allocation11 + $0x300] sm:$0xff]
    %v1028 = vld [vmem:[#allocation11 + $0x308] sm:$0xff]
    %v1029 = vld [vmem:[#allocation11 + $0x310] sm:$0xff]
    %v1030 = vld [vmem:[#allocation11 + $0x318] sm:$0xff]
    %v1031 = vld [vmem:[#allocation11 + $0x320] sm:$0xff]
    %v1032 = vld [vmem:[#allocation11 + $0x328] sm:$0xff]
    %v1033 = vld [vmem:[#allocation11 + $0x330] sm:$0xff]
    %v1034 = vld [vmem:[#allocation11 + $0x338] sm:$0xff]
    %v1035 = vld [vmem:[#allocation11 + $0x340] sm:$0xff]
    %v1036 = vld [vmem:[#allocation11 + $0x348] sm:$0xff]
    %v1037 = vld [vmem:[#allocation11 + $0x350] sm:$0xff]
    %v1038 = vld [vmem:[#allocation11 + $0x358] sm:$0xff]
    %v1039 = vld [vmem:[#allocation11 + $0x360] sm:$0xff]
    %v1040 = vld [vmem:[#allocation11 + $0x368] sm:$0xff]
    %v1041 = vld [vmem:[#allocation11 + $0x370] sm:$0xff]
    %v1042 = vld [vmem:[#allocation11 + $0x378] sm:$0xff]
    %v1043 = vld [vmem:[#allocation11 + $0x380] sm:$0xff]
    %v1044 = vld [vmem:[#allocation11 + $0x388] sm:$0xff]
    %v1045 = vld [vmem:[#allocation11 + $0x390] sm:$0xff]
    %v1046 = vld [vmem:[#allocation11 + $0x398] sm:$0xff]
    %v1047 = vld [vmem:[#allocation11 + $0x3a0] sm:$0xff]
    %v1048 = vld [vmem:[#allocation11 + $0x3a8] sm:$0xff]
    %v1049 = vld [vmem:[#allocation11 + $0x3b0] sm:$0xff]
    %v1050 = vld [vmem:[#allocation11 + $0x3b8] sm:$0xff]
    %v1051 = vld [vmem:[#allocation11 + $0x3c0] sm:$0xff]
    %v1052 = vld [vmem:[#allocation11 + $0x3c8] sm:$0xff]
    %v1053 = vld [vmem:[#allocation11 + $0x3d0] sm:$0xff]
    %v1054 = vld [vmem:[#allocation11 + $0x3d8] sm:$0xff]
    %v1055 = vld [vmem:[#allocation11 + $0x3e0] sm:$0xff]
    %v1056 = vld [vmem:[#allocation11 + $0x3e8] sm:$0xff]
    %v1057 = vld [vmem:[#allocation11 + $0x3f0] sm:$0xff]
    %v1058 = vld [vmem:[#allocation11 + $0x3f8] sm:$0xff]
    %v1059 = vld [vmem:[#allocation11 + $0x400] sm:$0xff]
    %v1060 = vld [vmem:[#allocation11 + $0x408] sm:$0xff]
    %v1061 = vld [vmem:[#allocation11 + $0x410] sm:$0xff]
    %v1062 = vld [vmem:[#allocation11 + $0x418] sm:$0xff]
    %v1063 = vld [vmem:[#allocation11 + $0x420] sm:$0xff]
    %v1064 = vld [vmem:[#allocation11 + $0x428] sm:$0xff]
    %v1065 = vld [vmem:[#allocation11 + $0x430] sm:$0xff]
    %v1066 = vld [vmem:[#allocation11 + $0x438] sm:$0xff]
    %v1067 = vld [vmem:[#allocation11 + $0x440] sm:$0xff]
    %v1068 = vld [vmem:[#allocation11 + $0x448] sm:$0xff]
    %v1069 = vld [vmem:[#allocation11 + $0x450] sm:$0xff]
    %v1070 = vld [vmem:[#allocation11 + $0x458] sm:$0xff]
    %v1071 = vld [vmem:[#allocation11 + $0x460] sm:$0xff]
    %v1072 = vld [vmem:[#allocation11 + $0x468] sm:$0xff]
    %v1073 = vld [vmem:[#allocation11 + $0x470] sm:$0xff]
    %v1074 = vld [vmem:[#allocation11 + $0x478] sm:$0xff]
    %v1075 = vld [vmem:[#allocation11 + $0x480] sm:$0xff]
    %v1076 = vld [vmem:[#allocation11 + $0x488] sm:$0xff]
    %v1077 = vld [vmem:[#allocation11 + $0x490] sm:$0xff]
    %v1078 = vld [vmem:[#allocation11 + $0x498] sm:$0xff]
    %v1079 = vld [vmem:[#allocation11 + $0x4a0] sm:$0xff]
    %v1080 = vld [vmem:[#allocation11 + $0x4a8] sm:$0xff]
    %v1081 = vld [vmem:[#allocation11 + $0x4b0] sm:$0xff]
    %v1082 = vld [vmem:[#allocation11 + $0x4b8] sm:$0xff]
    %v1083 = vld [vmem:[#allocation11 + $0x4c0] sm:$0xff]
    %v1084 = vld [vmem:[#allocation11 + $0x4c8] sm:$0xff]
    %v1085 = vld [vmem:[#allocation11 + $0x4d0] sm:$0xff]
    %v1086 = vld [vmem:[#allocation11 + $0x4d8] sm:$0xff]
    %v1087 = vld [vmem:[#allocation11 + $0x4e0] sm:$0xff]
    %v1088 = vld [vmem:[#allocation11 + $0x4e8] sm:$0xff]
    %v1089 = vld [vmem:[#allocation11 + $0x4f0] sm:$0xff]
    %v1090 = vld [vmem:[#allocation11 + $0x4f8] sm:$0xff]
    %v1091 = vld [vmem:[#allocation11 + $0x500] sm:$0xff]
    %v1092 = vld [vmem:[#allocation11 + $0x508] sm:$0xff]
    %v1093 = vld [vmem:[#allocation11 + $0x510] sm:$0xff]
    %v1094 = vld [vmem:[#allocation11 + $0x518] sm:$0xff]
    %v1095 = vld [vmem:[#allocation11 + $0x520] sm:$0xff]
    %v1096 = vld [vmem:[#allocation11 + $0x528] sm:$0xff]
    %v1097 = vld [vmem:[#allocation11 + $0x530] sm:$0xff]
    %v1098 = vld [vmem:[#allocation11 + $0x538] sm:$0xff]
    %v1099 = vld [vmem:[#allocation11 + $0x540] sm:$0xff]
    %v1100 = vld [vmem:[#allocation11 + $0x548] sm:$0xff]
    %v1101 = vld [vmem:[#allocation11 + $0x550] sm:$0xff]
    %v1102 = vld [vmem:[#allocation11 + $0x558] sm:$0xff]
    %v1103 = vld [vmem:[#allocation11 + $0x560] sm:$0xff]
    %v1104 = vld [vmem:[#allocation11 + $0x568] sm:$0xff]
    %v1105 = vld [vmem:[#allocation11 + $0x570] sm:$0xff]
    %v1106 = vld [vmem:[#allocation11 + $0x578] sm:$0xff]
    %v1107 = vld [vmem:[#allocation11 + $0x580] sm:$0xff]
    %v1108 = vld [vmem:[#allocation11 + $0x588] sm:$0xff]
    %v1109 = vld [vmem:[#allocation11 + $0x590] sm:$0xff]
    %v1110 = vld [vmem:[#allocation11 + $0x598] sm:$0xff]
    %v1111 = vld [vmem:[#allocation11 + $0x5a0] sm:$0xff]
    %v1112 = vld [vmem:[#allocation11 + $0x5a8] sm:$0xff]
    %v1113 = vld [vmem:[#allocation11 + $0x5b0] sm:$0xff]
    %v1114 = vld [vmem:[#allocation11 + $0x5b8] sm:$0xff]
    %v1115 = vld [vmem:[#allocation11 + $0x5c0] sm:$0xff]
    %v1116 = vld [vmem:[#allocation11 + $0x5c8] sm:$0xff]
    %v1117 = vld [vmem:[#allocation11 + $0x5d0] sm:$0xff]
    %v1118 = vld [vmem:[#allocation11 + $0x5d8] sm:$0xff]
    %v1119 = vld [vmem:[#allocation11 + $0x5e0] sm:$0xff]
    %v1120 = vld [vmem:[#allocation11 + $0x5e8] sm:$0xff]
    %v1121 = vld [vmem:[#allocation11 + $0x5f0] sm:$0xff]
    %v1122 = vld [vmem:[#allocation11 + $0x5f8] sm:$0xff]
    %v1123 = vld [vmem:[#allocation11 + $0x600] sm:$0xff]
    %v1124 = vld [vmem:[#allocation11 + $0x608] sm:$0xff]
    %v1125 = vld [vmem:[#allocation11 + $0x610] sm:$0xff]
    %v1126 = vld [vmem:[#allocation11 + $0x618] sm:$0xff]
    %v1127 = vld [vmem:[#allocation11 + $0x620] sm:$0xff]
    %v1128 = vld [vmem:[#allocation11 + $0x628] sm:$0xff]
    %v1129 = vld [vmem:[#allocation11 + $0x630] sm:$0xff]
    %v1130 = vld [vmem:[#allocation11 + $0x638] sm:$0xff]
    %v1131 = vld [vmem:[#allocation11 + $0x640] sm:$0xff]
    %v1132 = vld [vmem:[#allocation11 + $0x648] sm:$0xff]
    %v1133 = vld [vmem:[#allocation11 + $0x650] sm:$0xff]
    %v1134 = vld [vmem:[#allocation11 + $0x658] sm:$0xff]
    %v1135 = vld [vmem:[#allocation11 + $0x660] sm:$0xff]
    %v1136 = vld [vmem:[#allocation11 + $0x668] sm:$0xff]
    %v1137 = vld [vmem:[#allocation11 + $0x670] sm:$0xff]
    %v1138 = vld [vmem:[#allocation11 + $0x678] sm:$0xff]
    %v1139 = vld [vmem:[#allocation11 + $0x680] sm:$0xff]
    %v1140 = vld [vmem:[#allocation11 + $0x688] sm:$0xff]
    %v1141 = vld [vmem:[#allocation11 + $0x690] sm:$0xff]
    %v1142 = vld [vmem:[#allocation11 + $0x698] sm:$0xff]
    %v1143 = vld [vmem:[#allocation11 + $0x6a0] sm:$0xff]
    %v1144 = vld [vmem:[#allocation11 + $0x6a8] sm:$0xff]
    %v1145 = vld [vmem:[#allocation11 + $0x6b0] sm:$0xff]
    %v1146 = vld [vmem:[#allocation11 + $0x6b8] sm:$0xff]
    %v1147 = vld [vmem:[#allocation11 + $0x6c0] sm:$0xff]
    %v1148 = vld [vmem:[#allocation11 + $0x6c8] sm:$0xff]
    %v1149 = vld [vmem:[#allocation11 + $0x6d0] sm:$0xff]
    %v1150 = vld [vmem:[#allocation11 + $0x6d8] sm:$0xff]
    %v1151 = vld [vmem:[#allocation11 + $0x6e0] sm:$0xff]
    %v1152 = vld [vmem:[#allocation11 + $0x6e8] sm:$0xff]
    %v1153 = vld [vmem:[#allocation11 + $0x6f0] sm:$0xff]
    %v1154 = vld [vmem:[#allocation11 + $0x6f8] sm:$0xff]
    %v1155 = vld [vmem:[#allocation11 + $0x700] sm:$0xff]
    %v1156 = vld [vmem:[#allocation11 + $0x708] sm:$0xff]
    %v1157 = vld [vmem:[#allocation11 + $0x710] sm:$0xff]
    %v1158 = vld [vmem:[#allocation11 + $0x718] sm:$0xff]
    %v1159 = vld [vmem:[#allocation11 + $0x720] sm:$0xff]
    %v1160 = vld [vmem:[#allocation11 + $0x728] sm:$0xff]
    %v1161 = vld [vmem:[#allocation11 + $0x730] sm:$0xff]
    %v1162 = vld [vmem:[#allocation11 + $0x738] sm:$0xff]
    %v1163 = vld [vmem:[#allocation11 + $0x740] sm:$0xff]
    %v1164 = vld [vmem:[#allocation11 + $0x748] sm:$0xff]
    %v1165 = vld [vmem:[#allocation11 + $0x750] sm:$0xff]
    %v1166 = vld [vmem:[#allocation11 + $0x758] sm:$0xff]
    %v1167 = vld [vmem:[#allocation11 + $0x760] sm:$0xff]
    %v1168 = vld [vmem:[#allocation11 + $0x768] sm:$0xff]
    %v1169 = vld [vmem:[#allocation11 + $0x770] sm:$0xff]
    %v1170 = vld [vmem:[#allocation11 + $0x778] sm:$0xff]
    %v1171 = vld [vmem:[#allocation11 + $0x780] sm:$0xff]
    %v1172 = vld [vmem:[#allocation11 + $0x788] sm:$0xff]
    %v1173 = vld [vmem:[#allocation11 + $0x790] sm:$0xff]
    %v1174 = vld [vmem:[#allocation11 + $0x798] sm:$0xff]
    %v1175 = vld [vmem:[#allocation11 + $0x7a0] sm:$0xff]
    %v1176 = vld [vmem:[#allocation11 + $0x7a8] sm:$0xff]
    %v1177 = vld [vmem:[#allocation11 + $0x7b0] sm:$0xff]
    %v1178 = vld [vmem:[#allocation11 + $0x7b8] sm:$0xff]
    %v1179 = vld [vmem:[#allocation11 + $0x7c0] sm:$0xff]
    %v1180 = vld [vmem:[#allocation11 + $0x7c8] sm:$0xff]
    %v1181 = vld [vmem:[#allocation11 + $0x7d0] sm:$0xff]
    %v1182 = vld [vmem:[#allocation11 + $0x7d8] sm:$0xff]
    %v1183 = vld [vmem:[#allocation11 + $0x7e0] sm:$0xff]
    %v1184 = vld [vmem:[#allocation11 + $0x7e8] sm:$0xff]
    %v1185 = vld [vmem:[#allocation11 + $0x7f0] sm:$0xff]
    %v1186 = vld [vmem:[#allocation11 + $0x7f8] sm:$0xff]
    %v1187 = vld [vmem:[%s8] sm:$0xff]
    %v1189 = vlaneseq
    %v1190 = vshrl.u32 %v1189, 7
    %v1191 = vsub.s32 0, %v1190
    %v1192 = vrot.slane %v1187, %v1191
    %v1193 = vlaneseq
    %v1194 = vshrl.u32 %v1193, 7
    %v1195 = vsub.s32 1, %v1194
    %v1196 = vrot.slane %v1187, %v1195
    %v1197 = vlaneseq
    %v1198 = vshrl.u32 %v1197, 7
    %v1199 = vsub.s32 2, %v1198
    %v1200 = vrot.slane %v1187, %v1199
    %v1201 = vlaneseq
    %v1202 = vshrl.u32 %v1201, 7
    %v1203 = vsub.s32 3, %v1202
    %v1204 = vrot.slane %v1187, %v1203
    %v1205 = vlaneseq
    %v1206 = vshrl.u32 %v1205, 7
    %v1207 = vsub.s32 4, %v1206
    %v1208 = vrot.slane %v1187, %v1207
    %v1209 = vlaneseq
    %v1210 = vshrl.u32 %v1209, 7
    %v1211 = vsub.s32 5, %v1210
    %v1212 = vrot.slane %v1187, %v1211
    %v1213 = vlaneseq
    %v1214 = vshrl.u32 %v1213, 7
    %v1215 = vsub.s32 6, %v1214
    %v1216 = vrot.slane %v1187, %v1215
    %v1217 = vlaneseq
    %v1218 = vshrl.u32 %v1217, 7
    %v1219 = vsub.s32 7, %v1218
    %v1220 = vrot.slane %v1187, %v1219
    %v1485 = vunpack.c.l.b16 %v931
    %v1486 = vunpack.c.h.b16 %v931
    %v1487 = vunpack.c.l.b16 %v932
    %v1488 = vunpack.c.h.b16 %v932
    %v1489 = vunpack.c.l.b16 %v933
    %v1490 = vunpack.c.h.b16 %v933
    %v1491 = vunpack.c.l.b16 %v934
    %v1492 = vunpack.c.h.b16 %v934
    %v1493 = vunpack.c.l.b16 %v935
    %v1494 = vunpack.c.h.b16 %v935
    %v1495 = vunpack.c.l.b16 %v936
    %v1496 = vunpack.c.h.b16 %v936
    %v1497 = vunpack.c.l.b16 %v937
    %v1498 = vunpack.c.h.b16 %v937
    %v1499 = vunpack.c.l.b16 %v938
    %v1500 = vunpack.c.h.b16 %v938
    %v1501 = vunpack.c.l.b16 %v939
    %v1502 = vunpack.c.h.b16 %v939
    %v1503 = vunpack.c.l.b16 %v940
    %v1504 = vunpack.c.h.b16 %v940
    %v1505 = vunpack.c.l.b16 %v941
    %v1506 = vunpack.c.h.b16 %v941
    %v1507 = vunpack.c.l.b16 %v942
    %v1508 = vunpack.c.h.b16 %v942
    %v1509 = vunpack.c.l.b16 %v943
    %v1510 = vunpack.c.h.b16 %v943
    %v1511 = vunpack.c.l.b16 %v944
    %v1512 = vunpack.c.h.b16 %v944
    %v1513 = vunpack.c.l.b16 %v945
    %v1514 = vunpack.c.h.b16 %v945
    %v1515 = vunpack.c.l.b16 %v946
    %v1516 = vunpack.c.h.b16 %v946
    %v1517 = vunpack.c.l.b16 %v947
    %v1518 = vunpack.c.h.b16 %v947
    %v1519 = vunpack.c.l.b16 %v948
    %v1520 = vunpack.c.h.b16 %v948
    %v1521 = vunpack.c.l.b16 %v949
    %v1522 = vunpack.c.h.b16 %v949
    %v1523 = vunpack.c.l.b16 %v950
    %v1524 = vunpack.c.h.b16 %v950
    %v1525 = vunpack.c.l.b16 %v951
    %v1526 = vunpack.c.h.b16 %v951
    %v1527 = vunpack.c.l.b16 %v952
    %v1528 = vunpack.c.h.b16 %v952
    %v1529 = vunpack.c.l.b16 %v953
    %v1530 = vunpack.c.h.b16 %v953
    %v1531 = vunpack.c.l.b16 %v954
    %v1532 = vunpack.c.h.b16 %v954
    %v1533 = vunpack.c.l.b16 %v955
    %v1534 = vunpack.c.h.b16 %v955
    %v1535 = vunpack.c.l.b16 %v956
    %v1536 = vunpack.c.h.b16 %v956
    %v1537 = vunpack.c.l.b16 %v957
    %v1538 = vunpack.c.h.b16 %v957
    %v1539 = vunpack.c.l.b16 %v958
    %v1540 = vunpack.c.h.b16 %v958
    %v1541 = vunpack.c.l.b16 %v959
    %v1542 = vunpack.c.h.b16 %v959
    %v1543 = vunpack.c.l.b16 %v960
    %v1544 = vunpack.c.h.b16 %v960
    %v1545 = vunpack.c.l.b16 %v961
    %v1546 = vunpack.c.h.b16 %v961
    %v1547 = vunpack.c.l.b16 %v962
    %v1548 = vunpack.c.h.b16 %v962
    %v1549 = vunpack.c.l.b16 %v963
    %v1550 = vunpack.c.h.b16 %v963
    %v1551 = vunpack.c.l.b16 %v964
    %v1552 = vunpack.c.h.b16 %v964
    %v1553 = vunpack.c.l.b16 %v965
    %v1554 = vunpack.c.h.b16 %v965
    %v1555 = vunpack.c.l.b16 %v966
    %v1556 = vunpack.c.h.b16 %v966
    %v1557 = vunpack.c.l.b16 %v967
    %v1558 = vunpack.c.h.b16 %v967
    %v1559 = vunpack.c.l.b16 %v968
    %v1560 = vunpack.c.h.b16 %v968
    %v1561 = vunpack.c.l.b16 %v969
    %v1562 = vunpack.c.h.b16 %v969
    %v1563 = vunpack.c.l.b16 %v970
    %v1564 = vunpack.c.h.b16 %v970
    %v1565 = vunpack.c.l.b16 %v971
    %v1566 = vunpack.c.h.b16 %v971
    %v1567 = vunpack.c.l.b16 %v972
    %v1568 = vunpack.c.h.b16 %v972
    %v1569 = vunpack.c.l.b16 %v973
    %v1570 = vunpack.c.h.b16 %v973
    %v1571 = vunpack.c.l.b16 %v974
    %v1572 = vunpack.c.h.b16 %v974
    %v1573 = vunpack.c.l.b16 %v975
    %v1574 = vunpack.c.h.b16 %v975
    %v1575 = vunpack.c.l.b16 %v976
    %v1576 = vunpack.c.h.b16 %v976
    %v1577 = vunpack.c.l.b16 %v977
    %v1578 = vunpack.c.h.b16 %v977
    %v1579 = vunpack.c.l.b16 %v978
    %v1580 = vunpack.c.h.b16 %v978
    %v1581 = vunpack.c.l.b16 %v979
    %v1582 = vunpack.c.h.b16 %v979
    %v1583 = vunpack.c.l.b16 %v980
    %v1584 = vunpack.c.h.b16 %v980
    %v1585 = vunpack.c.l.b16 %v981
    %v1586 = vunpack.c.h.b16 %v981
    %v1587 = vunpack.c.l.b16 %v982
    %v1588 = vunpack.c.h.b16 %v982
    %v1589 = vunpack.c.l.b16 %v983
    %v1590 = vunpack.c.h.b16 %v983
    %v1591 = vunpack.c.l.b16 %v984
    %v1592 = vunpack.c.h.b16 %v984
    %v1593 = vunpack.c.l.b16 %v985
    %v1594 = vunpack.c.h.b16 %v985
    %v1595 = vunpack.c.l.b16 %v986
    %v1596 = vunpack.c.h.b16 %v986
    %v1597 = vunpack.c.l.b16 %v987
    %v1598 = vunpack.c.h.b16 %v987
    %v1599 = vunpack.c.l.b16 %v988
    %v1600 = vunpack.c.h.b16 %v988
    %v1601 = vunpack.c.l.b16 %v989
    %v1602 = vunpack.c.h.b16 %v989
    %v1603 = vunpack.c.l.b16 %v990
    %v1604 = vunpack.c.h.b16 %v990
    %v1605 = vunpack.c.l.b16 %v991
    %v1606 = vunpack.c.h.b16 %v991
    %v1607 = vunpack.c.l.b16 %v992
    %v1608 = vunpack.c.h.b16 %v992
    %v1609 = vunpack.c.l.b16 %v993
    %v1610 = vunpack.c.h.b16 %v993
    %v1611 = vunpack.c.l.b16 %v994
    %v1612 = vunpack.c.h.b16 %v994
    %v1613 = vunpack.c.l.b16 %v995
    %v1614 = vunpack.c.h.b16 %v995
    %v1615 = vunpack.c.l.b16 %v996
    %v1616 = vunpack.c.h.b16 %v996
    %v1617 = vunpack.c.l.b16 %v997
    %v1618 = vunpack.c.h.b16 %v997
    %v1619 = vunpack.c.l.b16 %v998
    %v1620 = vunpack.c.h.b16 %v998
    %v1621 = vunpack.c.l.b16 %v999
    %v1622 = vunpack.c.h.b16 %v999
    %v1623 = vunpack.c.l.b16 %v1000
    %v1624 = vunpack.c.h.b16 %v1000
    %v1625 = vunpack.c.l.b16 %v1001
    %v1626 = vunpack.c.h.b16 %v1001
    %v1627 = vunpack.c.l.b16 %v1002
    %v1628 = vunpack.c.h.b16 %v1002
    %v1629 = vunpack.c.l.b16 %v1003
    %v1630 = vunpack.c.h.b16 %v1003
    %v1631 = vunpack.c.l.b16 %v1004
    %v1632 = vunpack.c.h.b16 %v1004
    %v1633 = vunpack.c.l.b16 %v1005
    %v1634 = vunpack.c.h.b16 %v1005
    %v1635 = vunpack.c.l.b16 %v1006
    %v1636 = vunpack.c.h.b16 %v1006
    %v1637 = vunpack.c.l.b16 %v1007
    %v1638 = vunpack.c.h.b16 %v1007
    %v1639 = vunpack.c.l.b16 %v1008
    %v1640 = vunpack.c.h.b16 %v1008
    %v1641 = vunpack.c.l.b16 %v1009
    %v1642 = vunpack.c.h.b16 %v1009
    %v1643 = vunpack.c.l.b16 %v1010
    %v1644 = vunpack.c.h.b16 %v1010
    %v1645 = vunpack.c.l.b16 %v1011
    %v1646 = vunpack.c.h.b16 %v1011
    %v1647 = vunpack.c.l.b16 %v1012
    %v1648 = vunpack.c.h.b16 %v1012
    %v1649 = vunpack.c.l.b16 %v1013
    %v1650 = vunpack.c.h.b16 %v1013
    %v1651 = vunpack.c.l.b16 %v1014
    %v1652 = vunpack.c.h.b16 %v1014
    %v1653 = vunpack.c.l.b16 %v1015
    %v1654 = vunpack.c.h.b16 %v1015
    %v1655 = vunpack.c.l.b16 %v1016
    %v1656 = vunpack.c.h.b16 %v1016
    %v1657 = vunpack.c.l.b16 %v1017
    %v1658 = vunpack.c.h.b16 %v1017
    %v1659 = vunpack.c.l.b16 %v1018
    %v1660 = vunpack.c.h.b16 %v1018
    %v1661 = vunpack.c.l.b16 %v1019
    %v1662 = vunpack.c.h.b16 %v1019
    %v1663 = vunpack.c.l.b16 %v1020
    %v1664 = vunpack.c.h.b16 %v1020
    %v1665 = vunpack.c.l.b16 %v1021
    %v1666 = vunpack.c.h.b16 %v1021
    %v1667 = vunpack.c.l.b16 %v1022
    %v1668 = vunpack.c.h.b16 %v1022
    %v1669 = vunpack.c.l.b16 %v1023
    %v1670 = vunpack.c.h.b16 %v1023
    %v1671 = vunpack.c.l.b16 %v1024
    %v1672 = vunpack.c.h.b16 %v1024
    %v1673 = vunpack.c.l.b16 %v1025
    %v1674 = vunpack.c.h.b16 %v1025
    %v1675 = vunpack.c.l.b16 %v1026
    %v1676 = vunpack.c.h.b16 %v1026
    %v1677 = vunpack.c.l.b16 %v1027
    %v1678 = vunpack.c.h.b16 %v1027
    %v1679 = vunpack.c.l.b16 %v1028
    %v1680 = vunpack.c.h.b16 %v1028
    %v1681 = vunpack.c.l.b16 %v1029
    %v1682 = vunpack.c.h.b16 %v1029
    %v1683 = vunpack.c.l.b16 %v1030
    %v1684 = vunpack.c.h.b16 %v1030
    %v1685 = vunpack.c.l.b16 %v1031
    %v1686 = vunpack.c.h.b16 %v1031
    %v1687 = vunpack.c.l.b16 %v1032
    %v1688 = vunpack.c.h.b16 %v1032
    %v1689 = vunpack.c.l.b16 %v1033
    %v1690 = vunpack.c.h.b16 %v1033
    %v1691 = vunpack.c.l.b16 %v1034
    %v1692 = vunpack.c.h.b16 %v1034
    %v1693 = vunpack.c.l.b16 %v1035
    %v1694 = vunpack.c.h.b16 %v1035
    %v1695 = vunpack.c.l.b16 %v1036
    %v1696 = vunpack.c.h.b16 %v1036
    %v1697 = vunpack.c.l.b16 %v1037
    %v1698 = vunpack.c.h.b16 %v1037
    %v1699 = vunpack.c.l.b16 %v1038
    %v1700 = vunpack.c.h.b16 %v1038
    %v1701 = vunpack.c.l.b16 %v1039
    %v1702 = vunpack.c.h.b16 %v1039
    %v1703 = vunpack.c.l.b16 %v1040
    %v1704 = vunpack.c.h.b16 %v1040
    %v1705 = vunpack.c.l.b16 %v1041
    %v1706 = vunpack.c.h.b16 %v1041
    %v1707 = vunpack.c.l.b16 %v1042
    %v1708 = vunpack.c.h.b16 %v1042
    %v1709 = vunpack.c.l.b16 %v1043
    %v1710 = vunpack.c.h.b16 %v1043
    %v1711 = vunpack.c.l.b16 %v1044
    %v1712 = vunpack.c.h.b16 %v1044
    %v1713 = vunpack.c.l.b16 %v1045
    %v1714 = vunpack.c.h.b16 %v1045
    %v1715 = vunpack.c.l.b16 %v1046
    %v1716 = vunpack.c.h.b16 %v1046
    %v1717 = vunpack.c.l.b16 %v1047
    %v1718 = vunpack.c.h.b16 %v1047
    %v1719 = vunpack.c.l.b16 %v1048
    %v1720 = vunpack.c.h.b16 %v1048
    %v1721 = vunpack.c.l.b16 %v1049
    %v1722 = vunpack.c.h.b16 %v1049
    %v1723 = vunpack.c.l.b16 %v1050
    %v1724 = vunpack.c.h.b16 %v1050
    %v1725 = vunpack.c.l.b16 %v1051
    %v1726 = vunpack.c.h.b16 %v1051
    %v1727 = vunpack.c.l.b16 %v1052
    %v1728 = vunpack.c.h.b16 %v1052
    %v1729 = vunpack.c.l.b16 %v1053
    %v1730 = vunpack.c.h.b16 %v1053
    %v1731 = vunpack.c.l.b16 %v1054
    %v1732 = vunpack.c.h.b16 %v1054
    %v1733 = vunpack.c.l.b16 %v1055
    %v1734 = vunpack.c.h.b16 %v1055
    %v1735 = vunpack.c.l.b16 %v1056
    %v1736 = vunpack.c.h.b16 %v1056
    %v1737 = vunpack.c.l.b16 %v1057
    %v1738 = vunpack.c.h.b16 %v1057
    %v1739 = vunpack.c.l.b16 %v1058
    %v1740 = vunpack.c.h.b16 %v1058
    %v1741 = vunpack.c.l.b16 %v1059
    %v1742 = vunpack.c.h.b16 %v1059
    %v1743 = vunpack.c.l.b16 %v1060
    %v1744 = vunpack.c.h.b16 %v1060
    %v1745 = vunpack.c.l.b16 %v1061
    %v1746 = vunpack.c.h.b16 %v1061
    %v1747 = vunpack.c.l.b16 %v1062
    %v1748 = vunpack.c.h.b16 %v1062
    %v1749 = vunpack.c.l.b16 %v1063
    %v1750 = vunpack.c.h.b16 %v1063
    %v1751 = vunpack.c.l.b16 %v1064
    %v1752 = vunpack.c.h.b16 %v1064
    %v1753 = vunpack.c.l.b16 %v1065
    %v1754 = vunpack.c.h.b16 %v1065
    %v1755 = vunpack.c.l.b16 %v1066
    %v1756 = vunpack.c.h.b16 %v1066
    %v1757 = vunpack.c.l.b16 %v1067
    %v1758 = vunpack.c.h.b16 %v1067
    %v1759 = vunpack.c.l.b16 %v1068
    %v1760 = vunpack.c.h.b16 %v1068
    %v1761 = vunpack.c.l.b16 %v1069
    %v1762 = vunpack.c.h.b16 %v1069
    %v1763 = vunpack.c.l.b16 %v1070
    %v1764 = vunpack.c.h.b16 %v1070
    %v1765 = vunpack.c.l.b16 %v1071
    %v1766 = vunpack.c.h.b16 %v1071
    %v1767 = vunpack.c.l.b16 %v1072
    %v1768 = vunpack.c.h.b16 %v1072
    %v1769 = vunpack.c.l.b16 %v1073
    %v1770 = vunpack.c.h.b16 %v1073
    %v1771 = vunpack.c.l.b16 %v1074
    %v1772 = vunpack.c.h.b16 %v1074
    %v1773 = vunpack.c.l.b16 %v1075
    %v1774 = vunpack.c.h.b16 %v1075
    %v1775 = vunpack.c.l.b16 %v1076
    %v1776 = vunpack.c.h.b16 %v1076
    %v1777 = vunpack.c.l.b16 %v1077
    %v1778 = vunpack.c.h.b16 %v1077
    %v1779 = vunpack.c.l.b16 %v1078
    %v1780 = vunpack.c.h.b16 %v1078
    %v1781 = vunpack.c.l.b16 %v1079
    %v1782 = vunpack.c.h.b16 %v1079
    %v1783 = vunpack.c.l.b16 %v1080
    %v1784 = vunpack.c.h.b16 %v1080
    %v1785 = vunpack.c.l.b16 %v1081
    %v1786 = vunpack.c.h.b16 %v1081
    %v1787 = vunpack.c.l.b16 %v1082
    %v1788 = vunpack.c.h.b16 %v1082
    %v1789 = vunpack.c.l.b16 %v1083
    %v1790 = vunpack.c.h.b16 %v1083
    %v1791 = vunpack.c.l.b16 %v1084
    %v1792 = vunpack.c.h.b16 %v1084
    %v1793 = vunpack.c.l.b16 %v1085
    %v1794 = vunpack.c.h.b16 %v1085
    %v1795 = vunpack.c.l.b16 %v1086
    %v1796 = vunpack.c.h.b16 %v1086
    %v1797 = vunpack.c.l.b16 %v1087
    %v1798 = vunpack.c.h.b16 %v1087
    %v1799 = vunpack.c.l.b16 %v1088
    %v1800 = vunpack.c.h.b16 %v1088
    %v1801 = vunpack.c.l.b16 %v1089
    %v1802 = vunpack.c.h.b16 %v1089
    %v1803 = vunpack.c.l.b16 %v1090
    %v1804 = vunpack.c.h.b16 %v1090
    %v1805 = vunpack.c.l.b16 %v1091
    %v1806 = vunpack.c.h.b16 %v1091
    %v1807 = vunpack.c.l.b16 %v1092
    %v1808 = vunpack.c.h.b16 %v1092
    %v1809 = vunpack.c.l.b16 %v1093
    %v1810 = vunpack.c.h.b16 %v1093
    %v1811 = vunpack.c.l.b16 %v1094
    %v1812 = vunpack.c.h.b16 %v1094
    %v1813 = vunpack.c.l.b16 %v1095
    %v1814 = vunpack.c.h.b16 %v1095
    %v1815 = vunpack.c.l.b16 %v1096
    %v1816 = vunpack.c.h.b16 %v1096
    %v1817 = vunpack.c.l.b16 %v1097
    %v1818 = vunpack.c.h.b16 %v1097
    %v1819 = vunpack.c.l.b16 %v1098
    %v1820 = vunpack.c.h.b16 %v1098
    %v1821 = vunpack.c.l.b16 %v1099
    %v1822 = vunpack.c.h.b16 %v1099
    %v1823 = vunpack.c.l.b16 %v1100
    %v1824 = vunpack.c.h.b16 %v1100
    %v1825 = vunpack.c.l.b16 %v1101
    %v1826 = vunpack.c.h.b16 %v1101
    %v1827 = vunpack.c.l.b16 %v1102
    %v1828 = vunpack.c.h.b16 %v1102
    %v1829 = vunpack.c.l.b16 %v1103
    %v1830 = vunpack.c.h.b16 %v1103
    %v1831 = vunpack.c.l.b16 %v1104
    %v1832 = vunpack.c.h.b16 %v1104
    %v1833 = vunpack.c.l.b16 %v1105
    %v1834 = vunpack.c.h.b16 %v1105
    %v1835 = vunpack.c.l.b16 %v1106
    %v1836 = vunpack.c.h.b16 %v1106
    %v1837 = vunpack.c.l.b16 %v1107
    %v1838 = vunpack.c.h.b16 %v1107
    %v1839 = vunpack.c.l.b16 %v1108
    %v1840 = vunpack.c.h.b16 %v1108
    %v1841 = vunpack.c.l.b16 %v1109
    %v1842 = vunpack.c.h.b16 %v1109
    %v1843 = vunpack.c.l.b16 %v1110
    %v1844 = vunpack.c.h.b16 %v1110
    %v1845 = vunpack.c.l.b16 %v1111
    %v1846 = vunpack.c.h.b16 %v1111
    %v1847 = vunpack.c.l.b16 %v1112
    %v1848 = vunpack.c.h.b16 %v1112
    %v1849 = vunpack.c.l.b16 %v1113
    %v1850 = vunpack.c.h.b16 %v1113
    %v1851 = vunpack.c.l.b16 %v1114
    %v1852 = vunpack.c.h.b16 %v1114
    %v1853 = vunpack.c.l.b16 %v1115
    %v1854 = vunpack.c.h.b16 %v1115
    %v1855 = vunpack.c.l.b16 %v1116
    %v1856 = vunpack.c.h.b16 %v1116
    %v1857 = vunpack.c.l.b16 %v1117
    %v1858 = vunpack.c.h.b16 %v1117
    %v1859 = vunpack.c.l.b16 %v1118
    %v1860 = vunpack.c.h.b16 %v1118
    %v1861 = vunpack.c.l.b16 %v1119
    %v1862 = vunpack.c.h.b16 %v1119
    %v1863 = vunpack.c.l.b16 %v1120
    %v1864 = vunpack.c.h.b16 %v1120
    %v1865 = vunpack.c.l.b16 %v1121
    %v1866 = vunpack.c.h.b16 %v1121
    %v1867 = vunpack.c.l.b16 %v1122
    %v1868 = vunpack.c.h.b16 %v1122
    %v1869 = vunpack.c.l.b16 %v1123
    %v1870 = vunpack.c.h.b16 %v1123
    %v1871 = vunpack.c.l.b16 %v1124
    %v1872 = vunpack.c.h.b16 %v1124
    %v1873 = vunpack.c.l.b16 %v1125
    %v1874 = vunpack.c.h.b16 %v1125
    %v1875 = vunpack.c.l.b16 %v1126
    %v1876 = vunpack.c.h.b16 %v1126
    %v1877 = vunpack.c.l.b16 %v1127
    %v1878 = vunpack.c.h.b16 %v1127
    %v1879 = vunpack.c.l.b16 %v1128
    %v1880 = vunpack.c.h.b16 %v1128
    %v1881 = vunpack.c.l.b16 %v1129
    %v1882 = vunpack.c.h.b16 %v1129
    %v1883 = vunpack.c.l.b16 %v1130
    %v1884 = vunpack.c.h.b16 %v1130
    %v1885 = vunpack.c.l.b16 %v1131
    %v1886 = vunpack.c.h.b16 %v1131
    %v1887 = vunpack.c.l.b16 %v1132
    %v1888 = vunpack.c.h.b16 %v1132
    %v1889 = vunpack.c.l.b16 %v1133
    %v1890 = vunpack.c.h.b16 %v1133
    %v1891 = vunpack.c.l.b16 %v1134
    %v1892 = vunpack.c.h.b16 %v1134
    %v1893 = vunpack.c.l.b16 %v1135
    %v1894 = vunpack.c.h.b16 %v1135
    %v1895 = vunpack.c.l.b16 %v1136
    %v1896 = vunpack.c.h.b16 %v1136
    %v1897 = vunpack.c.l.b16 %v1137
    %v1898 = vunpack.c.h.b16 %v1137
    %v1899 = vunpack.c.l.b16 %v1138
    %v1900 = vunpack.c.h.b16 %v1138
    %v1901 = vunpack.c.l.b16 %v1139
    %v1902 = vunpack.c.h.b16 %v1139
    %v1903 = vunpack.c.l.b16 %v1140
    %v1904 = vunpack.c.h.b16 %v1140
    %v1905 = vunpack.c.l.b16 %v1141
    %v1906 = vunpack.c.h.b16 %v1141
    %v1907 = vunpack.c.l.b16 %v1142
    %v1908 = vunpack.c.h.b16 %v1142
    %v1909 = vunpack.c.l.b16 %v1143
    %v1910 = vunpack.c.h.b16 %v1143
    %v1911 = vunpack.c.l.b16 %v1144
    %v1912 = vunpack.c.h.b16 %v1144
    %v1913 = vunpack.c.l.b16 %v1145
    %v1914 = vunpack.c.h.b16 %v1145
    %v1915 = vunpack.c.l.b16 %v1146
    %v1916 = vunpack.c.h.b16 %v1146
    %v1917 = vunpack.c.l.b16 %v1147
    %v1918 = vunpack.c.h.b16 %v1147
    %v1919 = vunpack.c.l.b16 %v1148
    %v1920 = vunpack.c.h.b16 %v1148
    %v1921 = vunpack.c.l.b16 %v1149
    %v1922 = vunpack.c.h.b16 %v1149
    %v1923 = vunpack.c.l.b16 %v1150
    %v1924 = vunpack.c.h.b16 %v1150
    %v1925 = vunpack.c.l.b16 %v1151
    %v1926 = vunpack.c.h.b16 %v1151
    %v1927 = vunpack.c.l.b16 %v1152
    %v1928 = vunpack.c.h.b16 %v1152
    %v1929 = vunpack.c.l.b16 %v1153
    %v1930 = vunpack.c.h.b16 %v1153
    %v1931 = vunpack.c.l.b16 %v1154
    %v1932 = vunpack.c.h.b16 %v1154
    %v1933 = vunpack.c.l.b16 %v1155
    %v1934 = vunpack.c.h.b16 %v1155
    %v1935 = vunpack.c.l.b16 %v1156
    %v1936 = vunpack.c.h.b16 %v1156
    %v1937 = vunpack.c.l.b16 %v1157
    %v1938 = vunpack.c.h.b16 %v1157
    %v1939 = vunpack.c.l.b16 %v1158
    %v1940 = vunpack.c.h.b16 %v1158
    %v1941 = vunpack.c.l.b16 %v1159
    %v1942 = vunpack.c.h.b16 %v1159
    %v1943 = vunpack.c.l.b16 %v1160
    %v1944 = vunpack.c.h.b16 %v1160
    %v1945 = vunpack.c.l.b16 %v1161
    %v1946 = vunpack.c.h.b16 %v1161
    %v1947 = vunpack.c.l.b16 %v1162
    %v1948 = vunpack.c.h.b16 %v1162
    %v1949 = vunpack.c.l.b16 %v1163
    %v1950 = vunpack.c.h.b16 %v1163
    %v1951 = vunpack.c.l.b16 %v1164
    %v1952 = vunpack.c.h.b16 %v1164
    %v1953 = vunpack.c.l.b16 %v1165
    %v1954 = vunpack.c.h.b16 %v1165
    %v1955 = vunpack.c.l.b16 %v1166
    %v1956 = vunpack.c.h.b16 %v1166
    %v1957 = vunpack.c.l.b16 %v1167
    %v1958 = vunpack.c.h.b16 %v1167
    %v1959 = vunpack.c.l.b16 %v1168
    %v1960 = vunpack.c.h.b16 %v1168
    %v1961 = vunpack.c.l.b16 %v1169
    %v1962 = vunpack.c.h.b16 %v1169
    %v1963 = vunpack.c.l.b16 %v1170
    %v1964 = vunpack.c.h.b16 %v1170
    %v1965 = vunpack.c.l.b16 %v1171
    %v1966 = vunpack.c.h.b16 %v1171
    %v1967 = vunpack.c.l.b16 %v1172
    %v1968 = vunpack.c.h.b16 %v1172
    %v1969 = vunpack.c.l.b16 %v1173
    %v1970 = vunpack.c.h.b16 %v1173
    %v1971 = vunpack.c.l.b16 %v1174
    %v1972 = vunpack.c.h.b16 %v1174
    %v1973 = vunpack.c.l.b16 %v1175
    %v1974 = vunpack.c.h.b16 %v1175
    %v1975 = vunpack.c.l.b16 %v1176
    %v1976 = vunpack.c.h.b16 %v1176
    %v1977 = vunpack.c.l.b16 %v1177
    %v1978 = vunpack.c.h.b16 %v1177
    %v1979 = vunpack.c.l.b16 %v1178
    %v1980 = vunpack.c.h.b16 %v1178
    %v1981 = vunpack.c.l.b16 %v1179
    %v1982 = vunpack.c.h.b16 %v1179
    %v1983 = vunpack.c.l.b16 %v1180
    %v1984 = vunpack.c.h.b16 %v1180
    %v1985 = vunpack.c.l.b16 %v1181
    %v1986 = vunpack.c.h.b16 %v1181
    %v1987 = vunpack.c.l.b16 %v1182
    %v1988 = vunpack.c.h.b16 %v1182
    %v1989 = vunpack.c.l.b16 %v1183
    %v1990 = vunpack.c.h.b16 %v1183
    %v1991 = vunpack.c.l.b16 %v1184
    %v1992 = vunpack.c.h.b16 %v1184
    %v1993 = vunpack.c.l.b16 %v1185
    %v1994 = vunpack.c.h.b16 %v1185
    %v1995 = vunpack.c.l.b16 %v1186
    %v1996 = vunpack.c.h.b16 %v1186
    %v1997 = vpack.c.b16 %v1493, %v1485
    %v1998 = vpack.c.b16 %v1494, %v1486
    %v1999 = vpack.c.b16 %v1495, %v1487
    %v2000 = vpack.c.b16 %v1496, %v1488
    %v2001 = vpack.c.b16 %v1497, %v1489
    %v2002 = vpack.c.b16 %v1498, %v1490
    %v2003 = vpack.c.b16 %v1499, %v1491
    %v2004 = vpack.c.b16 %v1500, %v1492
    %v2005 = vpack.c.b16 %v1509, %v1501
    %v2006 = vpack.c.b16 %v1510, %v1502
    %v2007 = vpack.c.b16 %v1511, %v1503
    %v2008 = vpack.c.b16 %v1512, %v1504
    %v2009 = vpack.c.b16 %v1513, %v1505
    %v2010 = vpack.c.b16 %v1514, %v1506
    %v2011 = vpack.c.b16 %v1515, %v1507
    %v2012 = vpack.c.b16 %v1516, %v1508
    %v2013 = vpack.c.b16 %v1525, %v1517
    %v2014 = vpack.c.b16 %v1526, %v1518
    %v2015 = vpack.c.b16 %v1527, %v1519
    %v2016 = vpack.c.b16 %v1528, %v1520
    %v2017 = vpack.c.b16 %v1529, %v1521
    %v2018 = vpack.c.b16 %v1530, %v1522
    %v2019 = vpack.c.b16 %v1531, %v1523
    %v2020 = vpack.c.b16 %v1532, %v1524
    %v2021 = vpack.c.b16 %v1541, %v1533
    %v2022 = vpack.c.b16 %v1542, %v1534
    %v2023 = vpack.c.b16 %v1543, %v1535
    %v2024 = vpack.c.b16 %v1544, %v1536
    %v2025 = vpack.c.b16 %v1545, %v1537
    %v2026 = vpack.c.b16 %v1546, %v1538
    %v2027 = vpack.c.b16 %v1547, %v1539
    %v2028 = vpack.c.b16 %v1548, %v1540
    %v2029 = vpack.c.b16 %v1557, %v1549
    %v2030 = vpack.c.b16 %v1558, %v1550
    %v2031 = vpack.c.b16 %v1559, %v1551
    %v2032 = vpack.c.b16 %v1560, %v1552
    %v2033 = vpack.c.b16 %v1561, %v1553
    %v2034 = vpack.c.b16 %v1562, %v1554
    %v2035 = vpack.c.b16 %v1563, %v1555
    %v2036 = vpack.c.b16 %v1564, %v1556
    %v2037 = vpack.c.b16 %v1573, %v1565
    %v2038 = vpack.c.b16 %v1574, %v1566
    %v2039 = vpack.c.b16 %v1575, %v1567
    %v2040 = vpack.c.b16 %v1576, %v1568
    %v2041 = vpack.c.b16 %v1577, %v1569
    %v2042 = vpack.c.b16 %v1578, %v1570
    %v2043 = vpack.c.b16 %v1579, %v1571
    %v2044 = vpack.c.b16 %v1580, %v1572
    %v2045 = vpack.c.b16 %v1589, %v1581
    %v2046 = vpack.c.b16 %v1590, %v1582
    %v2047 = vpack.c.b16 %v1591, %v1583
    %v2048 = vpack.c.b16 %v1592, %v1584
    %v2049 = vpack.c.b16 %v1593, %v1585
    %v2050 = vpack.c.b16 %v1594, %v1586
    %v2051 = vpack.c.b16 %v1595, %v1587
    %v2052 = vpack.c.b16 %v1596, %v1588
    %v2053 = vpack.c.b16 %v1605, %v1597
    %v2054 = vpack.c.b16 %v1606, %v1598
    %v2055 = vpack.c.b16 %v1607, %v1599
    %v2056 = vpack.c.b16 %v1608, %v1600
    %v2057 = vpack.c.b16 %v1609, %v1601
    %v2058 = vpack.c.b16 %v1610, %v1602
    %v2059 = vpack.c.b16 %v1611, %v1603
    %v2060 = vpack.c.b16 %v1612, %v1604
    %v2061 = vpack.c.b16 %v1621, %v1613
    %v2062 = vpack.c.b16 %v1622, %v1614
    %v2063 = vpack.c.b16 %v1623, %v1615
    %v2064 = vpack.c.b16 %v1624, %v1616
    %v2065 = vpack.c.b16 %v1625, %v1617
    %v2066 = vpack.c.b16 %v1626, %v1618
    %v2067 = vpack.c.b16 %v1627, %v1619
    %v2068 = vpack.c.b16 %v1628, %v1620
    %v2069 = vpack.c.b16 %v1637, %v1629
    %v2070 = vpack.c.b16 %v1638, %v1630
    %v2071 = vpack.c.b16 %v1639, %v1631
    %v2072 = vpack.c.b16 %v1640, %v1632
    %v2073 = vpack.c.b16 %v1641, %v1633
    %v2074 = vpack.c.b16 %v1642, %v1634
    %v2075 = vpack.c.b16 %v1643, %v1635
    %v2076 = vpack.c.b16 %v1644, %v1636
    %v2077 = vpack.c.b16 %v1653, %v1645
    %v2078 = vpack.c.b16 %v1654, %v1646
    %v2079 = vpack.c.b16 %v1655, %v1647
    %v2080 = vpack.c.b16 %v1656, %v1648
    %v2081 = vpack.c.b16 %v1657, %v1649
    %v2082 = vpack.c.b16 %v1658, %v1650
    %v2083 = vpack.c.b16 %v1659, %v1651
    %v2084 = vpack.c.b16 %v1660, %v1652
    %v2085 = vpack.c.b16 %v1669, %v1661
    %v2086 = vpack.c.b16 %v1670, %v1662
    %v2087 = vpack.c.b16 %v1671, %v1663
    %v2088 = vpack.c.b16 %v1672, %v1664
    %v2089 = vpack.c.b16 %v1673, %v1665
    %v2090 = vpack.c.b16 %v1674, %v1666
    %v2091 = vpack.c.b16 %v1675, %v1667
    %v2092 = vpack.c.b16 %v1676, %v1668
    %v2093 = vpack.c.b16 %v1685, %v1677
    %v2094 = vpack.c.b16 %v1686, %v1678
    %v2095 = vpack.c.b16 %v1687, %v1679
    %v2096 = vpack.c.b16 %v1688, %v1680
    %v2097 = vpack.c.b16 %v1689, %v1681
    %v2098 = vpack.c.b16 %v1690, %v1682
    %v2099 = vpack.c.b16 %v1691, %v1683
    %v2100 = vpack.c.b16 %v1692, %v1684
    %v2101 = vpack.c.b16 %v1701, %v1693
    %v2102 = vpack.c.b16 %v1702, %v1694
    %v2103 = vpack.c.b16 %v1703, %v1695
    %v2104 = vpack.c.b16 %v1704, %v1696
    %v2105 = vpack.c.b16 %v1705, %v1697
    %v2106 = vpack.c.b16 %v1706, %v1698
    %v2107 = vpack.c.b16 %v1707, %v1699
    %v2108 = vpack.c.b16 %v1708, %v1700
    %v2109 = vpack.c.b16 %v1717, %v1709
    %v2110 = vpack.c.b16 %v1718, %v1710
    %v2111 = vpack.c.b16 %v1719, %v1711
    %v2112 = vpack.c.b16 %v1720, %v1712
    %v2113 = vpack.c.b16 %v1721, %v1713
    %v2114 = vpack.c.b16 %v1722, %v1714
    %v2115 = vpack.c.b16 %v1723, %v1715
    %v2116 = vpack.c.b16 %v1724, %v1716
    %v2117 = vpack.c.b16 %v1733, %v1725
    %v2118 = vpack.c.b16 %v1734, %v1726
    %v2119 = vpack.c.b16 %v1735, %v1727
    %v2120 = vpack.c.b16 %v1736, %v1728
    %v2121 = vpack.c.b16 %v1737, %v1729
    %v2122 = vpack.c.b16 %v1738, %v1730
    %v2123 = vpack.c.b16 %v1739, %v1731
    %v2124 = vpack.c.b16 %v1740, %v1732
    %v2125 = vpack.c.b16 %v1749, %v1741
    %v2126 = vpack.c.b16 %v1750, %v1742
    %v2127 = vpack.c.b16 %v1751, %v1743
    %v2128 = vpack.c.b16 %v1752, %v1744
    %v2129 = vpack.c.b16 %v1753, %v1745
    %v2130 = vpack.c.b16 %v1754, %v1746
    %v2131 = vpack.c.b16 %v1755, %v1747
    %v2132 = vpack.c.b16 %v1756, %v1748
    %v2133 = vpack.c.b16 %v1765, %v1757
    %v2134 = vpack.c.b16 %v1766, %v1758
    %v2135 = vpack.c.b16 %v1767, %v1759
    %v2136 = vpack.c.b16 %v1768, %v1760
    %v2137 = vpack.c.b16 %v1769, %v1761
    %v2138 = vpack.c.b16 %v1770, %v1762
    %v2139 = vpack.c.b16 %v1771, %v1763
    %v2140 = vpack.c.b16 %v1772, %v1764
    %v2141 = vpack.c.b16 %v1781, %v1773
    %v2142 = vpack.c.b16 %v1782, %v1774
    %v2143 = vpack.c.b16 %v1783, %v1775
    %v2144 = vpack.c.b16 %v1784, %v1776
    %v2145 = vpack.c.b16 %v1785, %v1777
    %v2146 = vpack.c.b16 %v1786, %v1778
    %v2147 = vpack.c.b16 %v1787, %v1779
    %v2148 = vpack.c.b16 %v1788, %v1780
    %v2149 = vpack.c.b16 %v1797, %v1789
    %v2150 = vpack.c.b16 %v1798, %v1790
    %v2151 = vpack.c.b16 %v1799, %v1791
    %v2152 = vpack.c.b16 %v1800, %v1792
    %v2153 = vpack.c.b16 %v1801, %v1793
    %v2154 = vpack.c.b16 %v1802, %v1794
    %v2155 = vpack.c.b16 %v1803, %v1795
    %v2156 = vpack.c.b16 %v1804, %v1796
    %v2157 = vpack.c.b16 %v1813, %v1805
    %v2158 = vpack.c.b16 %v1814, %v1806
    %v2159 = vpack.c.b16 %v1815, %v1807
    %v2160 = vpack.c.b16 %v1816, %v1808
    %v2161 = vpack.c.b16 %v1817, %v1809
    %v2162 = vpack.c.b16 %v1818, %v1810
    %v2163 = vpack.c.b16 %v1819, %v1811
    %v2164 = vpack.c.b16 %v1820, %v1812
    %v2165 = vpack.c.b16 %v1829, %v1821
    %v2166 = vpack.c.b16 %v1830, %v1822
    %v2167 = vpack.c.b16 %v1831, %v1823
    %v2168 = vpack.c.b16 %v1832, %v1824
    %v2169 = vpack.c.b16 %v1833, %v1825
    %v2170 = vpack.c.b16 %v1834, %v1826
    %v2171 = vpack.c.b16 %v1835, %v1827
    %v2172 = vpack.c.b16 %v1836, %v1828
    %v2173 = vpack.c.b16 %v1845, %v1837
    %v2174 = vpack.c.b16 %v1846, %v1838
    %v2175 = vpack.c.b16 %v1847, %v1839
    %v2176 = vpack.c.b16 %v1848, %v1840
    %v2177 = vpack.c.b16 %v1849, %v1841
    %v2178 = vpack.c.b16 %v1850, %v1842
    %v2179 = vpack.c.b16 %v1851, %v1843
    %v2180 = vpack.c.b16 %v1852, %v1844
    %v2181 = vpack.c.b16 %v1861, %v1853
    %v2182 = vpack.c.b16 %v1862, %v1854
    %v2183 = vpack.c.b16 %v1863, %v1855
    %v2184 = vpack.c.b16 %v1864, %v1856
    %v2185 = vpack.c.b16 %v1865, %v1857
    %v2186 = vpack.c.b16 %v1866, %v1858
    %v2187 = vpack.c.b16 %v1867, %v1859
    %v2188 = vpack.c.b16 %v1868, %v1860
    %v2189 = vpack.c.b16 %v1877, %v1869
    %v2190 = vpack.c.b16 %v1878, %v1870
    %v2191 = vpack.c.b16 %v1879, %v1871
    %v2192 = vpack.c.b16 %v1880, %v1872
    %v2193 = vpack.c.b16 %v1881, %v1873
    %v2194 = vpack.c.b16 %v1882, %v1874
    %v2195 = vpack.c.b16 %v1883, %v1875
    %v2196 = vpack.c.b16 %v1884, %v1876
    %v2197 = vpack.c.b16 %v1893, %v1885
    %v2198 = vpack.c.b16 %v1894, %v1886
    %v2199 = vpack.c.b16 %v1895, %v1887
    %v2200 = vpack.c.b16 %v1896, %v1888
    %v2201 = vpack.c.b16 %v1897, %v1889
    %v2202 = vpack.c.b16 %v1898, %v1890
    %v2203 = vpack.c.b16 %v1899, %v1891
    %v2204 = vpack.c.b16 %v1900, %v1892
    %v2205 = vpack.c.b16 %v1909, %v1901
    %v2206 = vpack.c.b16 %v1910, %v1902
    %v2207 = vpack.c.b16 %v1911, %v1903
    %v2208 = vpack.c.b16 %v1912, %v1904
    %v2209 = vpack.c.b16 %v1913, %v1905
    %v2210 = vpack.c.b16 %v1914, %v1906
    %v2211 = vpack.c.b16 %v1915, %v1907
    %v2212 = vpack.c.b16 %v1916, %v1908
    %v2213 = vpack.c.b16 %v1925, %v1917
    %v2214 = vpack.c.b16 %v1926, %v1918
    %v2215 = vpack.c.b16 %v1927, %v1919
    %v2216 = vpack.c.b16 %v1928, %v1920
    %v2217 = vpack.c.b16 %v1929, %v1921
    %v2218 = vpack.c.b16 %v1930, %v1922
    %v2219 = vpack.c.b16 %v1931, %v1923
    %v2220 = vpack.c.b16 %v1932, %v1924
    %v2221 = vpack.c.b16 %v1941, %v1933
    %v2222 = vpack.c.b16 %v1942, %v1934
    %v2223 = vpack.c.b16 %v1943, %v1935
    %v2224 = vpack.c.b16 %v1944, %v1936
    %v2225 = vpack.c.b16 %v1945, %v1937
    %v2226 = vpack.c.b16 %v1946, %v1938
    %v2227 = vpack.c.b16 %v1947, %v1939
    %v2228 = vpack.c.b16 %v1948, %v1940
    %v2229 = vpack.c.b16 %v1957, %v1949
    %v2230 = vpack.c.b16 %v1958, %v1950
    %v2231 = vpack.c.b16 %v1959, %v1951
    %v2232 = vpack.c.b16 %v1960, %v1952
    %v2233 = vpack.c.b16 %v1961, %v1953
    %v2234 = vpack.c.b16 %v1962, %v1954
    %v2235 = vpack.c.b16 %v1963, %v1955
    %v2236 = vpack.c.b16 %v1964, %v1956
    %v2237 = vpack.c.b16 %v1973, %v1965
    %v2238 = vpack.c.b16 %v1974, %v1966
    %v2239 = vpack.c.b16 %v1975, %v1967
    %v2240 = vpack.c.b16 %v1976, %v1968
    %v2241 = vpack.c.b16 %v1977, %v1969
    %v2242 = vpack.c.b16 %v1978, %v1970
    %v2243 = vpack.c.b16 %v1979, %v1971
    %v2244 = vpack.c.b16 %v1980, %v1972
    %v2245 = vpack.c.b16 %v1989, %v1981
    %v2246 = vpack.c.b16 %v1990, %v1982
    %v2247 = vpack.c.b16 %v1991, %v1983
    %v2248 = vpack.c.b16 %v1992, %v1984
    %v2249 = vpack.c.b16 %v1993, %v1985
    %v2250 = vpack.c.b16 %v1994, %v1986
    %v2251 = vpack.c.b16 %v1995, %v1987
    %v2252 = vpack.c.b16 %v1996, %v1988
    %2509 = vmatprep.subr.bf16.mxu0 %v2054
    %2510 = vmatpush1.bf16.msra.mxu0 %v2053
    %2511 = vmatprep.subr.bf16.mxu0 %v2046
    %2512 = vmatpush1.bf16.msra.mxu0 %v2045
    %2513 = vmatprep.subr.bf16.mxu0 %v2038
    %2514 = vmatpush1.bf16.msra.mxu0 %v2037
    %2515 = vmatprep.subr.bf16.mxu0 %v2030
    %2516 = vmatpush1.bf16.msra.mxu0 %v2029
    %2517 = vmatprep.subr.bf16.mxu0 %v2022
    %2518 = vmatpush1.bf16.msra.mxu0 %v2021
    %2519 = vmatprep.subr.bf16.mxu0 %v2014
    %2520 = vmatpush1.bf16.msra.mxu0 %v2013
    %2521 = vmatprep.subr.bf16.mxu0 %v2006
    %2522 = vmatpush1.bf16.msra.mxu0 %v2005
    %2523 = vmatprep.subr.bf16.mxu0 %v1998
    %2524 = vmatpush1.bf16.msra.mxu0 %v1997
    %2525 = vmatprep.subr.bf16.mxu0 %v2118
    %2526 = vmatpush2.bf16.msra.mxu0 %v2117
    %2527 = vmatprep.subr.bf16.mxu0 %v2110
    %2528 = vmatpush2.bf16.msra.mxu0 %v2109
    %2529 = vmatprep.subr.bf16.mxu0 %v2102
    %2530 = vmatpush2.bf16.msra.mxu0 %v2101
    %2531 = vmatprep.subr.bf16.mxu0 %v2094
    %2532 = vmatpush2.bf16.msra.mxu0 %v2093
    %2533 = vmatprep.subr.bf16.mxu0 %v2086
    %2534 = vmatpush2.bf16.msra.mxu0 %v2085
    %2535 = vmatprep.subr.bf16.mxu0 %v2078
    %2536 = vmatpush2.bf16.msra.mxu0 %v2077
    %2537 = vmatprep.subr.bf16.mxu0 %v2070
    %2538 = vmatpush2.bf16.msra.mxu0 %v2069
    %2539 = vmatprep.subr.bf16.mxu0 %v2062
    %2540 = vmatpush2.bf16.msra.mxu0 %v2061
    %2541 = vmatprep.mubr.bf16.mxu0 %v928
    %2542 = vmatmul.mubr.bf16.gmra.mxu0 %v927
    %v2543 = vpop.f32.mrf.mxu0
    %v2544 = vadd.f32 %v1192, %v2543
    %v2545 = vpop.f32.mrf.mxu0
    %v2546 = vadd.f32 %v1196, %v2545
    %v2547 = vpop.f32.mrf.mxu0
    %v2548 = vadd.f32 %v1192, %v2547
    %v2549 = vpop.f32.mrf.mxu0
    %v2550 = vadd.f32 %v1196, %v2549
    %2551 = vdwg.mxu0
    %2552 = vmatprep.subr.bf16.mxu0 %v2182
    %2553 = vmatpush1.bf16.msra.mxu0 %v2181
    %2554 = vmatprep.subr.bf16.mxu0 %v2174
    %2555 = vmatpush1.bf16.msra.mxu0 %v2173
    %2556 = vmatprep.subr.bf16.mxu0 %v2166
    %2557 = vmatpush1.bf16.msra.mxu0 %v2165
    %2558 = vmatprep.subr.bf16.mxu0 %v2158
    %2559 = vmatpush1.bf16.msra.mxu0 %v2157
    %2560 = vmatprep.subr.bf16.mxu0 %v2150
    %2561 = vmatpush1.bf16.msra.mxu0 %v2149
    %2562 = vmatprep.subr.bf16.mxu0 %v2142
    %2563 = vmatpush1.bf16.msra.mxu0 %v2141
    %2564 = vmatprep.subr.bf16.mxu0 %v2134
    %2565 = vmatpush1.bf16.msra.mxu0 %v2133
    %2566 = vmatprep.subr.bf16.mxu0 %v2126
    %2567 = vmatpush1.bf16.msra.mxu0 %v2125
    %2568 = vmatprep.subr.bf16.mxu0 %v2246
    %2569 = vmatpush2.bf16.msra.mxu0 %v2245
    %2570 = vmatprep.subr.bf16.mxu0 %v2238
    %2571 = vmatpush2.bf16.msra.mxu0 %v2237
    %2572 = vmatprep.subr.bf16.mxu0 %v2230
    %2573 = vmatpush2.bf16.msra.mxu0 %v2229
    %2574 = vmatprep.subr.bf16.mxu0 %v2222
    %2575 = vmatpush2.bf16.msra.mxu0 %v2221
    %2576 = vmatprep.subr.bf16.mxu0 %v2214
    %2577 = vmatpush2.bf16.msra.mxu0 %v2213
    %2578 = vmatprep.subr.bf16.mxu0 %v2206
    %2579 = vmatpush2.bf16.msra.mxu0 %v2205
    %2580 = vmatprep.subr.bf16.mxu0 %v2198
    %2581 = vmatpush2.bf16.msra.mxu0 %v2197
    %2582 = vmatprep.subr.bf16.mxu0 %v2190
    %2583 = vmatpush2.bf16.msra.mxu0 %v2189
    %2584 = vmatprep.mubr.bf16.mxu0 %v930
    %2585 = vmatmul.mubr.bf16.gmra.mxu0 %v929
    %v2586 = vpop.f32.mrf.mxu0
    %v2587 = vadd.f32 %v2544, %v2586
    %v2588 = vpop.f32.mrf.mxu0
    %v2589 = vadd.f32 %v2546, %v2588
    %v2590 = vpop.f32.mrf.mxu0
    %v2591 = vadd.f32 %v2548, %v2590
    %v2592 = vpop.f32.mrf.mxu0
    %v2593 = vadd.f32 %v2550, %v2592
    %2594 = vdwg.mxu0
    %2595 = vmatprep.subr.bf16.mxu0 %v2056
    %2596 = vmatpush1.bf16.msra.mxu0 %v2055
    %2597 = vmatprep.subr.bf16.mxu0 %v2048
    %2598 = vmatpush1.bf16.msra.mxu0 %v2047
    %2599 = vmatprep.subr.bf16.mxu0 %v2040
    %2600 = vmatpush1.bf16.msra.mxu0 %v2039
    %2601 = vmatprep.subr.bf16.mxu0 %v2032
    %2602 = vmatpush1.bf16.msra.mxu0 %v2031
    %2603 = vmatprep.subr.bf16.mxu0 %v2024
    %2604 = vmatpush1.bf16.msra.mxu0 %v2023
    %2605 = vmatprep.subr.bf16.mxu0 %v2016
    %2606 = vmatpush1.bf16.msra.mxu0 %v2015
    %2607 = vmatprep.subr.bf16.mxu0 %v2008
    %2608 = vmatpush1.bf16.msra.mxu0 %v2007
    %2609 = vmatprep.subr.bf16.mxu0 %v2000
    %2610 = vmatpush1.bf16.msra.mxu0 %v1999
    %2611 = vmatprep.subr.bf16.mxu0 %v2120
    %2612 = vmatpush2.bf16.msra.mxu0 %v2119
    %2613 = vmatprep.subr.bf16.mxu0 %v2112
    %2614 = vmatpush2.bf16.msra.mxu0 %v2111
    %2615 = vmatprep.subr.bf16.mxu0 %v2104
    %2616 = vmatpush2.bf16.msra.mxu0 %v2103
    %2617 = vmatprep.subr.bf16.mxu0 %v2096
    %2618 = vmatpush2.bf16.msra.mxu0 %v2095
    %2619 = vmatprep.subr.bf16.mxu0 %v2088
    %2620 = vmatpush2.bf16.msra.mxu0 %v2087
    %2621 = vmatprep.subr.bf16.mxu0 %v2080
    %2622 = vmatpush2.bf16.msra.mxu0 %v2079
    %2623 = vmatprep.subr.bf16.mxu0 %v2072
    %2624 = vmatpush2.bf16.msra.mxu0 %v2071
    %2625 = vmatprep.subr.bf16.mxu0 %v2064
    %2626 = vmatpush2.bf16.msra.mxu0 %v2063
    %2627 = vmatprep.mubr.bf16.mxu0 %v928
    %2628 = vmatmul.mubr.bf16.gmra.mxu0 %v927
    %v2629 = vpop.f32.mrf.mxu0
    %v2630 = vadd.f32 %v1200, %v2629
    %v2631 = vpop.f32.mrf.mxu0
    %v2632 = vadd.f32 %v1204, %v2631
    %v2633 = vpop.f32.mrf.mxu0
    %v2634 = vadd.f32 %v1200, %v2633
    %v2635 = vpop.f32.mrf.mxu0
    %v2636 = vadd.f32 %v1204, %v2635
    %2637 = vdwg.mxu0
    %2638 = vmatprep.subr.bf16.mxu0 %v2184
    %2639 = vmatpush1.bf16.msra.mxu0 %v2183
    %2640 = vmatprep.subr.bf16.mxu0 %v2176
    %2641 = vmatpush1.bf16.msra.mxu0 %v2175
    %2642 = vmatprep.subr.bf16.mxu0 %v2168
    %2643 = vmatpush1.bf16.msra.mxu0 %v2167
    %2644 = vmatprep.subr.bf16.mxu0 %v2160
    %2645 = vmatpush1.bf16.msra.mxu0 %v2159
    %2646 = vmatprep.subr.bf16.mxu0 %v2152
    %2647 = vmatpush1.bf16.msra.mxu0 %v2151
    %2648 = vmatprep.subr.bf16.mxu0 %v2144
    %2649 = vmatpush1.bf16.msra.mxu0 %v2143
    %2650 = vmatprep.subr.bf16.mxu0 %v2136
    %2651 = vmatpush1.bf16.msra.mxu0 %v2135
    %2652 = vmatprep.subr.bf16.mxu0 %v2128
    %2653 = vmatpush1.bf16.msra.mxu0 %v2127
    %2654 = vmatprep.subr.bf16.mxu0 %v2248
    %2655 = vmatpush2.bf16.msra.mxu0 %v2247
    %2656 = vmatprep.subr.bf16.mxu0 %v2240
    %2657 = vmatpush2.bf16.msra.mxu0 %v2239
    %2658 = vmatprep.subr.bf16.mxu0 %v2232
    %2659 = vmatpush2.bf16.msra.mxu0 %v2231
    %2660 = vmatprep.subr.bf16.mxu0 %v2224
    %2661 = vmatpush2.bf16.msra.mxu0 %v2223
    %2662 = vmatprep.subr.bf16.mxu0 %v2216
    %2663 = vmatpush2.bf16.msra.mxu0 %v2215
    %2664 = vmatprep.subr.bf16.mxu0 %v2208
    %2665 = vmatpush2.bf16.msra.mxu0 %v2207
    %2666 = vmatprep.subr.bf16.mxu0 %v2200
    %2667 = vmatpush2.bf16.msra.mxu0 %v2199
    %2668 = vmatprep.subr.bf16.mxu0 %v2192
    %2669 = vmatpush2.bf16.msra.mxu0 %v2191
    %2670 = vmatprep.mubr.bf16.mxu0 %v930
    %2671 = vmatmul.mubr.bf16.gmra.mxu0 %v929
    %v2672 = vpop.f32.mrf.mxu0
    %v2673 = vadd.f32 %v2630, %v2672
    %v2674 = vpop.f32.mrf.mxu0
    %v2675 = vadd.f32 %v2632, %v2674
    %v2676 = vpop.f32.mrf.mxu0
    %v2677 = vadd.f32 %v2634, %v2676
    %v2678 = vpop.f32.mrf.mxu0
    %v2679 = vadd.f32 %v2636, %v2678
    %2680 = vdwg.mxu0
    %2681 = vmatprep.subr.bf16.mxu0 %v2058
    %2682 = vmatpush1.bf16.msra.mxu0 %v2057
    %2683 = vmatprep.subr.bf16.mxu0 %v2050
    %2684 = vmatpush1.bf16.msra.mxu0 %v2049
    %2685 = vmatprep.subr.bf16.mxu0 %v2042
    %2686 = vmatpush1.bf16.msra.mxu0 %v2041
    %2687 = vmatprep.subr.bf16.mxu0 %v2034
    %2688 = vmatpush1.bf16.msra.mxu0 %v2033
    %2689 = vmatprep.subr.bf16.mxu0 %v2026
    %2690 = vmatpush1.bf16.msra.mxu0 %v2025
    %2691 = vmatprep.subr.bf16.mxu0 %v2018
    %2692 = vmatpush1.bf16.msra.mxu0 %v2017
    %2693 = vmatprep.subr.bf16.mxu0 %v2010
    %2694 = vmatpush1.bf16.msra.mxu0 %v2009
    %2695 = vmatprep.subr.bf16.mxu0 %v2002
    %2696 = vmatpush1.bf16.msra.mxu0 %v2001
    %2697 = vmatprep.subr.bf16.mxu0 %v2122
    %2698 = vmatpush2.bf16.msra.mxu0 %v2121
    %2699 = vmatprep.subr.bf16.mxu0 %v2114
    %2700 = vmatpush2.bf16.msra.mxu0 %v2113
    %2701 = vmatprep.subr.bf16.mxu0 %v2106
    %2702 = vmatpush2.bf16.msra.mxu0 %v2105
    %2703 = vmatprep.subr.bf16.mxu0 %v2098
    %2704 = vmatpush2.bf16.msra.mxu0 %v2097
    %2705 = vmatprep.subr.bf16.mxu0 %v2090
    %2706 = vmatpush2.bf16.msra.mxu0 %v2089
    %2707 = vmatprep.subr.bf16.mxu0 %v2082
    %2708 = vmatpush2.bf16.msra.mxu0 %v2081
    %2709 = vmatprep.subr.bf16.mxu0 %v2074
    %2710 = vmatpush2.bf16.msra.mxu0 %v2073
    %2711 = vmatprep.subr.bf16.mxu0 %v2066
    %2712 = vmatpush2.bf16.msra.mxu0 %v2065
    %2713 = vmatprep.mubr.bf16.mxu0 %v928
    %2714 = vmatmul.mubr.bf16.gmra.mxu0 %v927
    %v2715 = vpop.f32.mrf.mxu0
    %v2716 = vadd.f32 %v1208, %v2715
    %v2717 = vpop.f32.mrf.mxu0
    %v2718 = vadd.f32 %v1212, %v2717
    %v2719 = vpop.f32.mrf.mxu0
    %v2720 = vadd.f32 %v1208, %v2719
    %v2721 = vpop.f32.mrf.mxu0
    %v2722 = vadd.f32 %v1212, %v2721
    %2723 = vdwg.mxu0
    %2724 = vmatprep.subr.bf16.mxu0 %v2186
    %2725 = vmatpush1.bf16.msra.mxu0 %v2185
    %2726 = vmatprep.subr.bf16.mxu0 %v2178
    %2727 = vmatpush1.bf16.msra.mxu0 %v2177
    %2728 = vmatprep.subr.bf16.mxu0 %v2170
    %2729 = vmatpush1.bf16.msra.mxu0 %v2169
    %2730 = vmatprep.subr.bf16.mxu0 %v2162
    %2731 = vmatpush1.bf16.msra.mxu0 %v2161
    %2732 = vmatprep.subr.bf16.mxu0 %v2154
    %2733 = vmatpush1.bf16.msra.mxu0 %v2153
    %2734 = vmatprep.subr.bf16.mxu0 %v2146
    %2735 = vmatpush1.bf16.msra.mxu0 %v2145
    %2736 = vmatprep.subr.bf16.mxu0 %v2138
    %2737 = vmatpush1.bf16.msra.mxu0 %v2137
    %2738 = vmatprep.subr.bf16.mxu0 %v2130
    %2739 = vmatpush1.bf16.msra.mxu0 %v2129
    %2740 = vmatprep.subr.bf16.mxu0 %v2250
    %2741 = vmatpush2.bf16.msra.mxu0 %v2249
    %2742 = vmatprep.subr.bf16.mxu0 %v2242
    %2743 = vmatpush2.bf16.msra.mxu0 %v2241
    %2744 = vmatprep.subr.bf16.mxu0 %v2234
    %2745 = vmatpush2.bf16.msra.mxu0 %v2233
    %2746 = vmatprep.subr.bf16.mxu0 %v2226
    %2747 = vmatpush2.bf16.msra.mxu0 %v2225
    %2748 = vmatprep.subr.bf16.mxu0 %v2218
    %2749 = vmatpush2.bf16.msra.mxu0 %v2217
    %2750 = vmatprep.subr.bf16.mxu0 %v2210
    %2751 = vmatpush2.bf16.msra.mxu0 %v2209
    %2752 = vmatprep.subr.bf16.mxu0 %v2202
    %2753 = vmatpush2.bf16.msra.mxu0 %v2201
    %2754 = vmatprep.subr.bf16.mxu0 %v2194
    %2755 = vmatpush2.bf16.msra.mxu0 %v2193
    %2756 = vmatprep.mubr.bf16.mxu0 %v930
    %2757 = vmatmul.mubr.bf16.gmra.mxu0 %v929
    %v2758 = vpop.f32.mrf.mxu0
    %v2759 = vadd.f32 %v2716, %v2758
    %v2760 = vpop.f32.mrf.mxu0
    %v2761 = vadd.f32 %v2718, %v2760
    %v2762 = vpop.f32.mrf.mxu0
    %v2763 = vadd.f32 %v2720, %v2762
    %v2764 = vpop.f32.mrf.mxu0
    %v2765 = vadd.f32 %v2722, %v2764
    %2766 = vdwg.mxu0
    %2767 = vmatprep.subr.bf16.mxu0 %v2060
    %2768 = vmatpush1.bf16.msra.mxu0 %v2059
    %2769 = vmatprep.subr.bf16.mxu0 %v2052
    %2770 = vmatpush1.bf16.msra.mxu0 %v2051
    %2771 = vmatprep.subr.bf16.mxu0 %v2044
    %2772 = vmatpush1.bf16.msra.mxu0 %v2043
    %2773 = vmatprep.subr.bf16.mxu0 %v2036
    %2774 = vmatpush1.bf16.msra.mxu0 %v2035
    %2775 = vmatprep.subr.bf16.mxu0 %v2028
    %2776 = vmatpush1.bf16.msra.mxu0 %v2027
    %2777 = vmatprep.subr.bf16.mxu0 %v2020
    %2778 = vmatpush1.bf16.msra.mxu0 %v2019
    %2779 = vmatprep.subr.bf16.mxu0 %v2012
    %2780 = vmatpush1.bf16.msra.mxu0 %v2011
    %2781 = vmatprep.subr.bf16.mxu0 %v2004
    %2782 = vmatpush1.bf16.msra.mxu0 %v2003
    %2783 = vmatprep.subr.bf16.mxu0 %v2124
    %2784 = vmatpush2.bf16.msra.mxu0 %v2123
    %2785 = vmatprep.subr.bf16.mxu0 %v2116
    %2786 = vmatpush2.bf16.msra.mxu0 %v2115
    %2787 = vmatprep.subr.bf16.mxu0 %v2108
    %2788 = vmatpush2.bf16.msra.mxu0 %v2107
    %2789 = vmatprep.subr.bf16.mxu0 %v2100
    %2790 = vmatpush2.bf16.msra.mxu0 %v2099
    %2791 = vmatprep.subr.bf16.mxu0 %v2092
    %2792 = vmatpush2.bf16.msra.mxu0 %v2091
    %2793 = vmatprep.subr.bf16.mxu0 %v2084
    %2794 = vmatpush2.bf16.msra.mxu0 %v2083
    %2795 = vmatprep.subr.bf16.mxu0 %v2076
    %2796 = vmatpush2.bf16.msra.mxu0 %v2075
    %2797 = vmatprep.subr.bf16.mxu0 %v2068
    %2798 = vmatpush2.bf16.msra.mxu0 %v2067
    %2799 = vmatprep.mubr.bf16.mxu0 %v928
    %2800 = vmatmul.mubr.bf16.gmra.mxu0 %v927
    %v2801 = vpop.f32.mrf.mxu0
    %v2802 = vadd.f32 %v1216, %v2801
    %v2803 = vpop.f32.mrf.mxu0
    %v2804 = vadd.f32 %v1220, %v2803
    %v2805 = vpop.f32.mrf.mxu0
    %v2806 = vadd.f32 %v1216, %v2805
    %v2807 = vpop.f32.mrf.mxu0
    %v2808 = vadd.f32 %v1220, %v2807
    %2809 = vdwg.mxu0
    %2810 = vmatprep.subr.bf16.mxu0 %v2188
    %2811 = vmatpush1.bf16.msra.mxu0 %v2187
    %2812 = vmatprep.subr.bf16.mxu0 %v2180
    %2813 = vmatpush1.bf16.msra.mxu0 %v2179
    %2814 = vmatprep.subr.bf16.mxu0 %v2172
    %2815 = vmatpush1.bf16.msra.mxu0 %v2171
    %2816 = vmatprep.subr.bf16.mxu0 %v2164
    %2817 = vmatpush1.bf16.msra.mxu0 %v2163
    %2818 = vmatprep.subr.bf16.mxu0 %v2156
    %2819 = vmatpush1.bf16.msra.mxu0 %v2155
    %2820 = vmatprep.subr.bf16.mxu0 %v2148
    %2821 = vmatpush1.bf16.msra.mxu0 %v2147
    %2822 = vmatprep.subr.bf16.mxu0 %v2140
    %2823 = vmatpush1.bf16.msra.mxu0 %v2139
    %2824 = vmatprep.subr.bf16.mxu0 %v2132
    %2825 = vmatpush1.bf16.msra.mxu0 %v2131
    %2826 = vmatprep.subr.bf16.mxu0 %v2252
    %2827 = vmatpush2.bf16.msra.mxu0 %v2251
    %2828 = vmatprep.subr.bf16.mxu0 %v2244
    %2829 = vmatpush2.bf16.msra.mxu0 %v2243
    %2830 = vmatprep.subr.bf16.mxu0 %v2236
    %2831 = vmatpush2.bf16.msra.mxu0 %v2235
    %2832 = vmatprep.subr.bf16.mxu0 %v2228
    %2833 = vmatpush2.bf16.msra.mxu0 %v2227
    %2834 = vmatprep.subr.bf16.mxu0 %v2220
    %2835 = vmatpush2.bf16.msra.mxu0 %v2219
    %2836 = vmatprep.subr.bf16.mxu0 %v2212
    %2837 = vmatpush2.bf16.msra.mxu0 %v2211
    %2838 = vmatprep.subr.bf16.mxu0 %v2204
    %2839 = vmatpush2.bf16.msra.mxu0 %v2203
    %2840 = vmatprep.subr.bf16.mxu0 %v2196
    %2841 = vmatpush2.bf16.msra.mxu0 %v2195
    %2842 = vmatprep.mubr.bf16.mxu0 %v930
    %2843 = vmatmul.mubr.bf16.gmra.mxu0 %v929
    %v2844 = vpop.f32.mrf.mxu0
    %v2845 = vadd.f32 %v2802, %v2844
    %v2846 = vpop.f32.mrf.mxu0
    %v2847 = vadd.f32 %v2804, %v2846
    %v2848 = vpop.f32.mrf.mxu0
    %v2849 = vadd.f32 %v2806, %v2848
    %v2850 = vpop.f32.mrf.mxu0
    %v2851 = vadd.f32 %v2808, %v2850
    %2852 = vdwg.mxu0
    %v2853 = vmul.f32 %v2587, 0.2
    %v2854 = vmul.f32 %v2589, 0.2
    %v2855 = vmul.f32 %v2673, 0.2
    %v2856 = vmul.f32 %v2675, 0.2
    %v2857 = vmul.f32 %v2759, 0.2
    %v2858 = vmul.f32 %v2761, 0.2
    %v2859 = vmul.f32 %v2845, 0.2
    %v2860 = vmul.f32 %v2847, 0.2
    %v2861 = vmul.f32 %v2591, 0.2
    %v2862 = vmul.f32 %v2593, 0.2
    %v2863 = vmul.f32 %v2677, 0.2
    %v2864 = vmul.f32 %v2679, 0.2
    %v2865 = vmul.f32 %v2763, 0.2
    %v2866 = vmul.f32 %v2765, 0.2
    %v2867 = vmul.f32 %v2849, 0.2
    %v2868 = vmul.f32 %v2851, 0.2
    %v2869 = vmax.f32 %v2587, %v2853
    %v2870 = vmax.f32 %v2589, %v2854
    %v2871 = vmax.f32 %v2673, %v2855
    %v2872 = vmax.f32 %v2675, %v2856
    %v2873 = vmax.f32 %v2759, %v2857
    %v2874 = vmax.f32 %v2761, %v2858
    %v2875 = vmax.f32 %v2845, %v2859
    %v2876 = vmax.f32 %v2847, %v2860
    %v2877 = vmax.f32 %v2591, %v2861
    %v2878 = vmax.f32 %v2593, %v2862
    %v2879 = vmax.f32 %v2677, %v2863
    %v2880 = vmax.f32 %v2679, %v2864
    %v2881 = vmax.f32 %v2763, %v2865
    %v2882 = vmax.f32 %v2765, %v2866
    %v2883 = vmax.f32 %v2849, %v2867
    %v2884 = vmax.f32 %v2851, %v2868
    %v2885 = vpack.c.bf16 %v2877, %v2869
    %v2886 = vpack.c.bf16 %v2878, %v2870
    %v2887 = vpack.c.bf16 %v2879, %v2871
    %v2888 = vpack.c.bf16 %v2880, %v2872
    %v2889 = vpack.c.bf16 %v2881, %v2873
    %v2890 = vpack.c.bf16 %v2882, %v2874
    %v2891 = vpack.c.bf16 %v2883, %v2875
    %v2892 = vpack.c.bf16 %v2884, %v2876
    %v2893 = vld [vmem:[#allocation13] sm:$0xf]
    %v2894 = vld [vmem:[#allocation13 + $0x4] sm:$0xf]
    %v2895 = vld [vmem:[#allocation13 + $0x8] sm:$0xf]
    %v2896 = vld [vmem:[#allocation13 + $0xc] sm:$0xf]
    %v2897 = vld [vmem:[#allocation13 + $0x10] sm:$0xf]
    %v2898 = vld [vmem:[#allocation13 + $0x14] sm:$0xf]
    %v2899 = vld [vmem:[#allocation13 + $0x18] sm:$0xf]
    %v2900 = vld [vmem:[#allocation13 + $0x1c] sm:$0xf]
    %v2901 = vld [vmem:[#allocation13 + $0x20] sm:$0xf]
    %v2902 = vld [vmem:[#allocation13 + $0x24] sm:$0xf]
    %v2903 = vld [vmem:[#allocation13 + $0x28] sm:$0xf]
    %v2904 = vld [vmem:[#allocation13 + $0x2c] sm:$0xf]
    %v2905 = vld [vmem:[#allocation13 + $0x30] sm:$0xf]
    %v2906 = vld [vmem:[#allocation13 + $0x34] sm:$0xf]
    %v2907 = vld [vmem:[#allocation13 + $0x38] sm:$0xf]
    %v2908 = vld [vmem:[#allocation13 + $0x3c] sm:$0xf]
    %v2909 = vld [vmem:[#allocation13 + $0x40] sm:$0xf]
    %v2910 = vld [vmem:[#allocation13 + $0x44] sm:$0xf]
    %v2911 = vld [vmem:[#allocation13 + $0x48] sm:$0xf]
    %v2912 = vld [vmem:[#allocation13 + $0x4c] sm:$0xf]
    %v2913 = vld [vmem:[#allocation13 + $0x50] sm:$0xf]
    %v2914 = vld [vmem:[#allocation13 + $0x54] sm:$0xf]
    %v2915 = vld [vmem:[#allocation13 + $0x58] sm:$0xf]
    %v2916 = vld [vmem:[#allocation13 + $0x5c] sm:$0xf]
    %v2917 = vld [vmem:[#allocation13 + $0x60] sm:$0xf]
    %v2918 = vld [vmem:[#allocation13 + $0x64] sm:$0xf]
    %v2919 = vld [vmem:[#allocation13 + $0x68] sm:$0xf]
    %v2920 = vld [vmem:[#allocation13 + $0x6c] sm:$0xf]
    %v2921 = vld [vmem:[#allocation13 + $0x70] sm:$0xf]
    %v2922 = vld [vmem:[#allocation13 + $0x74] sm:$0xf]
    %v2923 = vld [vmem:[#allocation13 + $0x78] sm:$0xf]
    %v2924 = vld [vmem:[#allocation13 + $0x7c] sm:$0xf]
    %v2925 = vld [vmem:[#allocation13 + $0x80] sm:$0xf]
    %v2926 = vld [vmem:[#allocation13 + $0x84] sm:$0xf]
    %v2927 = vld [vmem:[#allocation13 + $0x88] sm:$0xf]
    %v2928 = vld [vmem:[#allocation13 + $0x8c] sm:$0xf]
    %v2929 = vld [vmem:[#allocation13 + $0x90] sm:$0xf]
    %v2930 = vld [vmem:[#allocation13 + $0x94] sm:$0xf]
    %v2931 = vld [vmem:[#allocation13 + $0x98] sm:$0xf]
    %v2932 = vld [vmem:[#allocation13 + $0x9c] sm:$0xf]
    %v2933 = vld [vmem:[#allocation13 + $0xa0] sm:$0xf]
    %v2934 = vld [vmem:[#allocation13 + $0xa4] sm:$0xf]
    %v2935 = vld [vmem:[#allocation13 + $0xa8] sm:$0xf]
    %v2936 = vld [vmem:[#allocation13 + $0xac] sm:$0xf]
    %v2937 = vld [vmem:[#allocation13 + $0xb0] sm:$0xf]
    %v2938 = vld [vmem:[#allocation13 + $0xb4] sm:$0xf]
    %v2939 = vld [vmem:[#allocation13 + $0xb8] sm:$0xf]
    %v2940 = vld [vmem:[#allocation13 + $0xbc] sm:$0xf]
    %v2941 = vld [vmem:[#allocation13 + $0xc0] sm:$0xf]
    %v2942 = vld [vmem:[#allocation13 + $0xc4] sm:$0xf]
    %v2943 = vld [vmem:[#allocation13 + $0xc8] sm:$0xf]
    %v2944 = vld [vmem:[#allocation13 + $0xcc] sm:$0xf]
    %v2945 = vld [vmem:[#allocation13 + $0xd0] sm:$0xf]
    %v2946 = vld [vmem:[#allocation13 + $0xd4] sm:$0xf]
    %v2947 = vld [vmem:[#allocation13 + $0xd8] sm:$0xf]
    %v2948 = vld [vmem:[#allocation13 + $0xdc] sm:$0xf]
    %v2949 = vld [vmem:[#allocation13 + $0xe0] sm:$0xf]
    %v2950 = vld [vmem:[#allocation13 + $0xe4] sm:$0xf]
    %v2951 = vld [vmem:[#allocation13 + $0xe8] sm:$0xf]
    %v2952 = vld [vmem:[#allocation13 + $0xec] sm:$0xf]
    %v2953 = vld [vmem:[#allocation13 + $0xf0] sm:$0xf]
    %v2954 = vld [vmem:[#allocation13 + $0xf4] sm:$0xf]
    %v2955 = vld [vmem:[#allocation13 + $0xf8] sm:$0xf]
    %v2956 = vld [vmem:[#allocation13 + $0xfc] sm:$0xf]
    %v2957 = vld [vmem:[#allocation13 + $0x100] sm:$0xf]
    %v2958 = vld [vmem:[#allocation13 + $0x104] sm:$0xf]
    %v2959 = vld [vmem:[#allocation13 + $0x108] sm:$0xf]
    %v2960 = vld [vmem:[#allocation13 + $0x10c] sm:$0xf]
    %v2961 = vld [vmem:[#allocation13 + $0x110] sm:$0xf]
    %v2962 = vld [vmem:[#allocation13 + $0x114] sm:$0xf]
    %v2963 = vld [vmem:[#allocation13 + $0x118] sm:$0xf]
    %v2964 = vld [vmem:[#allocation13 + $0x11c] sm:$0xf]
    %v2965 = vld [vmem:[#allocation13 + $0x120] sm:$0xf]
    %v2966 = vld [vmem:[#allocation13 + $0x124] sm:$0xf]
    %v2967 = vld [vmem:[#allocation13 + $0x128] sm:$0xf]
    %v2968 = vld [vmem:[#allocation13 + $0x12c] sm:$0xf]
    %v2969 = vld [vmem:[#allocation13 + $0x130] sm:$0xf]
    %v2970 = vld [vmem:[#allocation13 + $0x134] sm:$0xf]
    %v2971 = vld [vmem:[#allocation13 + $0x138] sm:$0xf]
    %v2972 = vld [vmem:[#allocation13 + $0x13c] sm:$0xf]
    %v2973 = vld [vmem:[#allocation13 + $0x140] sm:$0xf]
    %v2974 = vld [vmem:[#allocation13 + $0x144] sm:$0xf]
    %v2975 = vld [vmem:[#allocation13 + $0x148] sm:$0xf]
    %v2976 = vld [vmem:[#allocation13 + $0x14c] sm:$0xf]
    %v2977 = vld [vmem:[#allocation13 + $0x150] sm:$0xf]
    %v2978 = vld [vmem:[#allocation13 + $0x154] sm:$0xf]
    %v2979 = vld [vmem:[#allocation13 + $0x158] sm:$0xf]
    %v2980 = vld [vmem:[#allocation13 + $0x15c] sm:$0xf]
    %v2981 = vld [vmem:[#allocation13 + $0x160] sm:$0xf]
    %v2982 = vld [vmem:[#allocation13 + $0x164] sm:$0xf]
    %v2983 = vld [vmem:[#allocation13 + $0x168] sm:$0xf]
    %v2984 = vld [vmem:[#allocation13 + $0x16c] sm:$0xf]
    %v2985 = vld [vmem:[#allocation13 + $0x170] sm:$0xf]
    %v2986 = vld [vmem:[#allocation13 + $0x174] sm:$0xf]
    %v2987 = vld [vmem:[#allocation13 + $0x178] sm:$0xf]
    %v2988 = vld [vmem:[#allocation13 + $0x17c] sm:$0xf]
    %v2989 = vld [vmem:[#allocation13 + $0x180] sm:$0xf]
    %v2990 = vld [vmem:[#allocation13 + $0x184] sm:$0xf]
    %v2991 = vld [vmem:[#allocation13 + $0x188] sm:$0xf]
    %v2992 = vld [vmem:[#allocation13 + $0x18c] sm:$0xf]
    %v2993 = vld [vmem:[#allocation13 + $0x190] sm:$0xf]
    %v2994 = vld [vmem:[#allocation13 + $0x194] sm:$0xf]
    %v2995 = vld [vmem:[#allocation13 + $0x198] sm:$0xf]
    %v2996 = vld [vmem:[#allocation13 + $0x19c] sm:$0xf]
    %v2997 = vld [vmem:[#allocation13 + $0x1a0] sm:$0xf]
    %v2998 = vld [vmem:[#allocation13 + $0x1a4] sm:$0xf]
    %v2999 = vld [vmem:[#allocation13 + $0x1a8] sm:$0xf]
    %v3000 = vld [vmem:[#allocation13 + $0x1ac] sm:$0xf]
    %v3001 = vld [vmem:[#allocation13 + $0x1b0] sm:$0xf]
    %v3002 = vld [vmem:[#allocation13 + $0x1b4] sm:$0xf]
    %v3003 = vld [vmem:[#allocation13 + $0x1b8] sm:$0xf]
    %v3004 = vld [vmem:[#allocation13 + $0x1bc] sm:$0xf]
    %v3005 = vld [vmem:[#allocation13 + $0x1c0] sm:$0xf]
    %v3006 = vld [vmem:[#allocation13 + $0x1c4] sm:$0xf]
    %v3007 = vld [vmem:[#allocation13 + $0x1c8] sm:$0xf]
    %v3008 = vld [vmem:[#allocation13 + $0x1cc] sm:$0xf]
    %v3009 = vld [vmem:[#allocation13 + $0x1d0] sm:$0xf]
    %v3010 = vld [vmem:[#allocation13 + $0x1d4] sm:$0xf]
    %v3011 = vld [vmem:[#allocation13 + $0x1d8] sm:$0xf]
    %v3012 = vld [vmem:[#allocation13 + $0x1dc] sm:$0xf]
    %v3013 = vld [vmem:[#allocation13 + $0x1e0] sm:$0xf]
    %v3014 = vld [vmem:[#allocation13 + $0x1e4] sm:$0xf]
    %v3015 = vld [vmem:[#allocation13 + $0x1e8] sm:$0xf]
    %v3016 = vld [vmem:[#allocation13 + $0x1ec] sm:$0xf]
    %v3017 = vld [vmem:[#allocation13 + $0x1f0] sm:$0xf]
    %v3018 = vld [vmem:[#allocation13 + $0x1f4] sm:$0xf]
    %v3019 = vld [vmem:[#allocation13 + $0x1f8] sm:$0xf]
    %v3020 = vld [vmem:[#allocation13 + $0x1fc] sm:$0xf]
    %v3021 = vld [vmem:[%s10] sm:$0x1]
    %v3023 = vlaneseq
    %v3024 = vshrl.u32 %v3023, 7
    %v3025 = vsub.s32 0, %v3024
    %v3026 = vrot.slane %v3021, %v3025
    %v3156 = vunpack.c.l.b16 %v2893
    %v3157 = vunpack.c.l.b16 %v2894
    %v3158 = vunpack.c.l.b16 %v2895
    %v3159 = vunpack.c.l.b16 %v2896
    %v3160 = vunpack.c.l.b16 %v2897
    %v3161 = vunpack.c.l.b16 %v2898
    %v3162 = vunpack.c.l.b16 %v2899
    %v3163 = vunpack.c.l.b16 %v2900
    %v3164 = vunpack.c.l.b16 %v2901
    %v3165 = vunpack.c.l.b16 %v2902
    %v3166 = vunpack.c.l.b16 %v2903
    %v3167 = vunpack.c.l.b16 %v2904
    %v3168 = vunpack.c.l.b16 %v2905
    %v3169 = vunpack.c.l.b16 %v2906
    %v3170 = vunpack.c.l.b16 %v2907
    %v3171 = vunpack.c.l.b16 %v2908
    %v3172 = vunpack.c.l.b16 %v2909
    %v3173 = vunpack.c.l.b16 %v2910
    %v3174 = vunpack.c.l.b16 %v2911
    %v3175 = vunpack.c.l.b16 %v2912
    %v3176 = vunpack.c.l.b16 %v2913
    %v3177 = vunpack.c.l.b16 %v2914
    %v3178 = vunpack.c.l.b16 %v2915
    %v3179 = vunpack.c.l.b16 %v2916
    %v3180 = vunpack.c.l.b16 %v2917
    %v3181 = vunpack.c.l.b16 %v2918
    %v3182 = vunpack.c.l.b16 %v2919
    %v3183 = vunpack.c.l.b16 %v2920
    %v3184 = vunpack.c.l.b16 %v2921
    %v3185 = vunpack.c.l.b16 %v2922
    %v3186 = vunpack.c.l.b16 %v2923
    %v3187 = vunpack.c.l.b16 %v2924
    %v3188 = vunpack.c.l.b16 %v2925
    %v3189 = vunpack.c.l.b16 %v2926
    %v3190 = vunpack.c.l.b16 %v2927
    %v3191 = vunpack.c.l.b16 %v2928
    %v3192 = vunpack.c.l.b16 %v2929
    %v3193 = vunpack.c.l.b16 %v2930
    %v3194 = vunpack.c.l.b16 %v2931
    %v3195 = vunpack.c.l.b16 %v2932
    %v3196 = vunpack.c.l.b16 %v2933
    %v3197 = vunpack.c.l.b16 %v2934
    %v3198 = vunpack.c.l.b16 %v2935
    %v3199 = vunpack.c.l.b16 %v2936
    %v3200 = vunpack.c.l.b16 %v2937
    %v3201 = vunpack.c.l.b16 %v2938
    %v3202 = vunpack.c.l.b16 %v2939
    %v3203 = vunpack.c.l.b16 %v2940
    %v3204 = vunpack.c.l.b16 %v2941
    %v3205 = vunpack.c.l.b16 %v2942
    %v3206 = vunpack.c.l.b16 %v2943
    %v3207 = vunpack.c.l.b16 %v2944
    %v3208 = vunpack.c.l.b16 %v2945
    %v3209 = vunpack.c.l.b16 %v2946
    %v3210 = vunpack.c.l.b16 %v2947
    %v3211 = vunpack.c.l.b16 %v2948
    %v3212 = vunpack.c.l.b16 %v2949
    %v3213 = vunpack.c.l.b16 %v2950
    %v3214 = vunpack.c.l.b16 %v2951
    %v3215 = vunpack.c.l.b16 %v2952
    %v3216 = vunpack.c.l.b16 %v2953
    %v3217 = vunpack.c.l.b16 %v2954
    %v3218 = vunpack.c.l.b16 %v2955
    %v3219 = vunpack.c.l.b16 %v2956
    %v3220 = vunpack.c.l.b16 %v2957
    %v3221 = vunpack.c.l.b16 %v2958
    %v3222 = vunpack.c.l.b16 %v2959
    %v3223 = vunpack.c.l.b16 %v2960
    %v3224 = vunpack.c.l.b16 %v2961
    %v3225 = vunpack.c.l.b16 %v2962
    %v3226 = vunpack.c.l.b16 %v2963
    %v3227 = vunpack.c.l.b16 %v2964
    %v3228 = vunpack.c.l.b16 %v2965
    %v3229 = vunpack.c.l.b16 %v2966
    %v3230 = vunpack.c.l.b16 %v2967
    %v3231 = vunpack.c.l.b16 %v2968
    %v3232 = vunpack.c.l.b16 %v2969
    %v3233 = vunpack.c.l.b16 %v2970
    %v3234 = vunpack.c.l.b16 %v2971
    %v3235 = vunpack.c.l.b16 %v2972
    %v3236 = vunpack.c.l.b16 %v2973
    %v3237 = vunpack.c.l.b16 %v2974
    %v3238 = vunpack.c.l.b16 %v2975
    %v3239 = vunpack.c.l.b16 %v2976
    %v3240 = vunpack.c.l.b16 %v2977
    %v3241 = vunpack.c.l.b16 %v2978
    %v3242 = vunpack.c.l.b16 %v2979
    %v3243 = vunpack.c.l.b16 %v2980
    %v3244 = vunpack.c.l.b16 %v2981
    %v3245 = vunpack.c.l.b16 %v2982
    %v3246 = vunpack.c.l.b16 %v2983
    %v3247 = vunpack.c.l.b16 %v2984
    %v3248 = vunpack.c.l.b16 %v2985
    %v3249 = vunpack.c.l.b16 %v2986
    %v3250 = vunpack.c.l.b16 %v2987
    %v3251 = vunpack.c.l.b16 %v2988
    %v3252 = vunpack.c.l.b16 %v2989
    %v3253 = vunpack.c.l.b16 %v2990
    %v3254 = vunpack.c.l.b16 %v2991
    %v3255 = vunpack.c.l.b16 %v2992
    %v3256 = vunpack.c.l.b16 %v2993
    %v3257 = vunpack.c.l.b16 %v2994
    %v3258 = vunpack.c.l.b16 %v2995
    %v3259 = vunpack.c.l.b16 %v2996
    %v3260 = vunpack.c.l.b16 %v2997
    %v3261 = vunpack.c.l.b16 %v2998
    %v3262 = vunpack.c.l.b16 %v2999
    %v3263 = vunpack.c.l.b16 %v3000
    %v3264 = vunpack.c.l.b16 %v3001
    %v3265 = vunpack.c.l.b16 %v3002
    %v3266 = vunpack.c.l.b16 %v3003
    %v3267 = vunpack.c.l.b16 %v3004
    %v3268 = vunpack.c.l.b16 %v3005
    %v3269 = vunpack.c.l.b16 %v3006
    %v3270 = vunpack.c.l.b16 %v3007
    %v3271 = vunpack.c.l.b16 %v3008
    %v3272 = vunpack.c.l.b16 %v3009
    %v3273 = vunpack.c.l.b16 %v3010
    %v3274 = vunpack.c.l.b16 %v3011
    %v3275 = vunpack.c.l.b16 %v3012
    %v3276 = vunpack.c.l.b16 %v3013
    %v3277 = vunpack.c.l.b16 %v3014
    %v3278 = vunpack.c.l.b16 %v3015
    %v3279 = vunpack.c.l.b16 %v3016
    %v3280 = vunpack.c.l.b16 %v3017
    %v3281 = vunpack.c.l.b16 %v3018
    %v3282 = vunpack.c.l.b16 %v3019
    %v3283 = vunpack.c.l.b16 %v3020
    %v3284 = vpack.c.b16 %v3157, %v3156
    %v3285 = vpack.c.b16 %v3159, %v3158
    %v3286 = vpack.c.b16 %v3161, %v3160
    %v3287 = vpack.c.b16 %v3163, %v3162
    %v3288 = vpack.c.b16 %v3165, %v3164
    %v3289 = vpack.c.b16 %v3167, %v3166
    %v3290 = vpack.c.b16 %v3169, %v3168
    %v3291 = vpack.c.b16 %v3171, %v3170
    %v3292 = vpack.c.b16 %v3173, %v3172
    %v3293 = vpack.c.b16 %v3175, %v3174
    %v3294 = vpack.c.b16 %v3177, %v3176
    %v3295 = vpack.c.b16 %v3179, %v3178
    %v3296 = vpack.c.b16 %v3181, %v3180
    %v3297 = vpack.c.b16 %v3183, %v3182
    %v3298 = vpack.c.b16 %v3185, %v3184
    %v3299 = vpack.c.b16 %v3187, %v3186
    %v3300 = vpack.c.b16 %v3189, %v3188
    %v3301 = vpack.c.b16 %v3191, %v3190
    %v3302 = vpack.c.b16 %v3193, %v3192
    %v3303 = vpack.c.b16 %v3195, %v3194
    %v3304 = vpack.c.b16 %v3197, %v3196
    %v3305 = vpack.c.b16 %v3199, %v3198
    %v3306 = vpack.c.b16 %v3201, %v3200
    %v3307 = vpack.c.b16 %v3203, %v3202
    %v3308 = vpack.c.b16 %v3205, %v3204
    %v3309 = vpack.c.b16 %v3207, %v3206
    %v3310 = vpack.c.b16 %v3209, %v3208
    %v3311 = vpack.c.b16 %v3211, %v3210
    %v3312 = vpack.c.b16 %v3213, %v3212
    %v3313 = vpack.c.b16 %v3215, %v3214
    %v3314 = vpack.c.b16 %v3217, %v3216
    %v3315 = vpack.c.b16 %v3219, %v3218
    %v3316 = vpack.c.b16 %v3221, %v3220
    %v3317 = vpack.c.b16 %v3223, %v3222
    %v3318 = vpack.c.b16 %v3225, %v3224
    %v3319 = vpack.c.b16 %v3227, %v3226
    %v3320 = vpack.c.b16 %v3229, %v3228
    %v3321 = vpack.c.b16 %v3231, %v3230
    %v3322 = vpack.c.b16 %v3233, %v3232
    %v3323 = vpack.c.b16 %v3235, %v3234
    %v3324 = vpack.c.b16 %v3237, %v3236
    %v3325 = vpack.c.b16 %v3239, %v3238
    %v3326 = vpack.c.b16 %v3241, %v3240
    %v3327 = vpack.c.b16 %v3243, %v3242
    %v3328 = vpack.c.b16 %v3245, %v3244
    %v3329 = vpack.c.b16 %v3247, %v3246
    %v3330 = vpack.c.b16 %v3249, %v3248
    %v3331 = vpack.c.b16 %v3251, %v3250
    %v3332 = vpack.c.b16 %v3253, %v3252
    %v3333 = vpack.c.b16 %v3255, %v3254
    %v3334 = vpack.c.b16 %v3257, %v3256
    %v3335 = vpack.c.b16 %v3259, %v3258
    %v3336 = vpack.c.b16 %v3261, %v3260
    %v3337 = vpack.c.b16 %v3263, %v3262
    %v3338 = vpack.c.b16 %v3265, %v3264
    %v3339 = vpack.c.b16 %v3267, %v3266
    %v3340 = vpack.c.b16 %v3269, %v3268
    %v3341 = vpack.c.b16 %v3271, %v3270
    %v3342 = vpack.c.b16 %v3273, %v3272
    %v3343 = vpack.c.b16 %v3275, %v3274
    %v3344 = vpack.c.b16 %v3277, %v3276
    %v3345 = vpack.c.b16 %v3279, %v3278
    %v3346 = vpack.c.b16 %v3281, %v3280
    %v3347 = vpack.c.b16 %v3283, %v3282
    %3412 = vmatprep.subr.bf16.mxu0 0
    %3413 = vmatpush1.bf16.msra.mxu0 %v3291
    %3414 = vmatprep.subr.bf16.mxu0 0
    %3415 = vmatpush1.bf16.msra.mxu0 %v3290
    %3416 = vmatprep.subr.bf16.mxu0 0
    %3417 = vmatpush1.bf16.msra.mxu0 %v3289
    %3418 = vmatprep.subr.bf16.mxu0 0
    %3419 = vmatpush1.bf16.msra.mxu0 %v3288
    %3420 = vmatprep.subr.bf16.mxu0 0
    %3421 = vmatpush1.bf16.msra.mxu0 %v3287
    %3422 = vmatprep.subr.bf16.mxu0 0
    %3423 = vmatpush1.bf16.msra.mxu0 %v3286
    %3424 = vmatprep.subr.bf16.mxu0 0
    %3425 = vmatpush1.bf16.msra.mxu0 %v3285
    %3426 = vmatprep.subr.bf16.mxu0 0
    %3427 = vmatpush1.bf16.msra.mxu0 %v3284
    %3428 = vmatprep.subr.bf16.mxu0 0
    %3429 = vmatpush2.bf16.msra.mxu0 %v3299
    %3430 = vmatprep.subr.bf16.mxu0 0
    %3431 = vmatpush2.bf16.msra.mxu0 %v3298
    %3432 = vmatprep.subr.bf16.mxu0 0
    %3433 = vmatpush2.bf16.msra.mxu0 %v3297
    %3434 = vmatprep.subr.bf16.mxu0 0
    %3435 = vmatpush2.bf16.msra.mxu0 %v3296
    %3436 = vmatprep.subr.bf16.mxu0 0
    %3437 = vmatpush2.bf16.msra.mxu0 %v3295
    %3438 = vmatprep.subr.bf16.mxu0 0
    %3439 = vmatpush2.bf16.msra.mxu0 %v3294
    %3440 = vmatprep.subr.bf16.mxu0 0
    %3441 = vmatpush2.bf16.msra.mxu0 %v3293
    %3442 = vmatprep.subr.bf16.mxu0 0
    %3443 = vmatpush2.bf16.msra.mxu0 %v3292
    %3444 = vmatprep.mubr.bf16.mxu0 %v2886
    %3445 = vmatmul.mubr.bf16.gmra.mxu0 %v2885
    %v3446 = vpop.f32.mrf.mxu0
    %v3447 = vadd.f32 %v3026, %v3446
    %v3448 = vpop.f32.mrf.mxu0
    %v3449 = vpop.f32.mrf.mxu0
    %v3450 = vadd.f32 %v3026, %v3449
    %v3451 = vpop.f32.mrf.mxu0
    %3452 = vdwg.mxu0
    %3453 = vmatprep.subr.bf16.mxu0 0
    %3454 = vmatpush1.bf16.msra.mxu0 %v3307
    %3455 = vmatprep.subr.bf16.mxu0 0
    %3456 = vmatpush1.bf16.msra.mxu0 %v3306
    %3457 = vmatprep.subr.bf16.mxu0 0
    %3458 = vmatpush1.bf16.msra.mxu0 %v3305
    %3459 = vmatprep.subr.bf16.mxu0 0
    %3460 = vmatpush1.bf16.msra.mxu0 %v3304
    %3461 = vmatprep.subr.bf16.mxu0 0
    %3462 = vmatpush1.bf16.msra.mxu0 %v3303
    %3463 = vmatprep.subr.bf16.mxu0 0
    %3464 = vmatpush1.bf16.msra.mxu0 %v3302
    %3465 = vmatprep.subr.bf16.mxu0 0
    %3466 = vmatpush1.bf16.msra.mxu0 %v3301
    %3467 = vmatprep.subr.bf16.mxu0 0
    %3468 = vmatpush1.bf16.msra.mxu0 %v3300
    %3469 = vmatprep.subr.bf16.mxu0 0
    %3470 = vmatpush2.bf16.msra.mxu0 %v3315
    %3471 = vmatprep.subr.bf16.mxu0 0
    %3472 = vmatpush2.bf16.msra.mxu0 %v3314
    %3473 = vmatprep.subr.bf16.mxu0 0
    %3474 = vmatpush2.bf16.msra.mxu0 %v3313
    %3475 = vmatprep.subr.bf16.mxu0 0
    %3476 = vmatpush2.bf16.msra.mxu0 %v3312
    %3477 = vmatprep.subr.bf16.mxu0 0
    %3478 = vmatpush2.bf16.msra.mxu0 %v3311
    %3479 = vmatprep.subr.bf16.mxu0 0
    %3480 = vmatpush2.bf16.msra.mxu0 %v3310
    %3481 = vmatprep.subr.bf16.mxu0 0
    %3482 = vmatpush2.bf16.msra.mxu0 %v3309
    %3483 = vmatprep.subr.bf16.mxu0 0
    %3484 = vmatpush2.bf16.msra.mxu0 %v3308
    %3485 = vmatprep.mubr.bf16.mxu0 %v2888
    %3486 = vmatmul.mubr.bf16.gmra.mxu0 %v2887
    %v3487 = vpop.f32.mrf.mxu0
    %v3488 = vadd.f32 %v3447, %v3487
    %v3489 = vpop.f32.mrf.mxu0
    %v3490 = vpop.f32.mrf.mxu0
    %v3491 = vadd.f32 %v3450, %v3490
    %v3492 = vpop.f32.mrf.mxu0
    %3493 = vdwg.mxu0
    %3494 = vmatprep.subr.bf16.mxu0 0
    %3495 = vmatpush1.bf16.msra.mxu0 %v3323
    %3496 = vmatprep.subr.bf16.mxu0 0
    %3497 = vmatpush1.bf16.msra.mxu0 %v3322
    %3498 = vmatprep.subr.bf16.mxu0 0
    %3499 = vmatpush1.bf16.msra.mxu0 %v3321
    %3500 = vmatprep.subr.bf16.mxu0 0
    %3501 = vmatpush1.bf16.msra.mxu0 %v3320
    %3502 = vmatprep.subr.bf16.mxu0 0
    %3503 = vmatpush1.bf16.msra.mxu0 %v3319
    %3504 = vmatprep.subr.bf16.mxu0 0
    %3505 = vmatpush1.bf16.msra.mxu0 %v3318
    %3506 = vmatprep.subr.bf16.mxu0 0
    %3507 = vmatpush1.bf16.msra.mxu0 %v3317
    %3508 = vmatprep.subr.bf16.mxu0 0
    %3509 = vmatpush1.bf16.msra.mxu0 %v3316
    %3510 = vmatprep.subr.bf16.mxu0 0
    %3511 = vmatpush2.bf16.msra.mxu0 %v3331
    %3512 = vmatprep.subr.bf16.mxu0 0
    %3513 = vmatpush2.bf16.msra.mxu0 %v3330
    %3514 = vmatprep.subr.bf16.mxu0 0
    %3515 = vmatpush2.bf16.msra.mxu0 %v3329
    %3516 = vmatprep.subr.bf16.mxu0 0
    %3517 = vmatpush2.bf16.msra.mxu0 %v3328
    %3518 = vmatprep.subr.bf16.mxu0 0
    %3519 = vmatpush2.bf16.msra.mxu0 %v3327
    %3520 = vmatprep.subr.bf16.mxu0 0
    %3521 = vmatpush2.bf16.msra.mxu0 %v3326
    %3522 = vmatprep.subr.bf16.mxu0 0
    %3523 = vmatpush2.bf16.msra.mxu0 %v3325
    %3524 = vmatprep.subr.bf16.mxu0 0
    %3525 = vmatpush2.bf16.msra.mxu0 %v3324
    %3526 = vmatprep.mubr.bf16.mxu0 %v2890
    %3527 = vmatmul.mubr.bf16.gmra.mxu0 %v2889
    %v3528 = vpop.f32.mrf.mxu0
    %v3529 = vadd.f32 %v3488, %v3528
    %v3530 = vpop.f32.mrf.mxu0
    %v3531 = vpop.f32.mrf.mxu0
    %v3532 = vadd.f32 %v3491, %v3531
    %v3533 = vpop.f32.mrf.mxu0
    %3534 = vdwg.mxu0
    %3535 = vmatprep.subr.bf16.mxu0 0
    %3536 = vmatpush1.bf16.msra.mxu0 %v3339
    %3537 = vmatprep.subr.bf16.mxu0 0
    %3538 = vmatpush1.bf16.msra.mxu0 %v3338
    %3539 = vmatprep.subr.bf16.mxu0 0
    %3540 = vmatpush1.bf16.msra.mxu0 %v3337
    %3541 = vmatprep.subr.bf16.mxu0 0
    %3542 = vmatpush1.bf16.msra.mxu0 %v3336
    %3543 = vmatprep.subr.bf16.mxu0 0
    %3544 = vmatpush1.bf16.msra.mxu0 %v3335
    %3545 = vmatprep.subr.bf16.mxu0 0
    %3546 = vmatpush1.bf16.msra.mxu0 %v3334
    %3547 = vmatprep.subr.bf16.mxu0 0
    %3548 = vmatpush1.bf16.msra.mxu0 %v3333
    %3549 = vmatprep.subr.bf16.mxu0 0
    %3550 = vmatpush1.bf16.msra.mxu0 %v3332
    %3551 = vmatprep.subr.bf16.mxu0 0
    %3552 = vmatpush2.bf16.msra.mxu0 %v3347
    %3553 = vmatprep.subr.bf16.mxu0 0
    %3554 = vmatpush2.bf16.msra.mxu0 %v3346
    %3555 = vmatprep.subr.bf16.mxu0 0
    %3556 = vmatpush2.bf16.msra.mxu0 %v3345
    %3557 = vmatprep.subr.bf16.mxu0 0
    %3558 = vmatpush2.bf16.msra.mxu0 %v3344
    %3559 = vmatprep.subr.bf16.mxu0 0
    %3560 = vmatpush2.bf16.msra.mxu0 %v3343
    %3561 = vmatprep.subr.bf16.mxu0 0
    %3562 = vmatpush2.bf16.msra.mxu0 %v3342
    %3563 = vmatprep.subr.bf16.mxu0 0
    %3564 = vmatpush2.bf16.msra.mxu0 %v3341
    %3565 = vmatprep.subr.bf16.mxu0 0
    %3566 = vmatpush2.bf16.msra.mxu0 %v3340
    %3567 = vmatprep.mubr.bf16.mxu0 %v2892
    %3568 = vmatmul.mubr.bf16.gmra.mxu0 %v2891
    %v3569 = vpop.f32.mrf.mxu0
    %v3570 = vadd.f32 %v3529, %v3569
    %v3571 = vpop.f32.mrf.mxu0
    %v3572 = vpop.f32.mrf.mxu0
    %v3573 = vadd.f32 %v3532, %v3572
    %v3574 = vpop.f32.mrf.mxu0
    %3575 = vdwg.mxu0
    %v3576 = vtanh.pop %v3570
    %v3577 = vtanh.pop %v3573
    %3578 = vst [vmem:[#allocation14] sm:$0xff] %v3576
    %3579 = vst [vmem:[#allocation14 + $0x8] sm:$0xff] %v3577
    // Predicated region
    $region74: #{tpu_custom_call.1} parent=1 // pred_check
      _
    $region75: #{tpu_custom_call.1} parent=1 // pred_check_branch
      %3581 = sbr.rel (0) target = $region77
    $region76: #{tpu_custom_call.1} parent=1 // pred_region
      %s3583 = ssub.s32 256, 256
      %3584 = vsyncadd [#allocation4], %s3583
      %s3585 = sshll.u32 [#allocation14], 4
      %s3586 = int_to_ptr.vmem [resolvable:$true] %s3585
      %3591 = dma.vmem_to_hbm [thread:$0]  %s3586, 256, %s11, [#allocation4], 128, 128, 8
    $region77: #{tpu_custom_call.1} parent=1 // pred_fallthru
      _
    // Predicated region
    $region78: #{tpu_custom_call.1} parent=1 // pred_check
      _
    $region79: #{tpu_custom_call.1} parent=1 // pred_check_branch
      %3593 = sbr.rel (0) target = $region81
    $region80: #{tpu_custom_call.1} parent=1 // pred_region
      %3594 = dma.done [#allocation4], 256
    $region81: #{tpu_custom_call.1} parent=1 // pred_fallthru
      _
    %3595 = vsyncpa [#allocation3], 1
    %3596 = vsyncpa [#allocation6], 1
    %3597 = vsyncpa [#allocation9], 1
    %3598 = vsyncpa [#allocation12], 1
    %3599 = vsyncpa [#allocation4], 1

// kernel: tpu_custom_call.1
$region0: #{tpu_custom_call.1}
  #allocation0 [shape = 'u32[]', space=smem, size = 0x4, offset = 0x4, fixed_abs, tag = 'smem constant byte address 0x4 - core index']
  #allocation1 [shape = 'u32[144,128]{1,0:T(1,128)}', space=vmem, size = 0x12000, scoped, tag = 'internal scratch']
  %s0 = inlined_call_operand.hbm [shape: bf16[16,128], index: 0, kind: input, shape index: {}]
  %s1 = inlined_call_operand.hbm [shape: bf16[128,128], index: 1, kind: input, shape index: {}]
  %s2 = inlined_call_operand.hbm [shape: f32[1,128], index: 2, kind: input, shape index: {}]
  %s3 = inlined_call_operand.hbm [shape: bf16[128,256], index: 3, kind: input, shape index: {}]
  %s4 = inlined_call_operand.vmem [shape: f32[1,256], index: 4, kind: input, shape index: {}]
  %s5 = inlined_call_operand.hbm [shape: bf16[256,512], index: 5, kind: input, shape index: {}]
  %s6 = inlined_call_operand.vmem [shape: f32[1,512], index: 6, kind: input, shape index: {}]
  %s7 = inlined_call_operand.hbm [shape: bf16[512,1024], index: 7, kind: input, shape index: {}]
  %s8 = inlined_call_operand.vmem [shape: f32[1,1024], index: 8, kind: input, shape index: {}]
  %s9 = inlined_call_operand.hbm [shape: bf16[1024,128], index: 9, kind: input, shape index: {}]
  %s10 = inlined_call_operand.vmem [shape: f32[1,128], index: 10, kind: input, shape index: {}]
  %s11 = inlined_call_operand.hbm [shape: f32[16,128], index: 11, kind: output, shape index: {}]
  %s12 = sld [smem:[#allocation0]]
  $region82: #{tpu_custom_call.1} parent=0
    _
  %s14 = ssub.s32 1, %s12
  %s15 = scalar_select 0, %s14, %s12
  $region1: #{tpu_custom_call.1} parent=0
    #allocation2 [shape = 'u8[4096]{0}', space=vmem, size = 0x1000, scoped, tag = 'input window, operand 0, single buffered']
    #allocation3 [shape = 's32[1]{0}', space=sflag, size = 0x4, scoped, tag = 'scoped memory for tpu_custom_call.1']
    #allocation4 [shape = 's32[1]{0}', space=sflag, size = 0x4, scoped, tag = 'scoped memory for tpu_custom_call.1']
    #allocation5 [shape = 'u8[32768]{0}', space=vmem, size = 0x8000, scoped, tag = 'input window, operand 1, single buffered']
    #allocation6 [shape = 's32[1]{0}', space=sflag, size = 0x4, scoped, tag = 'scoped memory for tpu_custom_call.1']
    #allocation7 [shape = 'u8[512]{0}', space=vmem, size = 0x400, scoped, tag = 'input window, operand 2, single buffered']
    #allocation8 [shape = 'u8[65536]{0}', space=vmem, size = 0x10000, scoped, tag = 'input window, operand 3, single buffered']
    #allocation9 [shape = 's32[1]{0}', space=sflag, size = 0x4, scoped, tag = 'scoped memory for tpu_custom_call.1']
    #allocation10 [shape = 'u8[262144]{0}', space=vmem, size = 0x40000, scoped, tag = 'input window, operand 5, single buffered']
    #allocation11 [shape = 'u8[1048576]{0}', space=vmem, size = 0x100000, scoped, tag = 'input window, operand 7, single buffered']
    #allocation12 [shape = 's32[1]{0}', space=sflag, size = 0x4, scoped, tag = 'scoped memory for tpu_custom_call.1']
    #allocation13 [shape = 'u8[262144]{0}', space=vmem, size = 0x40000, scoped, tag = 'input window, operand 9, single buffered']
    #allocation14 [shape = 'u8[8192]{0}', space=vmem, size = 0x2000, scoped, tag = 'output window, operand 0, single buffered']
    %16 = vsyncpa [#allocation3], 0
    %17 = vsyncpa [#allocation6], 0
    %18 = vsyncpa [#allocation9], 0
    %19 = vsyncpa [#allocation12], 0
    %20 = vsyncpa [#allocation4], 0
    // Predicated region
    $region2: #{tpu_custom_call.1} parent=1 // pred_check
      _
    $region3: #{tpu_custom_call.1} parent=1 // pred_check_branch
      %22 = sbr.rel (0) target = $region5
    $region4: #{tpu_custom_call.1} parent=1 // pred_region
      %s24 = ssub.s32 128, 128
      %25 = vsyncadd [#allocation3], %s24
      %s26 = sshll.u32 [#allocation2], 4
      %s27 = int_to_ptr.vmem [resolvable:$true] %s26
      %32 = dma.hbm_to_vmem [thread:$0]  %s0, 128, %s27, [#allocation3], 64, 64, 4
    $region5: #{tpu_custom_call.1} parent=1 // pred_fallthru
      _
    // Predicated region
    $region6: #{tpu_custom_call.1} parent=1 // pred_check
      _
    $region7: #{tpu_custom_call.1} parent=1 // pred_check_branch
      %34 = sbr.rel (0) target = $region9
    $region8: #{tpu_custom_call.1} parent=1 // pred_region
      %s36 = ssub.s32 1024, 1024
      %37 = vsyncadd [#allocation6], %s36
      %s38 = sshll.u32 [#allocation5], 4
      %s39 = int_to_ptr.vmem [resolvable:$true] %s38
      %44 = dma.hbm_to_vmem [thread:$0]  %s1, 1024, %s39, [#allocation6], 64, 64, 4
    $region9: #{tpu_custom_call.1} parent=1 // pred_fallthru
      _
    // Predicated region
    $region10: #{tpu_custom_call.1} parent=1 // pred_check
      _
    $region11: #{tpu_custom_call.1} parent=1 // pred_check_branch
      %46 = sbr.rel (0) target = $region13
    $region12: #{tpu_custom_call.1} parent=1 // pred_region
      %s48 = ssub.s32 16, 16
      %49 = vsyncadd [#allocation6], %s48
      %s51 = sshll.u32 [#allocation7], 4
      %s52 = int_to_ptr.vmem [resolvable:$true] %s51
      %54 = dma.hbm_to_vmem [thread:$0]  %s2, 16, %s52, [#allocation6]
    $region13: #{tpu_custom_call.1} parent=1 // pred_fallthru
      _
    // Predicated region
    $region14: #{tpu_custom_call.1} parent=1 // pred_check
      _
    $region15: #{tpu_custom_call.1} parent=1 // pred_check_branch
      %56 = sbr.rel (0) target = $region17
    $region16: #{tpu_custom_call.1} parent=1 // pred_region
      %s58 = ssub.s32 2048, 2048
      %59 = vsyncadd [#allocation9], %s58
      %s60 = sshll.u32 [#allocation8], 4
      %s61 = int_to_ptr.vmem [resolvable:$true] %s60
      %66 = dma.hbm_to_vmem [thread:$0]  %s3, 2048, %s61, [#allocation9], 128, 128, 8
    $region17: #{tpu_custom_call.1} parent=1 // pred_fallthru
      _
    // Predicated region
    $region18: #{tpu_custom_call.1} parent=1 // pred_check
      _
    $region19: #{tpu_custom_call.1} parent=1 // pred_check_branch
      %68 = sbr.rel (0) target = $region21
    $region20: #{tpu_custom_call.1} parent=1 // pred_region
      _
    $region21: #{tpu_custom_call.1} parent=1 // pred_fallthru
      _
    // Predicated region
    $region22: #{tpu_custom_call.1} parent=1 // pred_check
      _
    $region23: #{tpu_custom_call.1} parent=1 // pred_check_branch
      %70 = sbr.rel (0) target = $region25
    $region24: #{tpu_custom_call.1} parent=1 // pred_region
      %s72 = ssub.s32 8192, 8192
      %73 = vsyncadd [#allocation9], %s72
      %s74 = sshll.u32 [#allocation10], 4
      %s75 = int_to_ptr.vmem [resolvable:$true] %s74
      %80 = dma.hbm_to_vmem [thread:$0]  %s5, 8192, %s75, [#allocation9], 256, 256, 16
    $region25: #{tpu_custom_call.1} parent=1 // pred_fallthru
      _
    // Predicated region
    $region26: #{tpu_custom_call.1} parent=1 // pred_check
      _
    $region27: #{tpu_custom_call.1} parent=1 // pred_check_branch
      %82 = sbr.rel (0) target = $region29
    $region28: #{tpu_custom_call.1} parent=1 // pred_region
      _
    $region29: #{tpu_custom_call.1} parent=1 // pred_fallthru
      _
    // Predicated region
    $region30: #{tpu_custom_call.1} parent=1 // pred_check
      _
    $region31: #{tpu_custom_call.1} parent=1 // pred_check_branch
      %84 = sbr.rel (0) target = $region33
    $region32: #{tpu_custom_call.1} parent=1 // pred_region
      %s86 = ssub.s32 32768, 32768
      %87 = vsyncadd [#allocation12], %s86
      %s88 = sshll.u32 [#allocation11], 4
      %s89 = int_to_ptr.vmem [resolvable:$true] %s88
      %94 = dma.hbm_to_vmem [thread:$0]  %s7, 32768, %s89, [#allocation12], 512, 512, 32
    $region33: #{tpu_custom_call.1} parent=1 // pred_fallthru
      _
    // Predicated region
    $region34: #{tpu_custom_call.1} parent=1 // pred_check
      _
    $region35: #{tpu_custom_call.1} parent=1 // pred_check_branch
      %96 = sbr.rel (0) target = $region37
    $region36: #{tpu_custom_call.1} parent=1 // pred_region
      _
    $region37: #{tpu_custom_call.1} parent=1 // pred_fallthru
      _
    // Predicated region
    $region38: #{tpu_custom_call.1} parent=1 // pred_check
      _
    $region39: #{tpu_custom_call.1} parent=1 // pred_check_branch
      %98 = sbr.rel (0) target = $region41
    $region40: #{tpu_custom_call.1} parent=1 // pred_region
      %s100 = ssub.s32 8192, 8192
      %101 = vsyncadd [#allocation12], %s100
      %s102 = sshll.u32 [#allocation13], 4
      %s103 = int_to_ptr.vmem [resolvable:$true] %s102
      %108 = dma.hbm_to_vmem [thread:$0]  %s9, 8192, %s103, [#allocation12], 64, 64, 4
    $region41: #{tpu_custom_call.1} parent=1 // pred_fallthru
      _
    // Predicated region
    $region42: #{tpu_custom_call.1} parent=1 // pred_check
      _
    $region43: #{tpu_custom_call.1} parent=1 // pred_check_branch
      %110 = sbr.rel (0) target = $region45
    $region44: #{tpu_custom_call.1} parent=1 // pred_region
      _
    $region45: #{tpu_custom_call.1} parent=1 // pred_fallthru
      _
    // Predicated region
    $region46: #{tpu_custom_call.1} parent=1 // pred_check
      _
    $region47: #{tpu_custom_call.1} parent=1 // pred_check_branch
      %112 = sbr.rel (0) target = $region49
    $region48: #{tpu_custom_call.1} parent=1 // pred_region
      %113 = dma.done [#allocation3], 128
    $region49: #{tpu_custom_call.1} parent=1 // pred_fallthru
      _
    // Predicated region
    $region50: #{tpu_custom_call.1} parent=1 // pred_check
      _
    $region51: #{tpu_custom_call.1} parent=1 // pred_check_branch
      %115 = sbr.rel (0) target = $region53
    $region52: #{tpu_custom_call.1} parent=1 // pred_region
      %116 = dma.done [#allocation6], 1024
    $region53: #{tpu_custom_call.1} parent=1 // pred_fallthru
      _
    // Predicated region
    $region54: #{tpu_custom_call.1} parent=1 // pred_check
      _
    $region55: #{tpu_custom_call.1} parent=1 // pred_check_branch
      %118 = sbr.rel (0) target = $region57
    $region56: #{tpu_custom_call.1} parent=1 // pred_region
      %119 = dma.done [#allocation6], 16
    $region57: #{tpu_custom_call.1} parent=1 // pred_fallthru
      _
    // Predicated region
    $region58: #{tpu_custom_call.1} parent=1 // pred_check
      _
    $region59: #{tpu_custom_call.1} parent=1 // pred_check_branch
      %121 = sbr.rel (0) target = $region61
    $region60: #{tpu_custom_call.1} parent=1 // pred_region
      %122 = dma.done [#allocation9], 2048
    $region61: #{tpu_custom_call.1} parent=1 // pred_fallthru
      _
    // Predicated region
    $region62: #{tpu_custom_call.1} parent=1 // pred_check
      _
    $region63: #{tpu_custom_call.1} parent=1 // pred_check_branch
      %124 = sbr.rel (0) target = $region65
    $region64: #{tpu_custom_call.1} parent=1 // pred_region
      %125 = dma.done [#allocation9], 8192
    $region65: #{tpu_custom_call.1} parent=1 // pred_fallthru
      _
    // Predicated region
    $region66: #{tpu_custom_call.1} parent=1 // pred_check
      _
    $region67: #{tpu_custom_call.1} parent=1 // pred_check_branch
      %127 = sbr.rel (0) target = $region69
    $region68: #{tpu_custom_call.1} parent=1 // pred_region
      %128 = dma.done [#allocation12], 32768
    $region69: #{tpu_custom_call.1} parent=1 // pred_fallthru
      _
    // Predicated region
    $region70: #{tpu_custom_call.1} parent=1 // pred_check
      _
    $region71: #{tpu_custom_call.1} parent=1 // pred_check_branch
      %130 = sbr.rel (0) target = $region73
    $region72: #{tpu_custom_call.1} parent=1 // pred_region
      %131 = dma.done [#allocation12], 8192
    $region73: #{tpu_custom_call.1} parent=1 // pred_fallthru
      _
    %v133 = vld [vmem:[#allocation2] sm:$0xf]
    %v134 = vld [vmem:[#allocation2 + $0x4] sm:$0xf]
    %v135 = vld [vmem:[#allocation5] sm:$0xf]
    %v136 = vld [vmem:[#allocation5 + $0x4] sm:$0xf]
    %v137 = vld [vmem:[#allocation5 + $0x8] sm:$0xf]
    %v138 = vld [vmem:[#allocation5 + $0xc] sm:$0xf]
    %v139 = vld [vmem:[#allocation5 + $0x10] sm:$0xf]
    %v140 = vld [vmem:[#allocation5 + $0x14] sm:$0xf]
    %v141 = vld [vmem:[#allocation5 + $0x18] sm:$0xf]
    %v142 = vld [vmem:[#allocation5 + $0x1c] sm:$0xf]
    %v143 = vld [vmem:[#allocation5 + $0x20] sm:$0xf]
    %v144 = vld [vmem:[#allocation5 + $0x24] sm:$0xf]
    %v145 = vld [vmem:[#allocation5 + $0x28] sm:$0xf]
    %v146 = vld [vmem:[#allocation5 + $0x2c] sm:$0xf]
    %v147 = vld [vmem:[#allocation5 + $0x30] sm:$0xf]
    %v148 = vld [vmem:[#allocation5 + $0x34] sm:$0xf]
    %v149 = vld [vmem:[#allocation5 + $0x38] sm:$0xf]
    %v150 = vld [vmem:[#allocation5 + $0x3c] sm:$0xf]
    %v151 = vld [vmem:[#allocation7] sm:$0x1]
    %v153 = vlaneseq
    %v154 = vshrl.u32 %v153, 7
    %v155 = vsub.s32 0, %v154
    %v156 = vrot.slane %v151, %v155
    %v160 = vunpack.c.l.b16 %v133
    %v161 = vunpack.c.l.b16 %v134
    %v162 = vpack.c.b16 %v161, %v160
    %v180 = vunpack.c.l.b16 %v135
    %v181 = vunpack.c.l.b16 %v136
    %v182 = vunpack.c.l.b16 %v137
    %v183 = vunpack.c.l.b16 %v138
    %v184 = vunpack.c.l.b16 %v139
    %v185 = vunpack.c.l.b16 %v140
    %v186 = vunpack.c.l.b16 %v141
    %v187 = vunpack.c.l.b16 %v142
    %v188 = vunpack.c.l.b16 %v143
    %v189 = vunpack.c.l.b16 %v144
    %v190 = vunpack.c.l.b16 %v145
    %v191 = vunpack.c.l.b16 %v146
    %v192 = vunpack.c.l.b16 %v147
    %v193 = vunpack.c.l.b16 %v148
    %v194 = vunpack.c.l.b16 %v149
    %v195 = vunpack.c.l.b16 %v150
    %v196 = vpack.c.b16 %v181, %v180
    %v197 = vpack.c.b16 %v183, %v182
    %v198 = vpack.c.b16 %v185, %v184
    %v199 = vpack.c.b16 %v187, %v186
    %v200 = vpack.c.b16 %v189, %v188
    %v201 = vpack.c.b16 %v191, %v190
    %v202 = vpack.c.b16 %v193, %v192
    %v203 = vpack.c.b16 %v195, %v194
    %212 = vmatprep.subr.bf16.mxu0 0
    %213 = vmatpush1.bf16.msra.mxu0 %v203
    %214 = vmatprep.subr.bf16.mxu0 0
    %215 = vmatpush1.bf16.msra.mxu0 %v202
    %216 = vmatprep.subr.bf16.mxu0 0
    %217 = vmatpush1.bf16.msra.mxu0 %v201
    %218 = vmatprep.subr.bf16.mxu0 0
    %219 = vmatpush1.bf16.msra.mxu0 %v200
    %220 = vmatprep.subr.bf16.mxu0 0
    %221 = vmatpush1.bf16.msra.mxu0 %v199
    %222 = vmatprep.subr.bf16.mxu0 0
    %223 = vmatpush1.bf16.msra.mxu0 %v198
    %224 = vmatprep.subr.bf16.mxu0 0
    %225 = vmatpush1.bf16.msra.mxu0 %v197
    %226 = vmatprep.subr.bf16.mxu0 0
    %227 = vmatpush1.bf16.msra.mxu0 %v196
    %228 = vmatprep.subr.bf16.mxu0 0
    %229 = vmatpush2.bf16.msra.mxu0 0
    %230 = vmatprep.subr.bf16.mxu0 0
    %231 = vmatpush2.bf16.msra.mxu0 0
    %232 = vmatprep.subr.bf16.mxu0 0
    %233 = vmatpush2.bf16.msra.mxu0 0
    %234 = vmatprep.subr.bf16.mxu0 0
    %235 = vmatpush2.bf16.msra.mxu0 0
    %236 = vmatprep.subr.bf16.mxu0 0
    %237 = vmatpush2.bf16.msra.mxu0 0
    %238 = vmatprep.subr.bf16.mxu0 0
    %239 = vmatpush2.bf16.msra.mxu0 0
    %240 = vmatprep.subr.bf16.mxu0 0
    %241 = vmatpush2.bf16.msra.mxu0 0
    %242 = vmatprep.subr.bf16.mxu0 0
    %243 = vmatpush2.bf16.msra.mxu0 0
    %244 = vmatprep.mubr.bf16.mxu0 0
    %245 = vmatmul.mubr.bf16.gmra.mxu0 %v162
    %v246 = vpop.f32.mrf.mxu0
    %v247 = vadd.f32 %v156, %v246
    %v248 = vpop.f32.mrf.mxu0
    %v249 = vpop.f32.mrf.mxu0
    %v250 = vadd.f32 %v156, %v249
    %v251 = vpop.f32.mrf.mxu0
    %252 = vdwg.mxu0
    %v253 = vmul.f32 %v247, 0.2
    %v254 = vmul.f32 %v250, 0.2
    %v255 = vmax.f32 %v247, %v253
    %v256 = vmax.f32 %v250, %v254
    %v257 = vpack.c.bf16 %v256, %v255
    %v258 = vld [vmem:[#allocation8] sm:$0xff]
    %v259 = vld [vmem:[#allocation8 + $0x8] sm:$0xff]
    %v260 = vld [vmem:[#allocation8 + $0x10] sm:$0xff]
    %v261 = vld [vmem:[#allocation8 + $0x18] sm:$0xff]
    %v262 = vld [vmem:[#allocation8 + $0x20] sm:$0xff]
    %v263 = vld [vmem:[#allocation8 + $0x28] sm:$0xff]
    %v264 = vld [vmem:[#allocation8 + $0x30] sm:$0xff]
    %v265 = vld [vmem:[#allocation8 + $0x38] sm:$0xff]
    %v266 = vld [vmem:[#allocation8 + $0x40] sm:$0xff]
    %v267 = vld [vmem:[#allocation8 + $0x48] sm:$0xff]
    %v268 = vld [vmem:[#allocation8 + $0x50] sm:$0xff]
    %v269 = vld [vmem:[#allocation8 + $0x58] sm:$0xff]
    %v270 = vld [vmem:[#allocation8 + $0x60] sm:$0xff]
    %v271 = vld [vmem:[#allocation8 + $0x68] sm:$0xff]
    %v272 = vld [vmem:[#allocation8 + $0x70] sm:$0xff]
    %v273 = vld [vmem:[#allocation8 + $0x78] sm:$0xff]
    %v274 = vld [vmem:[%s4] sm:$0x3]
    %v276 = vlaneseq
    %v277 = vshrl.u32 %v276, 7
    %v278 = vsub.s32 0, %v277
    %v279 = vrot.slane %v274, %v278
    %v280 = vlaneseq
    %v281 = vshrl.u32 %v280, 7
    %v282 = vsub.s32 1, %v281
    %v283 = vrot.slane %v274, %v282
    %v302 = vunpack.c.l.b16 %v258
    %v303 = vunpack.c.h.b16 %v258
    %v304 = vunpack.c.l.b16 %v259
    %v305 = vunpack.c.h.b16 %v259
    %v306 = vunpack.c.l.b16 %v260
    %v307 = vunpack.c.h.b16 %v260
    %v308 = vunpack.c.l.b16 %v261
    %v309 = vunpack.c.h.b16 %v261
    %v310 = vunpack.c.l.b16 %v262
    %v311 = vunpack.c.h.b16 %v262
    %v312 = vunpack.c.l.b16 %v263
    %v313 = vunpack.c.h.b16 %v263
    %v314 = vunpack.c.l.b16 %v264
    %v315 = vunpack.c.h.b16 %v264
    %v316 = vunpack.c.l.b16 %v265
    %v317 = vunpack.c.h.b16 %v265
    %v318 = vunpack.c.l.b16 %v266
    %v319 = vunpack.c.h.b16 %v266
    %v320 = vunpack.c.l.b16 %v267
    %v321 = vunpack.c.h.b16 %v267
    %v322 = vunpack.c.l.b16 %v268
    %v323 = vunpack.c.h.b16 %v268
    %v324 = vunpack.c.l.b16 %v269
    %v325 = vunpack.c.h.b16 %v269
    %v326 = vunpack.c.l.b16 %v270
    %v327 = vunpack.c.h.b16 %v270
    %v328 = vunpack.c.l.b16 %v271
    %v329 = vunpack.c.h.b16 %v271
    %v330 = vunpack.c.l.b16 %v272
    %v331 = vunpack.c.h.b16 %v272
    %v332 = vunpack.c.l.b16 %v273
    %v333 = vunpack.c.h.b16 %v273
    %v334 = vpack.c.b16 %v304, %v302
    %v335 = vpack.c.b16 %v305, %v303
    %v336 = vpack.c.b16 %v308, %v306
    %v337 = vpack.c.b16 %v309, %v307
    %v338 = vpack.c.b16 %v312, %v310
    %v339 = vpack.c.b16 %v313, %v311
    %v340 = vpack.c.b16 %v316, %v314
    %v341 = vpack.c.b16 %v317, %v315
    %v342 = vpack.c.b16 %v320, %v318
    %v343 = vpack.c.b16 %v321, %v319
    %v344 = vpack.c.b16 %v324, %v322
    %v345 = vpack.c.b16 %v325, %v323
    %v346 = vpack.c.b16 %v328, %v326
    %v347 = vpack.c.b16 %v329, %v327
    %v348 = vpack.c.b16 %v332, %v330
    %v349 = vpack.c.b16 %v333, %v331
    %366 = vmatprep.subr.bf16.mxu0 %v349
    %367 = vmatpush1.bf16.msra.mxu0 %v348
    %368 = vmatprep.subr.bf16.mxu0 %v347
    %369 = vmatpush1.bf16.msra.mxu0 %v346
    %370 = vmatprep.subr.bf16.mxu0 %v345
    %371 = vmatpush1.bf16.msra.mxu0 %v344
    %372 = vmatprep.subr.bf16.mxu0 %v343
    %373 = vmatpush1.bf16.msra.mxu0 %v342
    %374 = vmatprep.subr.bf16.mxu0 %v341
    %375 = vmatpush1.bf16.msra.mxu0 %v340
    %376 = vmatprep.subr.bf16.mxu0 %v339
    %377 = vmatpush1.bf16.msra.mxu0 %v338
    %378 = vmatprep.subr.bf16.mxu0 %v337
    %379 = vmatpush1.bf16.msra.mxu0 %v336
    %380 = vmatprep.subr.bf16.mxu0 %v335
    %381 = vmatpush1.bf16.msra.mxu0 %v334
    %382 = vmatprep.subr.bf16.mxu0 0
    %383 = vmatpush2.bf16.msra.mxu0 0
    %384 = vmatprep.subr.bf16.mxu0 0
    %385 = vmatpush2.bf16.msra.mxu0 0
    %386 = vmatprep.subr.bf16.mxu0 0
    %387 = vmatpush2.bf16.msra.mxu0 0
    %388 = vmatprep.subr.bf16.mxu0 0
    %389 = vmatpush2.bf16.msra.mxu0 0
    %390 = vmatprep.subr.bf16.mxu0 0
    %391 = vmatpush2.bf16.msra.mxu0 0
    %392 = vmatprep.subr.bf16.mxu0 0
    %393 = vmatpush2.bf16.msra.mxu0 0
    %394 = vmatprep.subr.bf16.mxu0 0
    %395 = vmatpush2.bf16.msra.mxu0 0
    %396 = vmatprep.subr.bf16.mxu0 0
    %397 = vmatpush2.bf16.msra.mxu0 0
    %398 = vmatprep.mubr.bf16.mxu0 0
    %399 = vmatmul.mubr.bf16.gmra.mxu0 %v257
    %v400 = vpop.f32.mrf.mxu0
    %v401 = vadd.f32 %v279, %v400
    %v402 = vpop.f32.mrf.mxu0
    %v403 = vadd.f32 %v283, %v402
    %v404 = vpop.f32.mrf.mxu0
    %v405 = vadd.f32 %v279, %v404
    %v406 = vpop.f32.mrf.mxu0
    %v407 = vadd.f32 %v283, %v406
    %408 = vdwg.mxu0
    %v409 = vmul.f32 %v401, 0.2
    %v410 = vmul.f32 %v403, 0.2
    %v411 = vmul.f32 %v405, 0.2
    %v412 = vmul.f32 %v407, 0.2
    %v413 = vmax.f32 %v401, %v409
    %v414 = vmax.f32 %v403, %v410
    %v415 = vmax.f32 %v405, %v411
    %v416 = vmax.f32 %v407, %v412
    %v417 = vpack.c.bf16 %v415, %v413
    %v418 = vpack.c.bf16 %v416, %v414
    %v419 = vld [vmem:[#allocation10] sm:$0xff]
    %v420 = vld [vmem:[#allocation10 + $0x8] sm:$0xff]
    %v421 = vld [vmem:[#allocation10 + $0x10] sm:$0xff]
    %v422 = vld [vmem:[#allocation10 + $0x18] sm:$0xff]
    %v423 = vld [vmem:[#allocation10 + $0x20] sm:$0xff]
    %v424 = vld [vmem:[#allocation10 + $0x28] sm:$0xff]
    %v425 = vld [vmem:[#allocation10 + $0x30] sm:$0xff]
    %v426 = vld [vmem:[#allocation10 + $0x38] sm:$0xff]
    %v427 = vld [vmem:[#allocation10 + $0x40] sm:$0xff]
    %v428 = vld [vmem:[#allocation10 + $0x48] sm:$0xff]
    %v429 = vld [vmem:[#allocation10 + $0x50] sm:$0xff]
    %v430 = vld [vmem:[#allocation10 + $0x58] sm:$0xff]
    %v431 = vld [vmem:[#allocation10 + $0x60] sm:$0xff]
    %v432 = vld [vmem:[#allocation10 + $0x68] sm:$0xff]
    %v433 = vld [vmem:[#allocation10 + $0x70] sm:$0xff]
    %v434 = vld [vmem:[#allocation10 + $0x78] sm:$0xff]
    %v435 = vld [vmem:[#allocation10 + $0x80] sm:$0xff]
    %v436 = vld [vmem:[#allocation10 + $0x88] sm:$0xff]
    %v437 = vld [vmem:[#allocation10 + $0x90] sm:$0xff]
    %v438 = vld [vmem:[#allocation10 + $0x98] sm:$0xff]
    %v439 = vld [vmem:[#allocation10 + $0xa0] sm:$0xff]
    %v440 = vld [vmem:[#allocation10 + $0xa8] sm:$0xff]
    %v441 = vld [vmem:[#allocation10 + $0xb0] sm:$0xff]
    %v442 = vld [vmem:[#allocation10 + $0xb8] sm:$0xff]
    %v443 = vld [vmem:[#allocation10 + $0xc0] sm:$0xff]
    %v444 = vld [vmem:[#allocation10 + $0xc8] sm:$0xff]
    %v445 = vld [vmem:[#allocation10 + $0xd0] sm:$0xff]
    %v446 = vld [vmem:[#allocation10 + $0xd8] sm:$0xff]
    %v447 = vld [vmem:[#allocation10 + $0xe0] sm:$0xff]
    %v448 = vld [vmem:[#allocation10 + $0xe8] sm:$0xff]
    %v449 = vld [vmem:[#allocation10 + $0xf0] sm:$0xff]
    %v450 = vld [vmem:[#allocation10 + $0xf8] sm:$0xff]
    %v451 = vld [vmem:[#allocation10 + $0x100] sm:$0xff]
    %v452 = vld [vmem:[#allocation10 + $0x108] sm:$0xff]
    %v453 = vld [vmem:[#allocation10 + $0x110] sm:$0xff]
    %v454 = vld [vmem:[#allocation10 + $0x118] sm:$0xff]
    %v455 = vld [vmem:[#allocation10 + $0x120] sm:$0xff]
    %v456 = vld [vmem:[#allocation10 + $0x128] sm:$0xff]
    %v457 = vld [vmem:[#allocation10 + $0x130] sm:$0xff]
    %v458 = vld [vmem:[#allocation10 + $0x138] sm:$0xff]
    %v459 = vld [vmem:[#allocation10 + $0x140] sm:$0xff]
    %v460 = vld [vmem:[#allocation10 + $0x148] sm:$0xff]
    %v461 = vld [vmem:[#allocation10 + $0x150] sm:$0xff]
    %v462 = vld [vmem:[#allocation10 + $0x158] sm:$0xff]
    %v463 = vld [vmem:[#allocation10 + $0x160] sm:$0xff]
    %v464 = vld [vmem:[#allocation10 + $0x168] sm:$0xff]
    %v465 = vld [vmem:[#allocation10 + $0x170] sm:$0xff]
    %v466 = vld [vmem:[#allocation10 + $0x178] sm:$0xff]
    %v467 = vld [vmem:[#allocation10 + $0x180] sm:$0xff]
    %v468 = vld [vmem:[#allocation10 + $0x188] sm:$0xff]
    %v469 = vld [vmem:[#allocation10 + $0x190] sm:$0xff]
    %v470 = vld [vmem:[#allocation10 + $0x198] sm:$0xff]
    %v471 = vld [vmem:[#allocation10 + $0x1a0] sm:$0xff]
    %v472 = vld [vmem:[#allocation10 + $0x1a8] sm:$0xff]
    %v473 = vld [vmem:[#allocation10 + $0x1b0] sm:$0xff]
    %v474 = vld [vmem:[#allocation10 + $0x1b8] sm:$0xff]
    %v475 = vld [vmem:[#allocation10 + $0x1c0] sm:$0xff]
    %v476 = vld [vmem:[#allocation10 + $0x1c8] sm:$0xff]
    %v477 = vld [vmem:[#allocation10 + $0x1d0] sm:$0xff]
    %v478 = vld [vmem:[#allocation10 + $0x1d8] sm:$0xff]
    %v479 = vld [vmem:[#allocation10 + $0x1e0] sm:$0xff]
    %v480 = vld [vmem:[#allocation10 + $0x1e8] sm:$0xff]
    %v481 = vld [vmem:[#allocation10 + $0x1f0] sm:$0xff]
    %v482 = vld [vmem:[#allocation10 + $0x1f8] sm:$0xff]
    %v483 = vld [vmem:[%s6] sm:$0xf]
    %v485 = vlaneseq
    %v486 = vshrl.u32 %v485, 7
    %v487 = vsub.s32 0, %v486
    %v488 = vrot.slane %v483, %v487
    %v489 = vlaneseq
    %v490 = vshrl.u32 %v489, 7
    %v491 = vsub.s32 1, %v490
    %v492 = vrot.slane %v483, %v491
    %v493 = vlaneseq
    %v494 = vshrl.u32 %v493, 7
    %v495 = vsub.s32 2, %v494
    %v496 = vrot.slane %v483, %v495
    %v497 = vlaneseq
    %v498 = vshrl.u32 %v497, 7
    %v499 = vsub.s32 3, %v498
    %v500 = vrot.slane %v483, %v499
    %v569 = vunpack.c.l.b16 %v419
    %v570 = vunpack.c.h.b16 %v419
    %v571 = vunpack.c.l.b16 %v420
    %v572 = vunpack.c.h.b16 %v420
    %v573 = vunpack.c.l.b16 %v421
    %v574 = vunpack.c.h.b16 %v421
    %v575 = vunpack.c.l.b16 %v422
    %v576 = vunpack.c.h.b16 %v422
    %v577 = vunpack.c.l.b16 %v423
    %v578 = vunpack.c.h.b16 %v423
    %v579 = vunpack.c.l.b16 %v424
    %v580 = vunpack.c.h.b16 %v424
    %v581 = vunpack.c.l.b16 %v425
    %v582 = vunpack.c.h.b16 %v425
    %v583 = vunpack.c.l.b16 %v426
    %v584 = vunpack.c.h.b16 %v426
    %v585 = vunpack.c.l.b16 %v427
    %v586 = vunpack.c.h.b16 %v427
    %v587 = vunpack.c.l.b16 %v428
    %v588 = vunpack.c.h.b16 %v428
    %v589 = vunpack.c.l.b16 %v429
    %v590 = vunpack.c.h.b16 %v429
    %v591 = vunpack.c.l.b16 %v430
    %v592 = vunpack.c.h.b16 %v430
    %v593 = vunpack.c.l.b16 %v431
    %v594 = vunpack.c.h.b16 %v431
    %v595 = vunpack.c.l.b16 %v432
    %v596 = vunpack.c.h.b16 %v432
    %v597 = vunpack.c.l.b16 %v433
    %v598 = vunpack.c.h.b16 %v433
    %v599 = vunpack.c.l.b16 %v434
    %v600 = vunpack.c.h.b16 %v434
    %v601 = vunpack.c.l.b16 %v435
    %v602 = vunpack.c.h.b16 %v435
    %v603 = vunpack.c.l.b16 %v436
    %v604 = vunpack.c.h.b16 %v436
    %v605 = vunpack.c.l.b16 %v437
    %v606 = vunpack.c.h.b16 %v437
    %v607 = vunpack.c.l.b16 %v438
    %v608 = vunpack.c.h.b16 %v438
    %v609 = vunpack.c.l.b16 %v439
    %v610 = vunpack.c.h.b16 %v439
    %v611 = vunpack.c.l.b16 %v440
    %v612 = vunpack.c.h.b16 %v440
    %v613 = vunpack.c.l.b16 %v441
    %v614 = vunpack.c.h.b16 %v441
    %v615 = vunpack.c.l.b16 %v442
    %v616 = vunpack.c.h.b16 %v442
    %v617 = vunpack.c.l.b16 %v443
    %v618 = vunpack.c.h.b16 %v443
    %v619 = vunpack.c.l.b16 %v444
    %v620 = vunpack.c.h.b16 %v444
    %v621 = vunpack.c.l.b16 %v445
    %v622 = vunpack.c.h.b16 %v445
    %v623 = vunpack.c.l.b16 %v446
    %v624 = vunpack.c.h.b16 %v446
    %v625 = vunpack.c.l.b16 %v447
    %v626 = vunpack.c.h.b16 %v447
    %v627 = vunpack.c.l.b16 %v448
    %v628 = vunpack.c.h.b16 %v448
    %v629 = vunpack.c.l.b16 %v449
    %v630 = vunpack.c.h.b16 %v449
    %v631 = vunpack.c.l.b16 %v450
    %v632 = vunpack.c.h.b16 %v450
    %v633 = vunpack.c.l.b16 %v451
    %v634 = vunpack.c.h.b16 %v451
    %v635 = vunpack.c.l.b16 %v452
    %v636 = vunpack.c.h.b16 %v452
    %v637 = vunpack.c.l.b16 %v453
    %v638 = vunpack.c.h.b16 %v453
    %v639 = vunpack.c.l.b16 %v454
    %v640 = vunpack.c.h.b16 %v454
    %v641 = vunpack.c.l.b16 %v455
    %v642 = vunpack.c.h.b16 %v455
    %v643 = vunpack.c.l.b16 %v456
    %v644 = vunpack.c.h.b16 %v456
    %v645 = vunpack.c.l.b16 %v457
    %v646 = vunpack.c.h.b16 %v457
    %v647 = vunpack.c.l.b16 %v458
    %v648 = vunpack.c.h.b16 %v458
    %v649 = vunpack.c.l.b16 %v459
    %v650 = vunpack.c.h.b16 %v459
    %v651 = vunpack.c.l.b16 %v460
    %v652 = vunpack.c.h.b16 %v460
    %v653 = vunpack.c.l.b16 %v461
    %v654 = vunpack.c.h.b16 %v461
    %v655 = vunpack.c.l.b16 %v462
    %v656 = vunpack.c.h.b16 %v462
    %v657 = vunpack.c.l.b16 %v463
    %v658 = vunpack.c.h.b16 %v463
    %v659 = vunpack.c.l.b16 %v464
    %v660 = vunpack.c.h.b16 %v464
    %v661 = vunpack.c.l.b16 %v465
    %v662 = vunpack.c.h.b16 %v465
    %v663 = vunpack.c.l.b16 %v466
    %v664 = vunpack.c.h.b16 %v466
    %v665 = vunpack.c.l.b16 %v467
    %v666 = vunpack.c.h.b16 %v467
    %v667 = vunpack.c.l.b16 %v468
    %v668 = vunpack.c.h.b16 %v468
    %v669 = vunpack.c.l.b16 %v469
    %v670 = vunpack.c.h.b16 %v469
    %v671 = vunpack.c.l.b16 %v470
    %v672 = vunpack.c.h.b16 %v470
    %v673 = vunpack.c.l.b16 %v471
    %v674 = vunpack.c.h.b16 %v471
    %v675 = vunpack.c.l.b16 %v472
    %v676 = vunpack.c.h.b16 %v472
    %v677 = vunpack.c.l.b16 %v473
    %v678 = vunpack.c.h.b16 %v473
    %v679 = vunpack.c.l.b16 %v474
    %v680 = vunpack.c.h.b16 %v474
    %v681 = vunpack.c.l.b16 %v475
    %v682 = vunpack.c.h.b16 %v475
    %v683 = vunpack.c.l.b16 %v476
    %v684 = vunpack.c.h.b16 %v476
    %v685 = vunpack.c.l.b16 %v477
    %v686 = vunpack.c.h.b16 %v477
    %v687 = vunpack.c.l.b16 %v478
    %v688 = vunpack.c.h.b16 %v478
    %v689 = vunpack.c.l.b16 %v479
    %v690 = vunpack.c.h.b16 %v479
    %v691 = vunpack.c.l.b16 %v480
    %v692 = vunpack.c.h.b16 %v480
    %v693 = vunpack.c.l.b16 %v481
    %v694 = vunpack.c.h.b16 %v481
    %v695 = vunpack.c.l.b16 %v482
    %v696 = vunpack.c.h.b16 %v482
    %v697 = vpack.c.b16 %v573, %v569
    %v698 = vpack.c.b16 %v574, %v570
    %v699 = vpack.c.b16 %v575, %v571
    %v700 = vpack.c.b16 %v576, %v572
    %v701 = vpack.c.b16 %v581, %v577
    %v702 = vpack.c.b16 %v582, %v578
    %v703 = vpack.c.b16 %v583, %v579
    %v704 = vpack.c.b16 %v584, %v580
    %v705 = vpack.c.b16 %v589, %v585
    %v706 = vpack.c.b16 %v590, %v586
    %v707 = vpack.c.b16 %v591, %v587
    %v708 = vpack.c.b16 %v592, %v588
    %v709 = vpack.c.b16 %v597, %v593
    %v710 = vpack.c.b16 %v598, %v594
    %v711 = vpack.c.b16 %v599, %v595
    %v712 = vpack.c.b16 %v600, %v596
    %v713 = vpack.c.b16 %v605, %v601
    %v714 = vpack.c.b16 %v606, %v602
    %v715 = vpack.c.b16 %v607, %v603
    %v716 = vpack.c.b16 %v608, %v604
    %v717 = vpack.c.b16 %v613, %v609
    %v718 = vpack.c.b16 %v614, %v610
    %v719 = vpack.c.b16 %v615, %v611
    %v720 = vpack.c.b16 %v616, %v612
    %v721 = vpack.c.b16 %v621, %v617
    %v722 = vpack.c.b16 %v622, %v618
    %v723 = vpack.c.b16 %v623, %v619
    %v724 = vpack.c.b16 %v624, %v620
    %v725 = vpack.c.b16 %v629, %v625
    %v726 = vpack.c.b16 %v630, %v626
    %v727 = vpack.c.b16 %v631, %v627
    %v728 = vpack.c.b16 %v632, %v628
    %v729 = vpack.c.b16 %v637, %v633
    %v730 = vpack.c.b16 %v638, %v634
    %v731 = vpack.c.b16 %v639, %v635
    %v732 = vpack.c.b16 %v640, %v636
    %v733 = vpack.c.b16 %v645, %v641
    %v734 = vpack.c.b16 %v646, %v642
    %v735 = vpack.c.b16 %v647, %v643
    %v736 = vpack.c.b16 %v648, %v644
    %v737 = vpack.c.b16 %v653, %v649
    %v738 = vpack.c.b16 %v654, %v650
    %v739 = vpack.c.b16 %v655, %v651
    %v740 = vpack.c.b16 %v656, %v652
    %v741 = vpack.c.b16 %v661, %v657
    %v742 = vpack.c.b16 %v662, %v658
    %v743 = vpack.c.b16 %v663, %v659
    %v744 = vpack.c.b16 %v664, %v660
    %v745 = vpack.c.b16 %v669, %v665
    %v746 = vpack.c.b16 %v670, %v666
    %v747 = vpack.c.b16 %v671, %v667
    %v748 = vpack.c.b16 %v672, %v668
    %v749 = vpack.c.b16 %v677, %v673
    %v750 = vpack.c.b16 %v678, %v674
    %v751 = vpack.c.b16 %v679, %v675
    %v752 = vpack.c.b16 %v680, %v676
    %v753 = vpack.c.b16 %v685, %v681
    %v754 = vpack.c.b16 %v686, %v682
    %v755 = vpack.c.b16 %v687, %v683
    %v756 = vpack.c.b16 %v688, %v684
    %v757 = vpack.c.b16 %v693, %v689
    %v758 = vpack.c.b16 %v694, %v690
    %v759 = vpack.c.b16 %v695, %v691
    %v760 = vpack.c.b16 %v696, %v692
    %825 = vmatprep.subr.bf16.mxu0 %v726
    %826 = vmatpush1.bf16.msra.mxu0 %v725
    %827 = vmatprep.subr.bf16.mxu0 %v722
    %828 = vmatpush1.bf16.msra.mxu0 %v721
    %829 = vmatprep.subr.bf16.mxu0 %v718
    %830 = vmatpush1.bf16.msra.mxu0 %v717
    %831 = vmatprep.subr.bf16.mxu0 %v714
    %832 = vmatpush1.bf16.msra.mxu0 %v713
    %833 = vmatprep.subr.bf16.mxu0 %v710
    %834 = vmatpush1.bf16.msra.mxu0 %v709
    %835 = vmatprep.subr.bf16.mxu0 %v706
    %836 = vmatpush1.bf16.msra.mxu0 %v705
    %837 = vmatprep.subr.bf16.mxu0 %v702
    %838 = vmatpush1.bf16.msra.mxu0 %v701
    %839 = vmatprep.subr.bf16.mxu0 %v698
    %840 = vmatpush1.bf16.msra.mxu0 %v697
    %841 = vmatprep.subr.bf16.mxu0 %v758
    %842 = vmatpush2.bf16.msra.mxu0 %v757
    %843 = vmatprep.subr.bf16.mxu0 %v754
    %844 = vmatpush2.bf16.msra.mxu0 %v753
    %845 = vmatprep.subr.bf16.mxu0 %v750
    %846 = vmatpush2.bf16.msra.mxu0 %v749
    %847 = vmatprep.subr.bf16.mxu0 %v746
    %848 = vmatpush2.bf16.msra.mxu0 %v745
    %849 = vmatprep.subr.bf16.mxu0 %v742
    %850 = vmatpush2.bf16.msra.mxu0 %v741
    %851 = vmatprep.subr.bf16.mxu0 %v738
    %852 = vmatpush2.bf16.msra.mxu0 %v737
    %853 = vmatprep.subr.bf16.mxu0 %v734
    %854 = vmatpush2.bf16.msra.mxu0 %v733
    %855 = vmatprep.subr.bf16.mxu0 %v730
    %856 = vmatpush2.bf16.msra.mxu0 %v729
    %857 = vmatprep.mubr.bf16.mxu0 %v418
    %858 = vmatmul.mubr.bf16.gmra.mxu0 %v417
    %v859 = vpop.f32.mrf.mxu0
    %v860 = vadd.f32 %v488, %v859
    %v861 = vpop.f32.mrf.mxu0
    %v862 = vadd.f32 %v492, %v861
    %v863 = vpop.f32.mrf.mxu0
    %v864 = vadd.f32 %v488, %v863
    %v865 = vpop.f32.mrf.mxu0
    %v866 = vadd.f32 %v492, %v865
    %867 = vdwg.mxu0
    %868 = vmatprep.subr.bf16.mxu0 %v728
    %869 = vmatpush1.bf16.msra.mxu0 %v727
    %870 = vmatprep.subr.bf16.mxu0 %v724
    %871 = vmatpush1.bf16.msra.mxu0 %v723
    %872 = vmatprep.subr.bf16.mxu0 %v720
    %873 = vmatpush1.bf16.msra.mxu0 %v719
    %874 = vmatprep.subr.bf16.mxu0 %v716
    %875 = vmatpush1.bf16.msra.mxu0 %v715
    %876 = vmatprep.subr.bf16.mxu0 %v712
    %877 = vmatpush1.bf16.msra.mxu0 %v711
    %878 = vmatprep.subr.bf16.mxu0 %v708
    %879 = vmatpush1.bf16.msra.mxu0 %v707
    %880 = vmatprep.subr.bf16.mxu0 %v704
    %881 = vmatpush1.bf16.msra.mxu0 %v703
    %882 = vmatprep.subr.bf16.mxu0 %v700
    %883 = vmatpush1.bf16.msra.mxu0 %v699
    %884 = vmatprep.subr.bf16.mxu0 %v760
    %885 = vmatpush2.bf16.msra.mxu0 %v759
    %886 = vmatprep.subr.bf16.mxu0 %v756
    %887 = vmatpush2.bf16.msra.mxu0 %v755
    %888 = vmatprep.subr.bf16.mxu0 %v752
    %889 = vmatpush2.bf16.msra.mxu0 %v751
    %890 = vmatprep.subr.bf16.mxu0 %v748
    %891 = vmatpush2.bf16.msra.mxu0 %v747
    %892 = vmatprep.subr.bf16.mxu0 %v744
    %893 = vmatpush2.bf16.msra.mxu0 %v743
    %894 = vmatprep.subr.bf16.mxu0 %v740
    %895 = vmatpush2.bf16.msra.mxu0 %v739
    %896 = vmatprep.subr.bf16.mxu0 %v736
    %897 = vmatpush2.bf16.msra.mxu0 %v735
    %898 = vmatprep.subr.bf16.mxu0 %v732
    %899 = vmatpush2.bf16.msra.mxu0 %v731
    %900 = vmatprep.mubr.bf16.mxu0 %v418
    %901 = vmatmul.mubr.bf16.gmra.mxu0 %v417
    %v902 = vpop.f32.mrf.mxu0
    %v903 = vadd.f32 %v496, %v902
    %v904 = vpop.f32.mrf.mxu0
    %v905 = vadd.f32 %v500, %v904
    %v906 = vpop.f32.mrf.mxu0
    %v907 = vadd.f32 %v496, %v906
    %v908 = vpop.f32.mrf.mxu0
    %v909 = vadd.f32 %v500, %v908
    %910 = vdwg.mxu0
    %v911 = vmul.f32 %v860, 0.2
    %v912 = vmul.f32 %v862, 0.2
    %v913 = vmul.f32 %v903, 0.2
    %v914 = vmul.f32 %v905, 0.2
    %v915 = vmul.f32 %v864, 0.2
    %v916 = vmul.f32 %v866, 0.2
    %v917 = vmul.f32 %v907, 0.2
    %v918 = vmul.f32 %v909, 0.2
    %v919 = vmax.f32 %v860, %v911
    %v920 = vmax.f32 %v862, %v912
    %v921 = vmax.f32 %v903, %v913
    %v922 = vmax.f32 %v905, %v914
    %v923 = vmax.f32 %v864, %v915
    %v924 = vmax.f32 %v866, %v916
    %v925 = vmax.f32 %v907, %v917
    %v926 = vmax.f32 %v909, %v918
    %v927 = vpack.c.bf16 %v923, %v919
    %v928 = vpack.c.bf16 %v924, %v920
    %v929 = vpack.c.bf16 %v925, %v921
    %v930 = vpack.c.bf16 %v926, %v922
    %v931 = vld [vmem:[#allocation11] sm:$0xff]
    %v932 = vld [vmem:[#allocation11 + $0x8] sm:$0xff]
    %v933 = vld [vmem:[#allocation11 + $0x10] sm:$0xff]
    %v934 = vld [vmem:[#allocation11 + $0x18] sm:$0xff]
    %v935 = vld [vmem:[#allocation11 + $0x20] sm:$0xff]
    %v936 = vld [vmem:[#allocation11 + $0x28] sm:$0xff]
    %v937 = vld [vmem:[#allocation11 + $0x30] sm:$0xff]
    %v938 = vld [vmem:[#allocation11 + $0x38] sm:$0xff]
    %v939 = vld [vmem:[#allocation11 + $0x40] sm:$0xff]
    %v940 = vld [vmem:[#allocation11 + $0x48] sm:$0xff]
    %v941 = vld [vmem:[#allocation11 + $0x50] sm:$0xff]
    %v942 = vld [vmem:[#allocation11 + $0x58] sm:$0xff]
    %v943 = vld [vmem:[#allocation11 + $0x60] sm:$0xff]
    %v944 = vld [vmem:[#allocation11 + $0x68] sm:$0xff]
    %v945 = vld [vmem:[#allocation11 + $0x70] sm:$0xff]
    %v946 = vld [vmem:[#allocation11 + $0x78] sm:$0xff]
    %v947 = vld [vmem:[#allocation11 + $0x80] sm:$0xff]
    %v948 = vld [vmem:[#allocation11 + $0x88] sm:$0xff]
    %v949 = vld [vmem:[#allocation11 + $0x90] sm:$0xff]
    %v950 = vld [vmem:[#allocation11 + $0x98] sm:$0xff]
    %v951 = vld [vmem:[#allocation11 + $0xa0] sm:$0xff]
    %v952 = vld [vmem:[#allocation11 + $0xa8] sm:$0xff]
    %v953 = vld [vmem:[#allocation11 + $0xb0] sm:$0xff]
    %v954 = vld [vmem:[#allocation11 + $0xb8] sm:$0xff]
    %v955 = vld [vmem:[#allocation11 + $0xc0] sm:$0xff]
    %v956 = vld [vmem:[#allocation11 + $0xc8] sm:$0xff]
    %v957 = vld [vmem:[#allocation11 + $0xd0] sm:$0xff]
    %v958 = vld [vmem:[#allocation11 + $0xd8] sm:$0xff]
    %v959 = vld [vmem:[#allocation11 + $0xe0] sm:$0xff]
    %v960 = vld [vmem:[#allocation11 + $0xe8] sm:$0xff]
    %v961 = vld [vmem:[#allocation11 + $0xf0] sm:$0xff]
    %v962 = vld [vmem:[#allocation11 + $0xf8] sm:$0xff]
    %v963 = vld [vmem:[#allocation11 + $0x100] sm:$0xff]
    %v964 = vld [vmem:[#allocation11 + $0x108] sm:$0xff]
    %v965 = vld [vmem:[#allocation11 + $0x110] sm:$0xff]
    %v966 = vld [vmem:[#allocation11 + $0x118] sm:$0xff]
    %v967 = vld [vmem:[#allocation11 + $0x120] sm:$0xff]
    %v968 = vld [vmem:[#allocation11 + $0x128] sm:$0xff]
    %v969 = vld [vmem:[#allocation11 + $0x130] sm:$0xff]
    %v970 = vld [vmem:[#allocation11 + $0x138] sm:$0xff]
    %v971 = vld [vmem:[#allocation11 + $0x140] sm:$0xff]
    %v972 = vld [vmem:[#allocation11 + $0x148] sm:$0xff]
    %v973 = vld [vmem:[#allocation11 + $0x150] sm:$0xff]
    %v974 = vld [vmem:[#allocation11 + $0x158] sm:$0xff]
    %v975 = vld [vmem:[#allocation11 + $0x160] sm:$0xff]
    %v976 = vld [vmem:[#allocation11 + $0x168] sm:$0xff]
    %v977 = vld [vmem:[#allocation11 + $0x170] sm:$0xff]
    %v978 = vld [vmem:[#allocation11 + $0x178] sm:$0xff]
    %v979 = vld [vmem:[#allocation11 + $0x180] sm:$0xff]
    %v980 = vld [vmem:[#allocation11 + $0x188] sm:$0xff]
    %v981 = vld [vmem:[#allocation11 + $0x190] sm:$0xff]
    %v982 = vld [vmem:[#allocation11 + $0x198] sm:$0xff]
    %v983 = vld [vmem:[#allocation11 + $0x1a0] sm:$0xff]
    %v984 = vld [vmem:[#allocation11 + $0x1a8] sm:$0xff]
    %v985 = vld [vmem:[#allocation11 + $0x1b0] sm:$0xff]
    %v986 = vld [vmem:[#allocation11 + $0x1b8] sm:$0xff]
    %v987 = vld [vmem:[#allocation11 + $0x1c0] sm:$0xff]
    %v988 = vld [vmem:[#allocation11 + $0x1c8] sm:$0xff]
    %v989 = vld [vmem:[#allocation11 + $0x1d0] sm:$0xff]
    %v990 = vld [vmem:[#allocation11 + $0x1d8] sm:$0xff]
    %v991 = vld [vmem:[#allocation11 + $0x1e0] sm:$0xff]
    %v992 = vld [vmem:[#allocation11 + $0x1e8] sm:$0xff]
    %v993 = vld [vmem:[#allocation11 + $0x1f0] sm:$0xff]
    %v994 = vld [vmem:[#allocation11 + $0x1f8] sm:$0xff]
    %v995 = vld [vmem:[#allocation11 + $0x200] sm:$0xff]
    %v996 = vld [vmem:[#allocation11 + $0x208] sm:$0xff]
    %v997 = vld [vmem:[#allocation11 + $0x210] sm:$0xff]
    %v998 = vld [vmem:[#allocation11 + $0x218] sm:$0xff]
    %v999 = vld [vmem:[#allocation11 + $0x220] sm:$0xff]
    %v1000 = vld [vmem:[#allocation11 + $0x228] sm:$0xff]
    %v1001 = vld [vmem:[#allocation11 + $0x230] sm:$0xff]
    %v1002 = vld [vmem:[#allocation11 + $0x238] sm:$0xff]
    %v1003 = vld [vmem:[#allocation11 + $0x240] sm:$0xff]
    %v1004 = vld [vmem:[#allocation11 + $0x248] sm:$0xff]
    %v1005 = vld [vmem:[#allocation11 + $0x250] sm:$0xff]
    %v1006 = vld [vmem:[#allocation11 + $0x258] sm:$0xff]
    %v1007 = vld [vmem:[#allocation11 + $0x260] sm:$0xff]
    %v1008 = vld [vmem:[#allocation11 + $0x268] sm:$0xff]
    %v1009 = vld [vmem:[#allocation11 + $0x270] sm:$0xff]
    %v1010 = vld [vmem:[#allocation11 + $0x278] sm:$0xff]
    %v1011 = vld [vmem:[#allocation11 + $0x280] sm:$0xff]
    %v1012 = vld [vmem:[#allocation11 + $0x288] sm:$0xff]
    %v1013 = vld [vmem:[#allocation11 + $0x290] sm:$0xff]
    %v1014 = vld [vmem:[#allocation11 + $0x298] sm:$0xff]
    %v1015 = vld [vmem:[#allocation11 + $0x2a0] sm:$0xff]
    %v1016 = vld [vmem:[#allocation11 + $0x2a8] sm:$0xff]
    %v1017 = vld [vmem:[#allocation11 + $0x2b0] sm:$0xff]
    %v1018 = vld [vmem:[#allocation11 + $0x2b8] sm:$0xff]
    %v1019 = vld [vmem:[#allocation11 + $0x2c0] sm:$0xff]
    %v1020 = vld [vmem:[#allocation11 + $0x2c8] sm:$0xff]
    %v1021 = vld [vmem:[#allocation11 + $0x2d0] sm:$0xff]
    %v1022 = vld [vmem:[#allocation11 + $0x2d8] sm:$0xff]
    %v1023 = vld [vmem:[#allocation11 + $0x2e0] sm:$0xff]
    %v1024 = vld [vmem:[#allocation11 + $0x2e8] sm:$0xff]
    %v1025 = vld [vmem:[#allocation11 + $0x2f0] sm:$0xff]
    %v1026 = vld [vmem:[#allocation11 + $0x2f8] sm:$0xff]
    %v1027 = vld [vmem:[#allocation11 + $0x300] sm:$0xff]
    %v1028 = vld [vmem:[#allocation11 + $0x308] sm:$0xff]
    %v1029 = vld [vmem:[#allocation11 + $0x310] sm:$0xff]
    %v1030 = vld [vmem:[#allocation11 + $0x318] sm:$0xff]
    %v1031 = vld [vmem:[#allocation11 + $0x320] sm:$0xff]
    %v1032 = vld [vmem:[#allocation11 + $0x328] sm:$0xff]
    %v1033 = vld [vmem:[#allocation11 + $0x330] sm:$0xff]
    %v1034 = vld [vmem:[#allocation11 + $0x338] sm:$0xff]
    %v1035 = vld [vmem:[#allocation11 + $0x340] sm:$0xff]
    %v1036 = vld [vmem:[#allocation11 + $0x348] sm:$0xff]
    %v1037 = vld [vmem:[#allocation11 + $0x350] sm:$0xff]
    %v1038 = vld [vmem:[#allocation11 + $0x358] sm:$0xff]
    %v1039 = vld [vmem:[#allocation11 + $0x360] sm:$0xff]
    %v1040 = vld [vmem:[#allocation11 + $0x368] sm:$0xff]
    %v1041 = vld [vmem:[#allocation11 + $0x370] sm:$0xff]
    %v1042 = vld [vmem:[#allocation11 + $0x378] sm:$0xff]
    %v1043 = vld [vmem:[#allocation11 + $0x380] sm:$0xff]
    %v1044 = vld [vmem:[#allocation11 + $0x388] sm:$0xff]
    %v1045 = vld [vmem:[#allocation11 + $0x390] sm:$0xff]
    %v1046 = vld [vmem:[#allocation11 + $0x398] sm:$0xff]
    %v1047 = vld [vmem:[#allocation11 + $0x3a0] sm:$0xff]
    %v1048 = vld [vmem:[#allocation11 + $0x3a8] sm:$0xff]
    %v1049 = vld [vmem:[#allocation11 + $0x3b0] sm:$0xff]
    %v1050 = vld [vmem:[#allocation11 + $0x3b8] sm:$0xff]
    %v1051 = vld [vmem:[#allocation11 + $0x3c0] sm:$0xff]
    %v1052 = vld [vmem:[#allocation11 + $0x3c8] sm:$0xff]
    %v1053 = vld [vmem:[#allocation11 + $0x3d0] sm:$0xff]
    %v1054 = vld [vmem:[#allocation11 + $0x3d8] sm:$0xff]
    %v1055 = vld [vmem:[#allocation11 + $0x3e0] sm:$0xff]
    %v1056 = vld [vmem:[#allocation11 + $0x3e8] sm:$0xff]
    %v1057 = vld [vmem:[#allocation11 + $0x3f0] sm:$0xff]
    %v1058 = vld [vmem:[#allocation11 + $0x3f8] sm:$0xff]
    %v1059 = vld [vmem:[#allocation11 + $0x400] sm:$0xff]
    %v1060 = vld [vmem:[#allocation11 + $0x408] sm:$0xff]
    %v1061 = vld [vmem:[#allocation11 + $0x410] sm:$0xff]
    %v1062 = vld [vmem:[#allocation11 + $0x418] sm:$0xff]
    %v1063 = vld [vmem:[#allocation11 + $0x420] sm:$0xff]
    %v1064 = vld [vmem:[#allocation11 + $0x428] sm:$0xff]
    %v1065 = vld [vmem:[#allocation11 + $0x430] sm:$0xff]
    %v1066 = vld [vmem:[#allocation11 + $0x438] sm:$0xff]
    %v1067 = vld [vmem:[#allocation11 + $0x440] sm:$0xff]
    %v1068 = vld [vmem:[#allocation11 + $0x448] sm:$0xff]
    %v1069 = vld [vmem:[#allocation11 + $0x450] sm:$0xff]
    %v1070 = vld [vmem:[#allocation11 + $0x458] sm:$0xff]
    %v1071 = vld [vmem:[#allocation11 + $0x460] sm:$0xff]
    %v1072 = vld [vmem:[#allocation11 + $0x468] sm:$0xff]
    %v1073 = vld [vmem:[#allocation11 + $0x470] sm:$0xff]
    %v1074 = vld [vmem:[#allocation11 + $0x478] sm:$0xff]
    %v1075 = vld [vmem:[#allocation11 + $0x480] sm:$0xff]
    %v1076 = vld [vmem:[#allocation11 + $0x488] sm:$0xff]
    %v1077 = vld [vmem:[#allocation11 + $0x490] sm:$0xff]
    %v1078 = vld [vmem:[#allocation11 + $0x498] sm:$0xff]
    %v1079 = vld [vmem:[#allocation11 + $0x4a0] sm:$0xff]
    %v1080 = vld [vmem:[#allocation11 + $0x4a8] sm:$0xff]
    %v1081 = vld [vmem:[#allocation11 + $0x4b0] sm:$0xff]
    %v1082 = vld [vmem:[#allocation11 + $0x4b8] sm:$0xff]
    %v1083 = vld [vmem:[#allocation11 + $0x4c0] sm:$0xff]
    %v1084 = vld [vmem:[#allocation11 + $0x4c8] sm:$0xff]
    %v1085 = vld [vmem:[#allocation11 + $0x4d0] sm:$0xff]
    %v1086 = vld [vmem:[#allocation11 + $0x4d8] sm:$0xff]
    %v1087 = vld [vmem:[#allocation11 + $0x4e0] sm:$0xff]
    %v1088 = vld [vmem:[#allocation11 + $0x4e8] sm:$0xff]
    %v1089 = vld [vmem:[#allocation11 + $0x4f0] sm:$0xff]
    %v1090 = vld [vmem:[#allocation11 + $0x4f8] sm:$0xff]
    %v1091 = vld [vmem:[#allocation11 + $0x500] sm:$0xff]
    %v1092 = vld [vmem:[#allocation11 + $0x508] sm:$0xff]
    %v1093 = vld [vmem:[#allocation11 + $0x510] sm:$0xff]
    %v1094 = vld [vmem:[#allocation11 + $0x518] sm:$0xff]
    %v1095 = vld [vmem:[#allocation11 + $0x520] sm:$0xff]
    %v1096 = vld [vmem:[#allocation11 + $0x528] sm:$0xff]
    %v1097 = vld [vmem:[#allocation11 + $0x530] sm:$0xff]
    %v1098 = vld [vmem:[#allocation11 + $0x538] sm:$0xff]
    %v1099 = vld [vmem:[#allocation11 + $0x540] sm:$0xff]
    %v1100 = vld [vmem:[#allocation11 + $0x548] sm:$0xff]
    %v1101 = vld [vmem:[#allocation11 + $0x550] sm:$0xff]
    %v1102 = vld [vmem:[#allocation11 + $0x558] sm:$0xff]
    %v1103 = vld [vmem:[#allocation11 + $0x560] sm:$0xff]
    %v1104 = vld [vmem:[#allocation11 + $0x568] sm:$0xff]
    %v1105 = vld [vmem:[#allocation11 + $0x570] sm:$0xff]
    %v1106 = vld [vmem:[#allocation11 + $0x578] sm:$0xff]
    %v1107 = vld [vmem:[#allocation11 + $0x580] sm:$0xff]
    %v1108 = vld [vmem:[#allocation11 + $0x588] sm:$0xff]
    %v1109 = vld [vmem:[#allocation11 + $0x590] sm:$0xff]
    %v1110 = vld [vmem:[#allocation11 + $0x598] sm:$0xff]
    %v1111 = vld [vmem:[#allocation11 + $0x5a0] sm:$0xff]
    %v1112 = vld [vmem:[#allocation11 + $0x5a8] sm:$0xff]
    %v1113 = vld [vmem:[#allocation11 + $0x5b0] sm:$0xff]
    %v1114 = vld [vmem:[#allocation11 + $0x5b8] sm:$0xff]
    %v1115 = vld [vmem:[#allocation11 + $0x5c0] sm:$0xff]
    %v1116 = vld [vmem:[#allocation11 + $0x5c8] sm:$0xff]
    %v1117 = vld [vmem:[#allocation11 + $0x5d0] sm:$0xff]
    %v1118 = vld [vmem:[#allocation11 + $0x5d8] sm:$0xff]
    %v1119 = vld [vmem:[#allocation11 + $0x5e0] sm:$0xff]
    %v1120 = vld [vmem:[#allocation11 + $0x5e8] sm:$0xff]
    %v1121 = vld [vmem:[#allocation11 + $0x5f0] sm:$0xff]
    %v1122 = vld [vmem:[#allocation11 + $0x5f8] sm:$0xff]
    %v1123 = vld [vmem:[#allocation11 + $0x600] sm:$0xff]
    %v1124 = vld [vmem:[#allocation11 + $0x608] sm:$0xff]
    %v1125 = vld [vmem:[#allocation11 + $0x610] sm:$0xff]
    %v1126 = vld [vmem:[#allocation11 + $0x618] sm:$0xff]
    %v1127 = vld [vmem:[#allocation11 + $0x620] sm:$0xff]
    %v1128 = vld [vmem:[#allocation11 + $0x628] sm:$0xff]
    %v1129 = vld [vmem:[#allocation11 + $0x630] sm:$0xff]
    %v1130 = vld [vmem:[#allocation11 + $0x638] sm:$0xff]
    %v1131 = vld [vmem:[#allocation11 + $0x640] sm:$0xff]
    %v1132 = vld [vmem:[#allocation11 + $0x648] sm:$0xff]
    %v1133 = vld [vmem:[#allocation11 + $0x650] sm:$0xff]
    %v1134 = vld [vmem:[#allocation11 + $0x658] sm:$0xff]
    %v1135 = vld [vmem:[#allocation11 + $0x660] sm:$0xff]
    %v1136 = vld [vmem:[#allocation11 + $0x668] sm:$0xff]
    %v1137 = vld [vmem:[#allocation11 + $0x670] sm:$0xff]
    %v1138 = vld [vmem:[#allocation11 + $0x678] sm:$0xff]
    %v1139 = vld [vmem:[#allocation11 + $0x680] sm:$0xff]
    %v1140 = vld [vmem:[#allocation11 + $0x688] sm:$0xff]
    %v1141 = vld [vmem:[#allocation11 + $0x690] sm:$0xff]
    %v1142 = vld [vmem:[#allocation11 + $0x698] sm:$0xff]
    %v1143 = vld [vmem:[#allocation11 + $0x6a0] sm:$0xff]
    %v1144 = vld [vmem:[#allocation11 + $0x6a8] sm:$0xff]
    %v1145 = vld [vmem:[#allocation11 + $0x6b0] sm:$0xff]
    %v1146 = vld [vmem:[#allocation11 + $0x6b8] sm:$0xff]
    %v1147 = vld [vmem:[#allocation11 + $0x6c0] sm:$0xff]
    %v1148 = vld [vmem:[#allocation11 + $0x6c8] sm:$0xff]
    %v1149 = vld [vmem:[#allocation11 + $0x6d0] sm:$0xff]
    %v1150 = vld [vmem:[#allocation11 + $0x6d8] sm:$0xff]
    %v1151 = vld [vmem:[#allocation11 + $0x6e0] sm:$0xff]
    %v1152 = vld [vmem:[#allocation11 + $0x6e8] sm:$0xff]
    %v1153 = vld [vmem:[#allocation11 + $0x6f0] sm:$0xff]
    %v1154 = vld [vmem:[#allocation11 + $0x6f8] sm:$0xff]
    %v1155 = vld [vmem:[#allocation11 + $0x700] sm:$0xff]
    %v1156 = vld [vmem:[#allocation11 + $0x708] sm:$0xff]
    %v1157 = vld [vmem:[#allocation11 + $0x710] sm:$0xff]
    %v1158 = vld [vmem:[#allocation11 + $0x718] sm:$0xff]
    %v1159 = vld [vmem:[#allocation11 + $0x720] sm:$0xff]
    %v1160 = vld [vmem:[#allocation11 + $0x728] sm:$0xff]
    %v1161 = vld [vmem:[#allocation11 + $0x730] sm:$0xff]
    %v1162 = vld [vmem:[#allocation11 + $0x738] sm:$0xff]
    %v1163 = vld [vmem:[#allocation11 + $0x740] sm:$0xff]
    %v1164 = vld [vmem:[#allocation11 + $0x748] sm:$0xff]
    %v1165 = vld [vmem:[#allocation11 + $0x750] sm:$0xff]
    %v1166 = vld [vmem:[#allocation11 + $0x758] sm:$0xff]
    %v1167 = vld [vmem:[#allocation11 + $0x760] sm:$0xff]
    %v1168 = vld [vmem:[#allocation11 + $0x768] sm:$0xff]
    %v1169 = vld [vmem:[#allocation11 + $0x770] sm:$0xff]
    %v1170 = vld [vmem:[#allocation11 + $0x778] sm:$0xff]
    %v1171 = vld [vmem:[#allocation11 + $0x780] sm:$0xff]
    %v1172 = vld [vmem:[#allocation11 + $0x788] sm:$0xff]
    %v1173 = vld [vmem:[#allocation11 + $0x790] sm:$0xff]
    %v1174 = vld [vmem:[#allocation11 + $0x798] sm:$0xff]
    %v1175 = vld [vmem:[#allocation11 + $0x7a0] sm:$0xff]
    %v1176 = vld [vmem:[#allocation11 + $0x7a8] sm:$0xff]
    %v1177 = vld [vmem:[#allocation11 + $0x7b0] sm:$0xff]
    %v1178 = vld [vmem:[#allocation11 + $0x7b8] sm:$0xff]
    %v1179 = vld [vmem:[#allocation11 + $0x7c0] sm:$0xff]
    %v1180 = vld [vmem:[#allocation11 + $0x7c8] sm:$0xff]
    %v1181 = vld [vmem:[#allocation11 + $0x7d0] sm:$0xff]
    %v1182 = vld [vmem:[#allocation11 + $0x7d8] sm:$0xff]
    %v1183 = vld [vmem:[#allocation11 + $0x7e0] sm:$0xff]
    %v1184 = vld [vmem:[#allocation11 + $0x7e8] sm:$0xff]
    %v1185 = vld [vmem:[#allocation11 + $0x7f0] sm:$0xff]
    %v1186 = vld [vmem:[#allocation11 + $0x7f8] sm:$0xff]
    %v1187 = vld [vmem:[%s8] sm:$0xff]
    %v1189 = vlaneseq
    %v1190 = vshrl.u32 %v1189, 7
    %v1191 = vsub.s32 0, %v1190
    %v1192 = vrot.slane %v1187, %v1191
    %v1193 = vlaneseq
    %v1194 = vshrl.u32 %v1193, 7
    %v1195 = vsub.s32 1, %v1194
    %v1196 = vrot.slane %v1187, %v1195
    %v1197 = vlaneseq
    %v1198 = vshrl.u32 %v1197, 7
    %v1199 = vsub.s32 2, %v1198
    %v1200 = vrot.slane %v1187, %v1199
    %v1201 = vlaneseq
    %v1202 = vshrl.u32 %v1201, 7
    %v1203 = vsub.s32 3, %v1202
    %v1204 = vrot.slane %v1187, %v1203
    %v1205 = vlaneseq
    %v1206 = vshrl.u32 %v1205, 7
    %v1207 = vsub.s32 4, %v1206
    %v1208 = vrot.slane %v1187, %v1207
    %v1209 = vlaneseq
    %v1210 = vshrl.u32 %v1209, 7
    %v1211 = vsub.s32 5, %v1210
    %v1212 = vrot.slane %v1187, %v1211
    %v1213 = vlaneseq
    %v1214 = vshrl.u32 %v1213, 7
    %v1215 = vsub.s32 6, %v1214
    %v1216 = vrot.slane %v1187, %v1215
    %v1217 = vlaneseq
    %v1218 = vshrl.u32 %v1217, 7
    %v1219 = vsub.s32 7, %v1218
    %v1220 = vrot.slane %v1187, %v1219
    %v1485 = vunpack.c.l.b16 %v931
    %v1486 = vunpack.c.h.b16 %v931
    %v1487 = vunpack.c.l.b16 %v932
    %v1488 = vunpack.c.h.b16 %v932
    %v1489 = vunpack.c.l.b16 %v933
    %v1490 = vunpack.c.h.b16 %v933
    %v1491 = vunpack.c.l.b16 %v934
    %v1492 = vunpack.c.h.b16 %v934
    %v1493 = vunpack.c.l.b16 %v935
    %v1494 = vunpack.c.h.b16 %v935
    %v1495 = vunpack.c.l.b16 %v936
    %v1496 = vunpack.c.h.b16 %v936
    %v1497 = vunpack.c.l.b16 %v937
    %v1498 = vunpack.c.h.b16 %v937
    %v1499 = vunpack.c.l.b16 %v938
    %v1500 = vunpack.c.h.b16 %v938
    %v1501 = vunpack.c.l.b16 %v939
    %v1502 = vunpack.c.h.b16 %v939
    %v1503 = vunpack.c.l.b16 %v940
    %v1504 = vunpack.c.h.b16 %v940
    %v1505 = vunpack.c.l.b16 %v941
    %v1506 = vunpack.c.h.b16 %v941
    %v1507 = vunpack.c.l.b16 %v942
    %v1508 = vunpack.c.h.b16 %v942
    %v1509 = vunpack.c.l.b16 %v943
    %v1510 = vunpack.c.h.b16 %v943
    %v1511 = vunpack.c.l.b16 %v944
    %v1512 = vunpack.c.h.b16 %v944
    %v1513 = vunpack.c.l.b16 %v945
    %v1514 = vunpack.c.h.b16 %v945
    %v1515 = vunpack.c.l.b16 %v946
    %v1516 = vunpack.c.h.b16 %v946
    %v1517 = vunpack.c.l.b16 %v947
    %v1518 = vunpack.c.h.b16 %v947
    %v1519 = vunpack.c.l.b16 %v948
    %v1520 = vunpack.c.h.b16 %v948
    %v1521 = vunpack.c.l.b16 %v949
    %v1522 = vunpack.c.h.b16 %v949
    %v1523 = vunpack.c.l.b16 %v950
    %v1524 = vunpack.c.h.b16 %v950
    %v1525 = vunpack.c.l.b16 %v951
    %v1526 = vunpack.c.h.b16 %v951
    %v1527 = vunpack.c.l.b16 %v952
    %v1528 = vunpack.c.h.b16 %v952
    %v1529 = vunpack.c.l.b16 %v953
    %v1530 = vunpack.c.h.b16 %v953
    %v1531 = vunpack.c.l.b16 %v954
    %v1532 = vunpack.c.h.b16 %v954
    %v1533 = vunpack.c.l.b16 %v955
    %v1534 = vunpack.c.h.b16 %v955
    %v1535 = vunpack.c.l.b16 %v956
    %v1536 = vunpack.c.h.b16 %v956
    %v1537 = vunpack.c.l.b16 %v957
    %v1538 = vunpack.c.h.b16 %v957
    %v1539 = vunpack.c.l.b16 %v958
    %v1540 = vunpack.c.h.b16 %v958
    %v1541 = vunpack.c.l.b16 %v959
    %v1542 = vunpack.c.h.b16 %v959
    %v1543 = vunpack.c.l.b16 %v960
    %v1544 = vunpack.c.h.b16 %v960
    %v1545 = vunpack.c.l.b16 %v961
    %v1546 = vunpack.c.h.b16 %v961
    %v1547 = vunpack.c.l.b16 %v962
    %v1548 = vunpack.c.h.b16 %v962
    %v1549 = vunpack.c.l.b16 %v963
    %v1550 = vunpack.c.h.b16 %v963
    %v1551 = vunpack.c.l.b16 %v964
    %v1552 = vunpack.c.h.b16 %v964
    %v1553 = vunpack.c.l.b16 %v965
    %v1554 = vunpack.c.h.b16 %v965
    %v1555 = vunpack.c.l.b16 %v966
    %v1556 = vunpack.c.h.b16 %v966
    %v1557 = vunpack.c.l.b16 %v967
    %v1558 = vunpack.c.h.b16 %v967
    %v1559 = vunpack.c.l.b16 %v968
    %v1560 = vunpack.c.h.b16 %v968
    %v1561 = vunpack.c.l.b16 %v969
    %v1562 = vunpack.c.h.b16 %v969
    %v1563 = vunpack.c.l.b16 %v970
    %v1564 = vunpack.c.h.b16 %v970
    %v1565 = vunpack.c.l.b16 %v971
    %v1566 = vunpack.c.h.b16 %v971
    %v1567 = vunpack.c.l.b16 %v972
    %v1568 = vunpack.c.h.b16 %v972
    %v1569 = vunpack.c.l.b16 %v973
    %v1570 = vunpack.c.h.b16 %v973
    %v1571 = vunpack.c.l.b16 %v974
    %v1572 = vunpack.c.h.b16 %v974
    %v1573 = vunpack.c.l.b16 %v975
    %v1574 = vunpack.c.h.b16 %v975
    %v1575 = vunpack.c.l.b16 %v976
    %v1576 = vunpack.c.h.b16 %v976
    %v1577 = vunpack.c.l.b16 %v977
    %v1578 = vunpack.c.h.b16 %v977
    %v1579 = vunpack.c.l.b16 %v978
    %v1580 = vunpack.c.h.b16 %v978
    %v1581 = vunpack.c.l.b16 %v979
    %v1582 = vunpack.c.h.b16 %v979
    %v1583 = vunpack.c.l.b16 %v980
    %v1584 = vunpack.c.h.b16 %v980
    %v1585 = vunpack.c.l.b16 %v981
    %v1586 = vunpack.c.h.b16 %v981
    %v1587 = vunpack.c.l.b16 %v982
    %v1588 = vunpack.c.h.b16 %v982
    %v1589 = vunpack.c.l.b16 %v983
    %v1590 = vunpack.c.h.b16 %v983
    %v1591 = vunpack.c.l.b16 %v984
    %v1592 = vunpack.c.h.b16 %v984
    %v1593 = vunpack.c.l.b16 %v985
    %v1594 = vunpack.c.h.b16 %v985
    %v1595 = vunpack.c.l.b16 %v986
    %v1596 = vunpack.c.h.b16 %v986
    %v1597 = vunpack.c.l.b16 %v987
    %v1598 = vunpack.c.h.b16 %v987
    %v1599 = vunpack.c.l.b16 %v988
    %v1600 = vunpack.c.h.b16 %v988
    %v1601 = vunpack.c.l.b16 %v989
    %v1602 = vunpack.c.h.b16 %v989
    %v1603 = vunpack.c.l.b16 %v990
    %v1604 = vunpack.c.h.b16 %v990
    %v1605 = vunpack.c.l.b16 %v991
    %v1606 = vunpack.c.h.b16 %v991
    %v1607 = vunpack.c.l.b16 %v992
    %v1608 = vunpack.c.h.b16 %v992
    %v1609 = vunpack.c.l.b16 %v993
    %v1610 = vunpack.c.h.b16 %v993
    %v1611 = vunpack.c.l.b16 %v994
    %v1612 = vunpack.c.h.b16 %v994
    %v1613 = vunpack.c.l.b16 %v995
    %v1614 = vunpack.c.h.b16 %v995
    %v1615 = vunpack.c.l.b16 %v996
    %v1616 = vunpack.c.h.b16 %v996
    %v1617 = vunpack.c.l.b16 %v997
    %v1618 = vunpack.c.h.b16 %v997
    %v1619 = vunpack.c.l.b16 %v998
    %v1620 = vunpack.c.h.b16 %v998
    %v1621 = vunpack.c.l.b16 %v999
    %v1622 = vunpack.c.h.b16 %v999
    %v1623 = vunpack.c.l.b16 %v1000
    %v1624 = vunpack.c.h.b16 %v1000
    %v1625 = vunpack.c.l.b16 %v1001
    %v1626 = vunpack.c.h.b16 %v1001
    %v1627 = vunpack.c.l.b16 %v1002
    %v1628 = vunpack.c.h.b16 %v1002
    %v1629 = vunpack.c.l.b16 %v1003
    %v1630 = vunpack.c.h.b16 %v1003
    %v1631 = vunpack.c.l.b16 %v1004
    %v1632 = vunpack.c.h.b16 %v1004
    %v1633 = vunpack.c.l.b16 %v1005
    %v1634 = vunpack.c.h.b16 %v1005
    %v1635 = vunpack.c.l.b16 %v1006
    %v1636 = vunpack.c.h.b16 %v1006
    %v1637 = vunpack.c.l.b16 %v1007
    %v1638 = vunpack.c.h.b16 %v1007
    %v1639 = vunpack.c.l.b16 %v1008
    %v1640 = vunpack.c.h.b16 %v1008
    %v1641 = vunpack.c.l.b16 %v1009
    %v1642 = vunpack.c.h.b16 %v1009
    %v1643 = vunpack.c.l.b16 %v1010
    %v1644 = vunpack.c.h.b16 %v1010
    %v1645 = vunpack.c.l.b16 %v1011
    %v1646 = vunpack.c.h.b16 %v1011
    %v1647 = vunpack.c.l.b16 %v1012
    %v1648 = vunpack.c.h.b16 %v1012
    %v1649 = vunpack.c.l.b16 %v1013
    %v1650 = vunpack.c.h.b16 %v1013
    %v1651 = vunpack.c.l.b16 %v1014
    %v1652 = vunpack.c.h.b16 %v1014
    %v1653 = vunpack.c.l.b16 %v1015
    %v1654 = vunpack.c.h.b16 %v1015
    %v1655 = vunpack.c.l.b16 %v1016
    %v1656 = vunpack.c.h.b16 %v1016
    %v1657 = vunpack.c.l.b16 %v1017
    %v1658 = vunpack.c.h.b16 %v1017
    %v1659 = vunpack.c.l.b16 %v1018
    %v1660 = vunpack.c.h.b16 %v1018
    %v1661 = vunpack.c.l.b16 %v1019
    %v1662 = vunpack.c.h.b16 %v1019
    %v1663 = vunpack.c.l.b16 %v1020
    %v1664 = vunpack.c.h.b16 %v1020
    %v1665 = vunpack.c.l.b16 %v1021
    %v1666 = vunpack.c.h.b16 %v1021
    %v1667 = vunpack.c.l.b16 %v1022
    %v1668 = vunpack.c.h.b16 %v1022
    %v1669 = vunpack.c.l.b16 %v1023
    %v1670 = vunpack.c.h.b16 %v1023
    %v1671 = vunpack.c.l.b16 %v1024
    %v1672 = vunpack.c.h.b16 %v1024
    %v1673 = vunpack.c.l.b16 %v1025
    %v1674 = vunpack.c.h.b16 %v1025
    %v1675 = vunpack.c.l.b16 %v1026
    %v1676 = vunpack.c.h.b16 %v1026
    %v1677 = vunpack.c.l.b16 %v1027
    %v1678 = vunpack.c.h.b16 %v1027
    %v1679 = vunpack.c.l.b16 %v1028
    %v1680 = vunpack.c.h.b16 %v1028
    %v1681 = vunpack.c.l.b16 %v1029
    %v1682 = vunpack.c.h.b16 %v1029
    %v1683 = vunpack.c.l.b16 %v1030
    %v1684 = vunpack.c.h.b16 %v1030
    %v1685 = vunpack.c.l.b16 %v1031
    %v1686 = vunpack.c.h.b16 %v1031
    %v1687 = vunpack.c.l.b16 %v1032
    %v1688 = vunpack.c.h.b16 %v1032
    %v1689 = vunpack.c.l.b16 %v1033
    %v1690 = vunpack.c.h.b16 %v1033
    %v1691 = vunpack.c.l.b16 %v1034
    %v1692 = vunpack.c.h.b16 %v1034
    %v1693 = vunpack.c.l.b16 %v1035
    %v1694 = vunpack.c.h.b16 %v1035
    %v1695 = vunpack.c.l.b16 %v1036
    %v1696 = vunpack.c.h.b16 %v1036
    %v1697 = vunpack.c.l.b16 %v1037
    %v1698 = vunpack.c.h.b16 %v1037
    %v1699 = vunpack.c.l.b16 %v1038
    %v1700 = vunpack.c.h.b16 %v1038
    %v1701 = vunpack.c.l.b16 %v1039
    %v1702 = vunpack.c.h.b16 %v1039
    %v1703 = vunpack.c.l.b16 %v1040
    %v1704 = vunpack.c.h.b16 %v1040
    %v1705 = vunpack.c.l.b16 %v1041
    %v1706 = vunpack.c.h.b16 %v1041
    %v1707 = vunpack.c.l.b16 %v1042
    %v1708 = vunpack.c.h.b16 %v1042
    %v1709 = vunpack.c.l.b16 %v1043
    %v1710 = vunpack.c.h.b16 %v1043
    %v1711 = vunpack.c.l.b16 %v1044
    %v1712 = vunpack.c.h.b16 %v1044
    %v1713 = vunpack.c.l.b16 %v1045
    %v1714 = vunpack.c.h.b16 %v1045
    %v1715 = vunpack.c.l.b16 %v1046
    %v1716 = vunpack.c.h.b16 %v1046
    %v1717 = vunpack.c.l.b16 %v1047
    %v1718 = vunpack.c.h.b16 %v1047
    %v1719 = vunpack.c.l.b16 %v1048
    %v1720 = vunpack.c.h.b16 %v1048
    %v1721 = vunpack.c.l.b16 %v1049
    %v1722 = vunpack.c.h.b16 %v1049
    %v1723 = vunpack.c.l.b16 %v1050
    %v1724 = vunpack.c.h.b16 %v1050
    %v1725 = vunpack.c.l.b16 %v1051
    %v1726 = vunpack.c.h.b16 %v1051
    %v1727 = vunpack.c.l.b16 %v1052
    %v1728 = vunpack.c.h.b16 %v1052
    %v1729 = vunpack.c.l.b16 %v1053
    %v1730 = vunpack.c.h.b16 %v1053
    %v1731 = vunpack.c.l.b16 %v1054
    %v1732 = vunpack.c.h.b16 %v1054
    %v1733 = vunpack.c.l.b16 %v1055
    %v1734 = vunpack.c.h.b16 %v1055
    %v1735 = vunpack.c.l.b16 %v1056
    %v1736 = vunpack.c.h.b16 %v1056
    %v1737 = vunpack.c.l.b16 %v1057
    %v1738 = vunpack.c.h.b16 %v1057
    %v1739 = vunpack.c.l.b16 %v1058
    %v1740 = vunpack.c.h.b16 %v1058
    %v1741 = vunpack.c.l.b16 %v1059
    %v1742 = vunpack.c.h.b16 %v1059
    %v1743 = vunpack.c.l.b16 %v1060
    %v1744 = vunpack.c.h.b16 %v1060
    %v1745 = vunpack.c.l.b16 %v1061
    %v1746 = vunpack.c.h.b16 %v1061
    %v1747 = vunpack.c.l.b16 %v1062
    %v1748 = vunpack.c.h.b16 %v1062
    %v1749 = vunpack.c.l.b16 %v1063
    %v1750 = vunpack.c.h.b16 %v1063
    %v1751 = vunpack.c.l.b16 %v1064
    %v1752 = vunpack.c.h.b16 %v1064
    %v1753 = vunpack.c.l.b16 %v1065
    %v1754 = vunpack.c.h.b16 %v1065
    %v1755 = vunpack.c.l.b16 %v1066
    %v1756 = vunpack.c.h.b16 %v1066
    %v1757 = vunpack.c.l.b16 %v1067
    %v1758 = vunpack.c.h.b16 %v1067
    %v1759 = vunpack.c.l.b16 %v1068
    %v1760 = vunpack.c.h.b16 %v1068
    %v1761 = vunpack.c.l.b16 %v1069
    %v1762 = vunpack.c.h.b16 %v1069
    %v1763 = vunpack.c.l.b16 %v1070
    %v1764 = vunpack.c.h.b16 %v1070
    %v1765 = vunpack.c.l.b16 %v1071
    %v1766 = vunpack.c.h.b16 %v1071
    %v1767 = vunpack.c.l.b16 %v1072
    %v1768 = vunpack.c.h.b16 %v1072
    %v1769 = vunpack.c.l.b16 %v1073
    %v1770 = vunpack.c.h.b16 %v1073
    %v1771 = vunpack.c.l.b16 %v1074
    %v1772 = vunpack.c.h.b16 %v1074
    %v1773 = vunpack.c.l.b16 %v1075
    %v1774 = vunpack.c.h.b16 %v1075
    %v1775 = vunpack.c.l.b16 %v1076
    %v1776 = vunpack.c.h.b16 %v1076
    %v1777 = vunpack.c.l.b16 %v1077
    %v1778 = vunpack.c.h.b16 %v1077
    %v1779 = vunpack.c.l.b16 %v1078
    %v1780 = vunpack.c.h.b16 %v1078
    %v1781 = vunpack.c.l.b16 %v1079
    %v1782 = vunpack.c.h.b16 %v1079
    %v1783 = vunpack.c.l.b16 %v1080
    %v1784 = vunpack.c.h.b16 %v1080
    %v1785 = vunpack.c.l.b16 %v1081
    %v1786 = vunpack.c.h.b16 %v1081
    %v1787 = vunpack.c.l.b16 %v1082
    %v1788 = vunpack.c.h.b16 %v1082
    %v1789 = vunpack.c.l.b16 %v1083
    %v1790 = vunpack.c.h.b16 %v1083
    %v1791 = vunpack.c.l.b16 %v1084
    %v1792 = vunpack.c.h.b16 %v1084
    %v1793 = vunpack.c.l.b16 %v1085
    %v1794 = vunpack.c.h.b16 %v1085
    %v1795 = vunpack.c.l.b16 %v1086
    %v1796 = vunpack.c.h.b16 %v1086
    %v1797 = vunpack.c.l.b16 %v1087
    %v1798 = vunpack.c.h.b16 %v1087
    %v1799 = vunpack.c.l.b16 %v1088
    %v1800 = vunpack.c.h.b16 %v1088
    %v1801 = vunpack.c.l.b16 %v1089
    %v1802 = vunpack.c.h.b16 %v1089
    %v1803 = vunpack.c.l.b16 %v1090
    %v1804 = vunpack.c.h.b16 %v1090
    %v1805 = vunpack.c.l.b16 %v1091
    %v1806 = vunpack.c.h.b16 %v1091
    %v1807 = vunpack.c.l.b16 %v1092
    %v1808 = vunpack.c.h.b16 %v1092
    %v1809 = vunpack.c.l.b16 %v1093
    %v1810 = vunpack.c.h.b16 %v1093
    %v1811 = vunpack.c.l.b16 %v1094
    %v1812 = vunpack.c.h.b16 %v1094
    %v1813 = vunpack.c.l.b16 %v1095
    %v1814 = vunpack.c.h.b16 %v1095
    %v1815 = vunpack.c.l.b16 %v1096
    %v1816 = vunpack.c.h.b16 %v1096
    %v1817 = vunpack.c.l.b16 %v1097
    %v1818 = vunpack.c.h.b16 %v1097
    %v1819 = vunpack.c.l.b16 %v1098
    %v1820 = vunpack.c.h.b16 %v1098
    %v1821 = vunpack.c.l.b16 %v1099
    %v1822 = vunpack.c.h.b16 %v1099
    %v1823 = vunpack.c.l.b16 %v1100
    %v1824 = vunpack.c.h.b16 %v1100
    %v1825 = vunpack.c.l.b16 %v1101
    %v1826 = vunpack.c.h.b16 %v1101
    %v1827 = vunpack.c.l.b16 %v1102
    %v1828 = vunpack.c.h.b16 %v1102
    %v1829 = vunpack.c.l.b16 %v1103
    %v1830 = vunpack.c.h.b16 %v1103
    %v1831 = vunpack.c.l.b16 %v1104
    %v1832 = vunpack.c.h.b16 %v1104
    %v1833 = vunpack.c.l.b16 %v1105
    %v1834 = vunpack.c.h.b16 %v1105
    %v1835 = vunpack.c.l.b16 %v1106
    %v1836 = vunpack.c.h.b16 %v1106
    %v1837 = vunpack.c.l.b16 %v1107
    %v1838 = vunpack.c.h.b16 %v1107
    %v1839 = vunpack.c.l.b16 %v1108
    %v1840 = vunpack.c.h.b16 %v1108
    %v1841 = vunpack.c.l.b16 %v1109
    %v1842 = vunpack.c.h.b16 %v1109
    %v1843 = vunpack.c.l.b16 %v1110
    %v1844 = vunpack.c.h.b16 %v1110
    %v1845 = vunpack.c.l.b16 %v1111
    %v1846 = vunpack.c.h.b16 %v1111
    %v1847 = vunpack.c.l.b16 %v1112
    %v1848 = vunpack.c.h.b16 %v1112
    %v1849 = vunpack.c.l.b16 %v1113
    %v1850 = vunpack.c.h.b16 %v1113
    %v1851 = vunpack.c.l.b16 %v1114
    %v1852 = vunpack.c.h.b16 %v1114
    %v1853 = vunpack.c.l.b16 %v1115
    %v1854 = vunpack.c.h.b16 %v1115
    %v1855 = vunpack.c.l.b16 %v1116
    %v1856 = vunpack.c.h.b16 %v1116
    %v1857 = vunpack.c.l.b16 %v1117
    %v1858 = vunpack.c.h.b16 %v1117
    %v1859 = vunpack.c.l.b16 %v1118
    %v1860 = vunpack.c.h.b16 %v1118
    %v1861 = vunpack.c.l.b16 %v1119
    %v1862 = vunpack.c.h.b16 %v1119
    %v1863 = vunpack.c.l.b16 %v1120
    %v1864 = vunpack.c.h.b16 %v1120
    %v1865 = vunpack.c.l.b16 %v1121
    %v1866 = vunpack.c.h.b16 %v1121
    %v1867 = vunpack.c.l.b16 %v1122
    %v1868 = vunpack.c.h.b16 %v1122
    %v1869 = vunpack.c.l.b16 %v1123
    %v1870 = vunpack.c.h.b16 %v1123
    %v1871 = vunpack.c.l.b16 %v1124
    %v1872 = vunpack.c.h.b16 %v1124
    %v1873 = vunpack.c.l.b16 %v1125
    %v1874 = vunpack.c.h.b16 %v1125
    %v1875 = vunpack.c.l.b16 %v1126
    %v1876 = vunpack.c.h.b16 %v1126
    %v1877 = vunpack.c.l.b16 %v1127
    %v1878 = vunpack.c.h.b16 %v1127
    %v1879 = vunpack.c.l.b16 %v1128
    %v1880 = vunpack.c.h.b16 %v1128
    %v1881 = vunpack.c.l.b16 %v1129
    %v1882 = vunpack.c.h.b16 %v1129
    %v1883 = vunpack.c.l.b16 %v1130
    %v1884 = vunpack.c.h.b16 %v1130
    %v1885 = vunpack.c.l.b16 %v1131
    %v1886 = vunpack.c.h.b16 %v1131
    %v1887 = vunpack.c.l.b16 %v1132
    %v1888 = vunpack.c.h.b16 %v1132
    %v1889 = vunpack.c.l.b16 %v1133
    %v1890 = vunpack.c.h.b16 %v1133
    %v1891 = vunpack.c.l.b16 %v1134
    %v1892 = vunpack.c.h.b16 %v1134
    %v1893 = vunpack.c.l.b16 %v1135
    %v1894 = vunpack.c.h.b16 %v1135
    %v1895 = vunpack.c.l.b16 %v1136
    %v1896 = vunpack.c.h.b16 %v1136
    %v1897 = vunpack.c.l.b16 %v1137
    %v1898 = vunpack.c.h.b16 %v1137
    %v1899 = vunpack.c.l.b16 %v1138
    %v1900 = vunpack.c.h.b16 %v1138
    %v1901 = vunpack.c.l.b16 %v1139
    %v1902 = vunpack.c.h.b16 %v1139
    %v1903 = vunpack.c.l.b16 %v1140
    %v1904 = vunpack.c.h.b16 %v1140
    %v1905 = vunpack.c.l.b16 %v1141
    %v1906 = vunpack.c.h.b16 %v1141
    %v1907 = vunpack.c.l.b16 %v1142
    %v1908 = vunpack.c.h.b16 %v1142
    %v1909 = vunpack.c.l.b16 %v1143
    %v1910 = vunpack.c.h.b16 %v1143
    %v1911 = vunpack.c.l.b16 %v1144
    %v1912 = vunpack.c.h.b16 %v1144
    %v1913 = vunpack.c.l.b16 %v1145
    %v1914 = vunpack.c.h.b16 %v1145
    %v1915 = vunpack.c.l.b16 %v1146
    %v1916 = vunpack.c.h.b16 %v1146
    %v1917 = vunpack.c.l.b16 %v1147
    %v1918 = vunpack.c.h.b16 %v1147
    %v1919 = vunpack.c.l.b16 %v1148
    %v1920 = vunpack.c.h.b16 %v1148
    %v1921 = vunpack.c.l.b16 %v1149
    %v1922 = vunpack.c.h.b16 %v1149
    %v1923 = vunpack.c.l.b16 %v1150
    %v1924 = vunpack.c.h.b16 %v1150
    %v1925 = vunpack.c.l.b16 %v1151
    %v1926 = vunpack.c.h.b16 %v1151
    %v1927 = vunpack.c.l.b16 %v1152
    %v1928 = vunpack.c.h.b16 %v1152
    %v1929 = vunpack.c.l.b16 %v1153
    %v1930 = vunpack.c.h.b16 %v1153
    %v1931 = vunpack.c.l.b16 %v1154
    %v1932 = vunpack.c.h.b16 %v1154
    %v1933 = vunpack.c.l.b16 %v1155
    %v1934 = vunpack.c.h.b16 %v1155
    %v1935 = vunpack.c.l.b16 %v1156
    %v1936 = vunpack.c.h.b16 %v1156
    %v1937 = vunpack.c.l.b16 %v1157
    %v1938 = vunpack.c.h.b16 %v1157
    %v1939 = vunpack.c.l.b16 %v1158
    %v1940 = vunpack.c.h.b16 %v1158
    %v1941 = vunpack.c.l.b16 %v1159
    %v1942 = vunpack.c.h.b16 %v1159
    %v1943 = vunpack.c.l.b16 %v1160
    %v1944 = vunpack.c.h.b16 %v1160
    %v1945 = vunpack.c.l.b16 %v1161
    %v1946 = vunpack.c.h.b16 %v1161
    %v1947 = vunpack.c.l.b16 %v1162
    %v1948 = vunpack.c.h.b16 %v1162
    %v1949 = vunpack.c.l.b16 %v1163
    %v1950 = vunpack.c.h.b16 %v1163
    %v1951 = vunpack.c.l.b16 %v1164
    %v1952 = vunpack.c.h.b16 %v1164
    %v1953 = vunpack.c.l.b16 %v1165
    %v1954 = vunpack.c.h.b16 %v1165
    %v1955 = vunpack.c.l.b16 %v1166
    %v1956 = vunpack.c.h.b16 %v1166
    %v1957 = vunpack.c.l.b16 %v1167
    %v1958 = vunpack.c.h.b16 %v1167
    %v1959 = vunpack.c.l.b16 %v1168
    %v1960 = vunpack.c.h.b16 %v1168
    %v1961 = vunpack.c.l.b16 %v1169
    %v1962 = vunpack.c.h.b16 %v1169
    %v1963 = vunpack.c.l.b16 %v1170
    %v1964 = vunpack.c.h.b16 %v1170
    %v1965 = vunpack.c.l.b16 %v1171
    %v1966 = vunpack.c.h.b16 %v1171
    %v1967 = vunpack.c.l.b16 %v1172
    %v1968 = vunpack.c.h.b16 %v1172
    %v1969 = vunpack.c.l.b16 %v1173
    %v1970 = vunpack.c.h.b16 %v1173
    %v1971 = vunpack.c.l.b16 %v1174
    %v1972 = vunpack.c.h.b16 %v1174
    %v1973 = vunpack.c.l.b16 %v1175
    %v1974 = vunpack.c.h.b16 %v1175
    %v1975 = vunpack.c.l.b16 %v1176
    %v1976 = vunpack.c.h.b16 %v1176
    %v1977 = vunpack.c.l.b16 %v1177
    %v1978 = vunpack.c.h.b16 %v1177
    %v1979 = vunpack.c.l.b16 %v1178
    %v1980 = vunpack.c.h.b16 %v1178
    %v1981 = vunpack.c.l.b16 %v1179
    %v1982 = vunpack.c.h.b16 %v1179
    %v1983 = vunpack.c.l.b16 %v1180
    %v1984 = vunpack.c.h.b16 %v1180
    %v1985 = vunpack.c.l.b16 %v1181
    %v1986 = vunpack.c.h.b16 %v1181
    %v1987 = vunpack.c.l.b16 %v1182
    %v1988 = vunpack.c.h.b16 %v1182
    %v1989 = vunpack.c.l.b16 %v1183
    %v1990 = vunpack.c.h.b16 %v1183
    %v1991 = vunpack.c.l.b16 %v1184
    %v1992 = vunpack.c.h.b16 %v1184
    %v1993 = vunpack.c.l.b16 %v1185
    %v1994 = vunpack.c.h.b16 %v1185
    %v1995 = vunpack.c.l.b16 %v1186
    %v1996 = vunpack.c.h.b16 %v1186
    %v1997 = vpack.c.b16 %v1493, %v1485
    %v1998 = vpack.c.b16 %v1494, %v1486
    %v1999 = vpack.c.b16 %v1495, %v1487
    %v2000 = vpack.c.b16 %v1496, %v1488
    %v2001 = vpack.c.b16 %v1497, %v1489
    %v2002 = vpack.c.b16 %v1498, %v1490
    %v2003 = vpack.c.b16 %v1499, %v1491
    %v2004 = vpack.c.b16 %v1500, %v1492
    %v2005 = vpack.c.b16 %v1509, %v1501
    %v2006 = vpack.c.b16 %v1510, %v1502
    %v2007 = vpack.c.b16 %v1511, %v1503
    %v2008 = vpack.c.b16 %v1512, %v1504
    %v2009 = vpack.c.b16 %v1513, %v1505
    %v2010 = vpack.c.b16 %v1514, %v1506
    %v2011 = vpack.c.b16 %v1515, %v1507
    %v2012 = vpack.c.b16 %v1516, %v1508
    %v2013 = vpack.c.b16 %v1525, %v1517
    %v2014 = vpack.c.b16 %v1526, %v1518
    %v2015 = vpack.c.b16 %v1527, %v1519
    %v2016 = vpack.c.b16 %v1528, %v1520
    %v2017 = vpack.c.b16 %v1529, %v1521
    %v2018 = vpack.c.b16 %v1530, %v1522
    %v2019 = vpack.c.b16 %v1531, %v1523
    %v2020 = vpack.c.b16 %v1532, %v1524
    %v2021 = vpack.c.b16 %v1541, %v1533
    %v2022 = vpack.c.b16 %v1542, %v1534
    %v2023 = vpack.c.b16 %v1543, %v1535
    %v2024 = vpack.c.b16 %v1544, %v1536
    %v2025 = vpack.c.b16 %v1545, %v1537
    %v2026 = vpack.c.b16 %v1546, %v1538
    %v2027 = vpack.c.b16 %v1547, %v1539
    %v2028 = vpack.c.b16 %v1548, %v1540
    %v2029 = vpack.c.b16 %v1557, %v1549
    %v2030 = vpack.c.b16 %v1558, %v1550
    %v2031 = vpack.c.b16 %v1559, %v1551
    %v2032 = vpack.c.b16 %v1560, %v1552
    %v2033 = vpack.c.b16 %v1561, %v1553
    %v2034 = vpack.c.b16 %v1562, %v1554
    %v2035 = vpack.c.b16 %v1563, %v1555
    %v2036 = vpack.c.b16 %v1564, %v1556
    %v2037 = vpack.c.b16 %v1573, %v1565
    %v2038 = vpack.c.b16 %v1574, %v1566
    %v2039 = vpack.c.b16 %v1575, %v1567
    %v2040 = vpack.c.b16 %v1576, %v1568
    %v2041 = vpack.c.b16 %v1577, %v1569
    %v2042 = vpack.c.b16 %v1578, %v1570
    %v2043 = vpack.c.b16 %v1579, %v1571
    %v2044 = vpack.c.b16 %v1580, %v1572
    %v2045 = vpack.c.b16 %v1589, %v1581
    %v2046 = vpack.c.b16 %v1590, %v1582
    %v2047 = vpack.c.b16 %v1591, %v1583
    %v2048 = vpack.c.b16 %v1592, %v1584
    %v2049 = vpack.c.b16 %v1593, %v1585
    %v2050 = vpack.c.b16 %v1594, %v1586
    %v2051 = vpack.c.b16 %v1595, %v1587
    %v2052 = vpack.c.b16 %v1596, %v1588
    %v2053 = vpack.c.b16 %v1605, %v1597
    %v2054 = vpack.c.b16 %v1606, %v1598
    %v2055 = vpack.c.b16 %v1607, %v1599
    %v2056 = vpack.c.b16 %v1608, %v1600
    %v2057 = vpack.c.b16 %v1609, %v1601
    %v2058 = vpack.c.b16 %v1610, %v1602
    %v2059 = vpack.c.b16 %v1611, %v1603
    %v2060 = vpack.c.b16 %v1612, %v1604
    %v2061 = vpack.c.b16 %v1621, %v1613
    %v2062 = vpack.c.b16 %v1622, %v1614
    %v2063 = vpack.c.b16 %v1623, %v1615
    %v2064 = vpack.c.b16 %v1624, %v1616
    %v2065 = vpack.c.b16 %v1625, %v1617
    %v2066 = vpack.c.b16 %v1626, %v1618
    %v2067 = vpack.c.b16 %v1627, %v1619
    %v2068 = vpack.c.b16 %v1628, %v1620
    %v2069 = vpack.c.b16 %v1637, %v1629
    %v2070 = vpack.c.b16 %v1638, %v1630
    %v2071 = vpack.c.b16 %v1639, %v1631
    %v2072 = vpack.c.b16 %v1640, %v1632
    %v2073 = vpack.c.b16 %v1641, %v1633
    %v2074 = vpack.c.b16 %v1642, %v1634
    %v2075 = vpack.c.b16 %v1643, %v1635
    %v2076 = vpack.c.b16 %v1644, %v1636
    %v2077 = vpack.c.b16 %v1653, %v1645
    %v2078 = vpack.c.b16 %v1654, %v1646
    %v2079 = vpack.c.b16 %v1655, %v1647
    %v2080 = vpack.c.b16 %v1656, %v1648
    %v2081 = vpack.c.b16 %v1657, %v1649
    %v2082 = vpack.c.b16 %v1658, %v1650
    %v2083 = vpack.c.b16 %v1659, %v1651
    %v2084 = vpack.c.b16 %v1660, %v1652
    %v2085 = vpack.c.b16 %v1669, %v1661
    %v2086 = vpack.c.b16 %v1670, %v1662
    %v2087 = vpack.c.b16 %v1671, %v1663
    %v2088 = vpack.c.b16 %v1672, %v1664
    %v2089 = vpack.c.b16 %v1673, %v1665
    %v2090 = vpack.c.b16 %v1674, %v1666
    %v2091 = vpack.c.b16 %v1675, %v1667
    %v2092 = vpack.c.b16 %v1676, %v1668
    %v2093 = vpack.c.b16 %v1685, %v1677
    %v2094 = vpack.c.b16 %v1686, %v1678
    %v2095 = vpack.c.b16 %v1687, %v1679
    %v2096 = vpack.c.b16 %v1688, %v1680
    %v2097 = vpack.c.b16 %v1689, %v1681
    %v2098 = vpack.c.b16 %v1690, %v1682
    %v2099 = vpack.c.b16 %v1691, %v1683
    %v2100 = vpack.c.b16 %v1692, %v1684
    %v2101 = vpack.c.b16 %v1701, %v1693
    %v2102 = vpack.c.b16 %v1702, %v1694
    %v2103 = vpack.c.b16 %v1703, %v1695
    %v2104 = vpack.c.b16 %v1704, %v1696
    %v2105 = vpack.c.b16 %v1705, %v1697
    %v2106 = vpack.c.b16 %v1706, %v1698
    %v2107 = vpack.c.b16 %v1707, %v1699
    %v2108 = vpack.c.b16 %v1708, %v1700
    %v2109 = vpack.c.b16 %v1717, %v1709
    %v2110 = vpack.c.b16 %v1718, %v1710
    %v2111 = vpack.c.b16 %v1719, %v1711
    %v2112 = vpack.c.b16 %v1720, %v1712
    %v2113 = vpack.c.b16 %v1721, %v1713
    %v2114 = vpack.c.b16 %v1722, %v1714
    %v2115 = vpack.c.b16 %v1723, %v1715
    %v2116 = vpack.c.b16 %v1724, %v1716
    %v2117 = vpack.c.b16 %v1733, %v1725
    %v2118 = vpack.c.b16 %v1734, %v1726
    %v2119 = vpack.c.b16 %v1735, %v1727
    %v2120 = vpack.c.b16 %v1736, %v1728
    %v2121 = vpack.c.b16 %v1737, %v1729
    %v2122 = vpack.c.b16 %v1738, %v1730
    %v2123 = vpack.c.b16 %v1739, %v1731
    %v2124 = vpack.c.b16 %v1740, %v1732
    %v2125 = vpack.c.b16 %v1749, %v1741
    %v2126 = vpack.c.b16 %v1750, %v1742
    %v2127 = vpack.c.b16 %v1751, %v1743
    %v2128 = vpack.c.b16 %v1752, %v1744
    %v2129 = vpack.c.b16 %v1753, %v1745
    %v2130 = vpack.c.b16 %v1754, %v1746
    %v2131 = vpack.c.b16 %v1755, %v1747
    %v2132 = vpack.c.b16 %v1756, %v1748
    %v2133 = vpack.c.b16 %v1765, %v1757
    %v2134 = vpack.c.b16 %v1766, %v1758
    %v2135 = vpack.c.b16 %v1767, %v1759
    %v2136 = vpack.c.b16 %v1768, %v1760
    %v2137 = vpack.c.b16 %v1769, %v1761
    %v2138 = vpack.c.b16 %v1770, %v1762
    %v2139 = vpack.c.b16 %v1771, %v1763
    %v2140 = vpack.c.b16 %v1772, %v1764
    %v2141 = vpack.c.b16 %v1781, %v1773
    %v2142 = vpack.c.b16 %v1782, %v1774
    %v2143 = vpack.c.b16 %v1783, %v1775
    %v2144 = vpack.c.b16 %v1784, %v1776
    %v2145 = vpack.c.b16 %v1785, %v1777
    %v2146 = vpack.c.b16 %v1786, %v1778
    %v2147 = vpack.c.b16 %v1787, %v1779
    %v2148 = vpack.c.b16 %v1788, %v1780
    %v2149 = vpack.c.b16 %v1797, %v1789
    %v2150 = vpack.c.b16 %v1798, %v1790
    %v2151 = vpack.c.b16 %v1799, %v1791
    %v2152 = vpack.c.b16 %v1800, %v1792
    %v2153 = vpack.c.b16 %v1801, %v1793
    %v2154 = vpack.c.b16 %v1802, %v1794
    %v2155 = vpack.c.b16 %v1803, %v1795
    %v2156 = vpack.c.b16 %v1804, %v1796
    %v2157 = vpack.c.b16 %v1813, %v1805
    %v2158 = vpack.c.b16 %v1814, %v1806
    %v2159 = vpack.c.b16 %v1815, %v1807
    %v2160 = vpack.c.b16 %v1816, %v1808
    %v2161 = vpack.c.b16 %v1817, %v1809
    %v2162 = vpack.c.b16 %v1818, %v1810
    %v2163 = vpack.c.b16 %v1819, %v1811
    %v2164 = vpack.c.b16 %v1820, %v1812
    %v2165 = vpack.c.b16 %v1829, %v1821
    %v2166 = vpack.c.b16 %v1830, %v1822
    %v2167 = vpack.c.b16 %v1831, %v1823
    %v2168 = vpack.c.b16 %v1832, %v1824
    %v2169 = vpack.c.b16 %v1833, %v1825
    %v2170 = vpack.c.b16 %v1834, %v1826
    %v2171 = vpack.c.b16 %v1835, %v1827
    %v2172 = vpack.c.b16 %v1836, %v1828
    %v2173 = vpack.c.b16 %v1845, %v1837
    %v2174 = vpack.c.b16 %v1846, %v1838
    %v2175 = vpack.c.b16 %v1847, %v1839
    %v2176 = vpack.c.b16 %v1848, %v1840
    %v2177 = vpack.c.b16 %v1849, %v1841
    %v2178 = vpack.c.b16 %v1850, %v1842
    %v2179 = vpack.c.b16 %v1851, %v1843
    %v2180 = vpack.c.b16 %v1852, %v1844
    %v2181 = vpack.c.b16 %v1861, %v1853
    %v2182 = vpack.c.b16 %v1862, %v1854
    %v2183 = vpack.c.b16 %v1863, %v1855
    %v2184 = vpack.c.b16 %v1864, %v1856
    %v2185 = vpack.c.b16 %v1865, %v1857
    %v2186 = vpack.c.b16 %v1866, %v1858
    %v2187 = vpack.c.b16 %v1867, %v1859
    %v2188 = vpack.c.b16 %v1868, %v1860
    %v2189 = vpack.c.b16 %v1877, %v1869
    %v2190 = vpack.c.b16 %v1878, %v1870
    %v2191 = vpack.c.b16 %v1879, %v1871
    %v2192 = vpack.c.b16 %v1880, %v1872
    %v2193 = vpack.c.b16 %v1881, %v1873
    %v2194 = vpack.c.b16 %v1882, %v1874
    %v2195 = vpack.c.b16 %v1883, %v1875
    %v2196 = vpack.c.b16 %v1884, %v1876
    %v2197 = vpack.c.b16 %v1893, %v1885
    %v2198 = vpack.c.b16 %v1894, %v1886
    %v2199 = vpack.c.b16 %v1895, %v1887
    %v2200 = vpack.c.b16 %v1896, %v1888
    %v2201 = vpack.c.b16 %v1897, %v1889
    %v2202 = vpack.c.b16 %v1898, %v1890
    %v2203 = vpack.c.b16 %v1899, %v1891
    %v2204 = vpack.c.b16 %v1900, %v1892
    %v2205 = vpack.c.b16 %v1909, %v1901
    %v2206 = vpack.c.b16 %v1910, %v1902
    %v2207 = vpack.c.b16 %v1911, %v1903
    %v2208 = vpack.c.b16 %v1912, %v1904
    %v2209 = vpack.c.b16 %v1913, %v1905
    %v2210 = vpack.c.b16 %v1914, %v1906
    %v2211 = vpack.c.b16 %v1915, %v1907
    %v2212 = vpack.c.b16 %v1916, %v1908
    %v2213 = vpack.c.b16 %v1925, %v1917
    %v2214 = vpack.c.b16 %v1926, %v1918
    %v2215 = vpack.c.b16 %v1927, %v1919
    %v2216 = vpack.c.b16 %v1928, %v1920
    %v2217 = vpack.c.b16 %v1929, %v1921
    %v2218 = vpack.c.b16 %v1930, %v1922
    %v2219 = vpack.c.b16 %v1931, %v1923
    %v2220 = vpack.c.b16 %v1932, %v1924
    %v2221 = vpack.c.b16 %v1941, %v1933
    %v2222 = vpack.c.b16 %v1942, %v1934
    %v2223 = vpack.c.b16 %v1943, %v1935
    %v2224 = vpack.c.b16 %v1944, %v1936
    %v2225 = vpack.c.b16 %v1945, %v1937
    %v2226 = vpack.c.b16 %v1946, %v1938
    %v2227 = vpack.c.b16 %v1947, %v1939
    %v2228 = vpack.c.b16 %v1948, %v1940
    %v2229 = vpack.c.b16 %v1957, %v1949
    %v2230 = vpack.c.b16 %v1958, %v1950
    %v2231 = vpack.c.b16 %v1959, %v1951
    %v2232 = vpack.c.b16 %v1960, %v1952
    %v2233 = vpack.c.b16 %v1961, %v1953
    %v2234 = vpack.c.b16 %v1962, %v1954
    %v2235 = vpack.c.b16 %v1963, %v1955
    %v2236 = vpack.c.b16 %v1964, %v1956
    %v2237 = vpack.c.b16 %v1973, %v1965
    %v2238 = vpack.c.b16 %v1974, %v1966
    %v2239 = vpack.c.b16 %v1975, %v1967
    %v2240 = vpack.c.b16 %v1976, %v1968
    %v2241 = vpack.c.b16 %v1977, %v1969
    %v2242 = vpack.c.b16 %v1978, %v1970
    %v2243 = vpack.c.b16 %v1979, %v1971
    %v2244 = vpack.c.b16 %v1980, %v1972
    %v2245 = vpack.c.b16 %v1989, %v1981
    %v2246 = vpack.c.b16 %v1990, %v1982
    %v2247 = vpack.c.b16 %v1991, %v1983
    %v2248 = vpack.c.b16 %v1992, %v1984
    %v2249 = vpack.c.b16 %v1993, %v1985
    %v2250 = vpack.c.b16 %v1994, %v1986
    %v2251 = vpack.c.b16 %v1995, %v1987
    %v2252 = vpack.c.b16 %v1996, %v1988
    %2509 = vmatprep.subr.bf16.mxu0 %v2054
    %2510 = vmatpush1.bf16.msra.mxu0 %v2053
    %2511 = vmatprep.subr.bf16.mxu0 %v2046
    %2512 = vmatpush1.bf16.msra.mxu0 %v2045
    %2513 = vmatprep.subr.bf16.mxu0 %v2038
    %2514 = vmatpush1.bf16.msra.mxu0 %v2037
    %2515 = vmatprep.subr.bf16.mxu0 %v2030
    %2516 = vmatpush1.bf16.msra.mxu0 %v2029
    %2517 = vmatprep.subr.bf16.mxu0 %v2022
    %2518 = vmatpush1.bf16.msra.mxu0 %v2021
    %2519 = vmatprep.subr.bf16.mxu0 %v2014
    %2520 = vmatpush1.bf16.msra.mxu0 %v2013
    %2521 = vmatprep.subr.bf16.mxu0 %v2006
    %2522 = vmatpush1.bf16.msra.mxu0 %v2005
    %2523 = vmatprep.subr.bf16.mxu0 %v1998
    %2524 = vmatpush1.bf16.msra.mxu0 %v1997
    %2525 = vmatprep.subr.bf16.mxu0 %v2118
    %2526 = vmatpush2.bf16.msra.mxu0 %v2117
    %2527 = vmatprep.subr.bf16.mxu0 %v2110
    %2528 = vmatpush2.bf16.msra.mxu0 %v2109
    %2529 = vmatprep.subr.bf16.mxu0 %v2102
    %2530 = vmatpush2.bf16.msra.mxu0 %v2101
    %2531 = vmatprep.subr.bf16.mxu0 %v2094
    %2532 = vmatpush2.bf16.msra.mxu0 %v2093
    %2533 = vmatprep.subr.bf16.mxu0 %v2086
    %2534 = vmatpush2.bf16.msra.mxu0 %v2085
    %2535 = vmatprep.subr.bf16.mxu0 %v2078
    %2536 = vmatpush2.bf16.msra.mxu0 %v2077
    %2537 = vmatprep.subr.bf16.mxu0 %v2070
    %2538 = vmatpush2.bf16.msra.mxu0 %v2069
    %2539 = vmatprep.subr.bf16.mxu0 %v2062
    %2540 = vmatpush2.bf16.msra.mxu0 %v2061
    %2541 = vmatprep.mubr.bf16.mxu0 %v928
    %2542 = vmatmul.mubr.bf16.gmra.mxu0 %v927
    %v2543 = vpop.f32.mrf.mxu0
    %v2544 = vadd.f32 %v1192, %v2543
    %v2545 = vpop.f32.mrf.mxu0
    %v2546 = vadd.f32 %v1196, %v2545
    %v2547 = vpop.f32.mrf.mxu0
    %v2548 = vadd.f32 %v1192, %v2547
    %v2549 = vpop.f32.mrf.mxu0
    %v2550 = vadd.f32 %v1196, %v2549
    %2551 = vdwg.mxu0
    %2552 = vmatprep.subr.bf16.mxu0 %v2182
    %2553 = vmatpush1.bf16.msra.mxu0 %v2181
    %2554 = vmatprep.subr.bf16.mxu0 %v2174
    %2555 = vmatpush1.bf16.msra.mxu0 %v2173
    %2556 = vmatprep.subr.bf16.mxu0 %v2166
    %2557 = vmatpush1.bf16.msra.mxu0 %v2165
    %2558 = vmatprep.subr.bf16.mxu0 %v2158
    %2559 = vmatpush1.bf16.msra.mxu0 %v2157
    %2560 = vmatprep.subr.bf16.mxu0 %v2150
    %2561 = vmatpush1.bf16.msra.mxu0 %v2149
    %2562 = vmatprep.subr.bf16.mxu0 %v2142
    %2563 = vmatpush1.bf16.msra.mxu0 %v2141
    %2564 = vmatprep.subr.bf16.mxu0 %v2134
    %2565 = vmatpush1.bf16.msra.mxu0 %v2133
    %2566 = vmatprep.subr.bf16.mxu0 %v2126
    %2567 = vmatpush1.bf16.msra.mxu0 %v2125
    %2568 = vmatprep.subr.bf16.mxu0 %v2246
    %2569 = vmatpush2.bf16.msra.mxu0 %v2245
    %2570 = vmatprep.subr.bf16.mxu0 %v2238
    %2571 = vmatpush2.bf16.msra.mxu0 %v2237
    %2572 = vmatprep.subr.bf16.mxu0 %v2230
    %2573 = vmatpush2.bf16.msra.mxu0 %v2229
    %2574 = vmatprep.subr.bf16.mxu0 %v2222
    %2575 = vmatpush2.bf16.msra.mxu0 %v2221
    %2576 = vmatprep.subr.bf16.mxu0 %v2214
    %2577 = vmatpush2.bf16.msra.mxu0 %v2213
    %2578 = vmatprep.subr.bf16.mxu0 %v2206
    %2579 = vmatpush2.bf16.msra.mxu0 %v2205
    %2580 = vmatprep.subr.bf16.mxu0 %v2198
    %2581 = vmatpush2.bf16.msra.mxu0 %v2197
    %2582 = vmatprep.subr.bf16.mxu0 %v2190
    %2583 = vmatpush2.bf16.msra.mxu0 %v2189
    %2584 = vmatprep.mubr.bf16.mxu0 %v930
    %2585 = vmatmul.mubr.bf16.gmra.mxu0 %v929
    %v2586 = vpop.f32.mrf.mxu0
    %v2587 = vadd.f32 %v2544, %v2586
    %v2588 = vpop.f32.mrf.mxu0
    %v2589 = vadd.f32 %v2546, %v2588
    %v2590 = vpop.f32.mrf.mxu0
    %v2591 = vadd.f32 %v2548, %v2590
    %v2592 = vpop.f32.mrf.mxu0
    %v2593 = vadd.f32 %v2550, %v2592
    %2594 = vdwg.mxu0
    %2595 = vmatprep.subr.bf16.mxu0 %v2056
    %2596 = vmatpush1.bf16.msra.mxu0 %v2055
    %2597 = vmatprep.subr.bf16.mxu0 %v2048
    %2598 = vmatpush1.bf16.msra.mxu0 %v2047
    %2599 = vmatprep.subr.bf16.mxu0 %v2040
    %2600 = vmatpush1.bf16.msra.mxu0 %v2039
    %2601 = vmatprep.subr.bf16.mxu0 %v2032
    %2602 = vmatpush1.bf16.msra.mxu0 %v2031
    %2603 = vmatprep.subr.bf16.mxu0 %v2024
    %2604 = vmatpush1.bf16.msra.mxu0 %v2023
    %2605 = vmatprep.subr.bf16.mxu0 %v2016
    %2606 = vmatpush1.bf16.msra.mxu0 %v2015
    %2607 = vmatprep.subr.bf16.mxu0 %v2008
    %2608 = vmatpush1.bf16.msra.mxu0 %v2007
    %2609 = vmatprep.subr.bf16.mxu0 %v2000
    %2610 = vmatpush1.bf16.msra.mxu0 %v1999
    %2611 = vmatprep.subr.bf16.mxu0 %v2120
    %2612 = vmatpush2.bf16.msra.mxu0 %v2119
    %2613 = vmatprep.subr.bf16.mxu0 %v2112
    %2614 = vmatpush2.bf16.msra.mxu0 %v2111
    %2615 = vmatprep.subr.bf16.mxu0 %v2104
    %2616 = vmatpush2.bf16.msra.mxu0 %v2103
    %2617 = vmatprep.subr.bf16.mxu0 %v2096
    %2618 = vmatpush2.bf16.msra.mxu0 %v2095
    %2619 = vmatprep.subr.bf16.mxu0 %v2088
    %2620 = vmatpush2.bf16.msra.mxu0 %v2087
    %2621 = vmatprep.subr.bf16.mxu0 %v2080
    %2622 = vmatpush2.bf16.msra.mxu0 %v2079
    %2623 = vmatprep.subr.bf16.mxu0 %v2072
    %2624 = vmatpush2.bf16.msra.mxu0 %v2071
    %2625 = vmatprep.subr.bf16.mxu0 %v2064
    %2626 = vmatpush2.bf16.msra.mxu0 %v2063
    %2627 = vmatprep.mubr.bf16.mxu0 %v928
    %2628 = vmatmul.mubr.bf16.gmra.mxu0 %v927
    %v2629 = vpop.f32.mrf.mxu0
    %v2630 = vadd.f32 %v1200, %v2629
    %v2631 = vpop.f32.mrf.mxu0
    %v2632 = vadd.f32 %v1204, %v2631
    %v2633 = vpop.f32.mrf.mxu0
    %v2634 = vadd.f32 %v1200, %v2633
    %v2635 = vpop.f32.mrf.mxu0
    %v2636 = vadd.f32 %v1204, %v2635
    %2637 = vdwg.mxu0
    %2638 = vmatprep.subr.bf16.mxu0 %v2184
    %2639 = vmatpush1.bf16.msra.mxu0 %v2183
    %2640 = vmatprep.subr.bf16.mxu0 %v2176
    %2641 = vmatpush1.bf16.msra.mxu0 %v2175
    %2642 = vmatprep.subr.bf16.mxu0 %v2168
    %2643 = vmatpush1.bf16.msra.mxu0 %v2167
    %2644 = vmatprep.subr.bf16.mxu0 %v2160
    %2645 = vmatpush1.bf16.msra.mxu0 %v2159
    %2646 = vmatprep.subr.bf16.mxu0 %v2152
    %2647 = vmatpush1.bf16.msra.mxu0 %v2151
    %2648 = vmatprep.subr.bf16.mxu0 %v2144
    %2649 = vmatpush1.bf16.msra.mxu0 %v2143
    %2650 = vmatprep.subr.bf16.mxu0 %v2136
    %2651 = vmatpush1.bf16.msra.mxu0 %v2135
    %2652 = vmatprep.subr.bf16.mxu0 %v2128
    %2653 = vmatpush1.bf16.msra.mxu0 %v2127
    %2654 = vmatprep.subr.bf16.mxu0 %v2248
    %2655 = vmatpush2.bf16.msra.mxu0 %v2247
    %2656 = vmatprep.subr.bf16.mxu0 %v2240
    %2657 = vmatpush2.bf16.msra.mxu0 %v2239
    %2658 = vmatprep.subr.bf16.mxu0 %v2232
    %2659 = vmatpush2.bf16.msra.mxu0 %v2231
    %2660 = vmatprep.subr.bf16.mxu0 %v2224
    %2661 = vmatpush2.bf16.msra.mxu0 %v2223
    %2662 = vmatprep.subr.bf16.mxu0 %v2216
    %2663 = vmatpush2.bf16.msra.mxu0 %v2215
    %2664 = vmatprep.subr.bf16.mxu0 %v2208
    %2665 = vmatpush2.bf16.msra.mxu0 %v2207
    %2666 = vmatprep.subr.bf16.mxu0 %v2200
    %2667 = vmatpush2.bf16.msra.mxu0 %v2199
    %2668 = vmatprep.subr.bf16.mxu0 %v2192
    %2669 = vmatpush2.bf16.msra.mxu0 %v2191
    %2670 = vmatprep.mubr.bf16.mxu0 %v930
    %2671 = vmatmul.mubr.bf16.gmra.mxu0 %v929
    %v2672 = vpop.f32.mrf.mxu0
    %v2673 = vadd.f32 %v2630, %v2672
    %v2674 = vpop.f32.mrf.mxu0
    %v2675 = vadd.f32 %v2632, %v2674
    %v2676 = vpop.f32.mrf.mxu0
    %v2677 = vadd.f32 %v2634, %v2676
    %v2678 = vpop.f32.mrf.mxu0
    %v2679 = vadd.f32 %v2636, %v2678
    %2680 = vdwg.mxu0
    %2681 = vmatprep.subr.bf16.mxu0 %v2058
    %2682 = vmatpush1.bf16.msra.mxu0 %v2057
    %2683 = vmatprep.subr.bf16.mxu0 %v2050
    %2684 = vmatpush1.bf16.msra.mxu0 %v2049
    %2685 = vmatprep.subr.bf16.mxu0 %v2042
    %2686 = vmatpush1.bf16.msra.mxu0 %v2041
    %2687 = vmatprep.subr.bf16.mxu0 %v2034
    %2688 = vmatpush1.bf16.msra.mxu0 %v2033
    %2689 = vmatprep.subr.bf16.mxu0 %v2026
    %2690 = vmatpush1.bf16.msra.mxu0 %v2025
    %2691 = vmatprep.subr.bf16.mxu0 %v2018
    %2692 = vmatpush1.bf16.msra.mxu0 %v2017
    %2693 = vmatprep.subr.bf16.mxu0 %v2010
    %2694 = vmatpush1.bf16.msra.mxu0 %v2009
    %2695 = vmatprep.subr.bf16.mxu0 %v2002
    %2696 = vmatpush1.bf16.msra.mxu0 %v2001
    %2697 = vmatprep.subr.bf16.mxu0 %v2122
    %2698 = vmatpush2.bf16.msra.mxu0 %v2121
    %2699 = vmatprep.subr.bf16.mxu0 %v2114
    %2700 = vmatpush2.bf16.msra.mxu0 %v2113
    %2701 = vmatprep.subr.bf16.mxu0 %v2106
    %2702 = vmatpush2.bf16.msra.mxu0 %v2105
    %2703 = vmatprep.subr.bf16.mxu0 %v2098
    %2704 = vmatpush2.bf16.msra.mxu0 %v2097
    %2705 = vmatprep.subr.bf16.mxu0 %v2090
    %2706 = vmatpush2.bf16.msra.mxu0 %v2089
    %2707 = vmatprep.subr.bf16.mxu0 %v2082
    %2708 = vmatpush2.bf16.msra.mxu0 %v2081
    %2709 = vmatprep.subr.bf16.mxu0 %v2074
    %2710 = vmatpush2.bf16.msra.mxu0 %v2073
    %2711 = vmatprep.subr.bf16.mxu0 %v2066
    %2712 = vmatpush2.bf16.msra.mxu0 %v2065
    %2713 = vmatprep.mubr.bf16.mxu0 %v928
    %2714 = vmatmul.mubr.bf16.gmra.mxu0 %v927
    %v2715 = vpop.f32.mrf.mxu0
    %v2716 = vadd.f32 %v1208, %v2715
    %v2717 = vpop.f32.mrf.mxu0
    %v2718 = vadd.f32 %v1212, %v2717
    %v2719 = vpop.f32.mrf.mxu0
    %v2720 = vadd.f32 %v1208, %v2719
    %v2721 = vpop.f32.mrf.mxu0
    %v2722 = vadd.f32 %v1212, %v2721
    %2723 = vdwg.mxu0
    %2724 = vmatprep.subr.bf16.mxu0 %v2186
    %2725 = vmatpush1.bf16.msra.mxu0 %v2185
    %2726 = vmatprep.subr.bf16.mxu0 %v2178
    %2727 = vmatpush1.bf16.msra.mxu0 %v2177
    %2728 = vmatprep.subr.bf16.mxu0 %v2170
    %2729 = vmatpush1.bf16.msra.mxu0 %v2169
    %2730 = vmatprep.subr.bf16.mxu0 %v2162
    %2731 = vmatpush1.bf16.msra.mxu0 %v2161
    %2732 = vmatprep.subr.bf16.mxu0 %v2154
    %2733 = vmatpush1.bf16.msra.mxu0 %v2153
    %2734 = vmatprep.subr.bf16.mxu0 %v2146
    %2735 = vmatpush1.bf16.msra.mxu0 %v2145
    %2736 = vmatprep.subr.bf16.mxu0 %v2138
    %2737 = vmatpush1.bf16.msra.mxu0 %v2137
    %2738 = vmatprep.subr.bf16.mxu0 %v2130
    %2739 = vmatpush1.bf16.msra.mxu0 %v2129
    %2740 = vmatprep.subr.bf16.mxu0 %v2250
    %2741 = vmatpush2.bf16.msra.mxu0 %v2249
    %2742 = vmatprep.subr.bf16.mxu0 %v2242
    %2743 = vmatpush2.bf16.msra.mxu0 %v2241
    %2744 = vmatprep.subr.bf16.mxu0 %v2234
    %2745 = vmatpush2.bf16.msra.mxu0 %v2233
    %2746 = vmatprep.subr.bf16.mxu0 %v2226
    %2747 = vmatpush2.bf16.msra.mxu0 %v2225
    %2748 = vmatprep.subr.bf16.mxu0 %v2218
    %2749 = vmatpush2.bf16.msra.mxu0 %v2217
    %2750 = vmatprep.subr.bf16.mxu0 %v2210
    %2751 = vmatpush2.bf16.msra.mxu0 %v2209
    %2752 = vmatprep.subr.bf16.mxu0 %v2202
    %2753 = vmatpush2.bf16.msra.mxu0 %v2201
    %2754 = vmatprep.subr.bf16.mxu0 %v2194
    %2755 = vmatpush2.bf16.msra.mxu0 %v2193
    %2756 = vmatprep.mubr.bf16.mxu0 %v930
    %2757 = vmatmul.mubr.bf16.gmra.mxu0 %v929
    %v2758 = vpop.f32.mrf.mxu0
    %v2759 = vadd.f32 %v2716, %v2758
    %v2760 = vpop.f32.mrf.mxu0
    %v2761 = vadd.f32 %v2718, %v2760
    %v2762 = vpop.f32.mrf.mxu0
    %v2763 = vadd.f32 %v2720, %v2762
    %v2764 = vpop.f32.mrf.mxu0
    %v2765 = vadd.f32 %v2722, %v2764
    %2766 = vdwg.mxu0
    %2767 = vmatprep.subr.bf16.mxu0 %v2060
    %2768 = vmatpush1.bf16.msra.mxu0 %v2059
    %2769 = vmatprep.subr.bf16.mxu0 %v2052
    %2770 = vmatpush1.bf16.msra.mxu0 %v2051
    %2771 = vmatprep.subr.bf16.mxu0 %v2044
    %2772 = vmatpush1.bf16.msra.mxu0 %v2043
    %2773 = vmatprep.subr.bf16.mxu0 %v2036
    %2774 = vmatpush1.bf16.msra.mxu0 %v2035
    %2775 = vmatprep.subr.bf16.mxu0 %v2028
    %2776 = vmatpush1.bf16.msra.mxu0 %v2027
    %2777 = vmatprep.subr.bf16.mxu0 %v2020
    %2778 = vmatpush1.bf16.msra.mxu0 %v2019
    %2779 = vmatprep.subr.bf16.mxu0 %v2012
    %2780 = vmatpush1.bf16.msra.mxu0 %v2011
    %2781 = vmatprep.subr.bf16.mxu0 %v2004
    %2782 = vmatpush1.bf16.msra.mxu0 %v2003
    %2783 = vmatprep.subr.bf16.mxu0 %v2124
    %2784 = vmatpush2.bf16.msra.mxu0 %v2123
    %2785 = vmatprep.subr.bf16.mxu0 %v2116
    %2786 = vmatpush2.bf16.msra.mxu0 %v2115
    %2787 = vmatprep.subr.bf16.mxu0 %v2108
    %2788 = vmatpush2.bf16.msra.mxu0 %v2107
    %2789 = vmatprep.subr.bf16.mxu0 %v2100
    %2790 = vmatpush2.bf16.msra.mxu0 %v2099
    %2791 = vmatprep.subr.bf16.mxu0 %v2092
    %2792 = vmatpush2.bf16.msra.mxu0 %v2091
    %2793 = vmatprep.subr.bf16.mxu0 %v2084
    %2794 = vmatpush2.bf16.msra.mxu0 %v2083
    %2795 = vmatprep.subr.bf16.mxu0 %v2076
    %2796 = vmatpush2.bf16.msra.mxu0 %v2075
    %2797 = vmatprep.subr.bf16.mxu0 %v2068
    %2798 = vmatpush2.bf16.msra.mxu0 %v2067
    %2799 = vmatprep.mubr.bf16.mxu0 %v928
    %2800 = vmatmul.mubr.bf16.gmra.mxu0 %v927
    %v2801 = vpop.f32.mrf.mxu0
    %v2802 = vadd.f32 %v1216, %v2801
    %v2803 = vpop.f32.mrf.mxu0
    %v2804 = vadd.f32 %v1220, %v2803
    %v2805 = vpop.f32.mrf.mxu0
    %v2806 = vadd.f32 %v1216, %v2805
    %v2807 = vpop.f32.mrf.mxu0
    %v2808 = vadd.f32 %v1220, %v2807
    %2809 = vdwg.mxu0
    %2810 = vmatprep.subr.bf16.mxu0 %v2188
    %2811 = vmatpush1.bf16.msra.mxu0 %v2187
    %2812 = vmatprep.subr.bf16.mxu0 %v2180
    %2813 = vmatpush1.bf16.msra.mxu0 %v2179
    %2814 = vmatprep.subr.bf16.mxu0 %v2172
    %2815 = vmatpush1.bf16.msra.mxu0 %v2171
    %2816 = vmatprep.subr.bf16.mxu0 %v2164
    %2817 = vmatpush1.bf16.msra.mxu0 %v2163
    %2818 = vmatprep.subr.bf16.mxu0 %v2156
    %2819 = vmatpush1.bf16.msra.mxu0 %v2155
    %2820 = vmatprep.subr.bf16.mxu0 %v2148
    %2821 = vmatpush1.bf16.msra.mxu0 %v2147
    %2822 = vmatprep.subr.bf16.mxu0 %v2140
    %2823 = vmatpush1.bf16.msra.mxu0 %v2139
    %2824 = vmatprep.subr.bf16.mxu0 %v2132
    %2825 = vmatpush1.bf16.msra.mxu0 %v2131
    %2826 = vmatprep.subr.bf16.mxu0 %v2252
    %2827 = vmatpush2.bf16.msra.mxu0 %v2251
    %2828 = vmatprep.subr.bf16.mxu0 %v2244
    %2829 = vmatpush2.bf16.msra.mxu0 %v2243
    %2830 = vmatprep.subr.bf16.mxu0 %v2236
    %2831 = vmatpush2.bf16.msra.mxu0 %v2235
    %2832 = vmatprep.subr.bf16.mxu0 %v2228
    %2833 = vmatpush2.bf16.msra.mxu0 %v2227
    %2834 = vmatprep.subr.bf16.mxu0 %v2220
    %2835 = vmatpush2.bf16.msra.mxu0 %v2219
    %2836 = vmatprep.subr.bf16.mxu0 %v2212
    %2837 = vmatpush2.bf16.msra.mxu0 %v2211
    %2838 = vmatprep.subr.bf16.mxu0 %v2204
    %2839 = vmatpush2.bf16.msra.mxu0 %v2203
    %2840 = vmatprep.subr.bf16.mxu0 %v2196
    %2841 = vmatpush2.bf16.msra.mxu0 %v2195
    %2842 = vmatprep.mubr.bf16.mxu0 %v930
    %2843 = vmatmul.mubr.bf16.gmra.mxu0 %v929
    %v2844 = vpop.f32.mrf.mxu0
    %v2845 = vadd.f32 %v2802, %v2844
    %v2846 = vpop.f32.mrf.mxu0
    %v2847 = vadd.f32 %v2804, %v2846
    %v2848 = vpop.f32.mrf.mxu0
    %v2849 = vadd.f32 %v2806, %v2848
    %v2850 = vpop.f32.mrf.mxu0
    %v2851 = vadd.f32 %v2808, %v2850
    %2852 = vdwg.mxu0
    %v2853 = vmul.f32 %v2587, 0.2
    %v2854 = vmul.f32 %v2589, 0.2
    %v2855 = vmul.f32 %v2673, 0.2
    %v2856 = vmul.f32 %v2675, 0.2
    %v2857 = vmul.f32 %v2759, 0.2
    %v2858 = vmul.f32 %v2761, 0.2
    %v2859 = vmul.f32 %v2845, 0.2
    %v2860 = vmul.f32 %v2847, 0.2
    %v2861 = vmul.f32 %v2591, 0.2
    %v2862 = vmul.f32 %v2593, 0.2
    %v2863 = vmul.f32 %v2677, 0.2
    %v2864 = vmul.f32 %v2679, 0.2
    %v2865 = vmul.f32 %v2763, 0.2
    %v2866 = vmul.f32 %v2765, 0.2
    %v2867 = vmul.f32 %v2849, 0.2
    %v2868 = vmul.f32 %v2851, 0.2
    %v2869 = vmax.f32 %v2587, %v2853
    %v2870 = vmax.f32 %v2589, %v2854
    %v2871 = vmax.f32 %v2673, %v2855
    %v2872 = vmax.f32 %v2675, %v2856
    %v2873 = vmax.f32 %v2759, %v2857
    %v2874 = vmax.f32 %v2761, %v2858
    %v2875 = vmax.f32 %v2845, %v2859
    %v2876 = vmax.f32 %v2847, %v2860
    %v2877 = vmax.f32 %v2591, %v2861
    %v2878 = vmax.f32 %v2593, %v2862
    %v2879 = vmax.f32 %v2677, %v2863
    %v2880 = vmax.f32 %v2679, %v2864
    %v2881 = vmax.f32 %v2763, %v2865
    %v2882 = vmax.f32 %v2765, %v2866
    %v2883 = vmax.f32 %v2849, %v2867
    %v2884 = vmax.f32 %v2851, %v2868
    %v2885 = vpack.c.bf16 %v2877, %v2869
    %v2886 = vpack.c.bf16 %v2878, %v2870
    %v2887 = vpack.c.bf16 %v2879, %v2871
    %v2888 = vpack.c.bf16 %v2880, %v2872
    %v2889 = vpack.c.bf16 %v2881, %v2873
    %v2890 = vpack.c.bf16 %v2882, %v2874
    %v2891 = vpack.c.bf16 %v2883, %v2875
    %v2892 = vpack.c.bf16 %v2884, %v2876
    %v2893 = vld [vmem:[#allocation13] sm:$0xf]
    %v2894 = vld [vmem:[#allocation13 + $0x4] sm:$0xf]
    %v2895 = vld [vmem:[#allocation13 + $0x8] sm:$0xf]
    %v2896 = vld [vmem:[#allocation13 + $0xc] sm:$0xf]
    %v2897 = vld [vmem:[#allocation13 + $0x10] sm:$0xf]
    %v2898 = vld [vmem:[#allocation13 + $0x14] sm:$0xf]
    %v2899 = vld [vmem:[#allocation13 + $0x18] sm:$0xf]
    %v2900 = vld [vmem:[#allocation13 + $0x1c] sm:$0xf]
    %v2901 = vld [vmem:[#allocation13 + $0x20] sm:$0xf]
    %v2902 = vld [vmem:[#allocation13 + $0x24] sm:$0xf]
    %v2903 = vld [vmem:[#allocation13 + $0x28] sm:$0xf]
    %v2904 = vld [vmem:[#allocation13 + $0x2c] sm:$0xf]
    %v2905 = vld [vmem:[#allocation13 + $0x30] sm:$0xf]
    %v2906 = vld [vmem:[#allocation13 + $0x34] sm:$0xf]
    %v2907 = vld [vmem:[#allocation13 + $0x38] sm:$0xf]
    %v2908 = vld [vmem:[#allocation13 + $0x3c] sm:$0xf]
    %v2909 = vld [vmem:[#allocation13 + $0x40] sm:$0xf]
    %v2910 = vld [vmem:[#allocation13 + $0x44] sm:$0xf]
    %v2911 = vld [vmem:[#allocation13 + $0x48] sm:$0xf]
    %v2912 = vld [vmem:[#allocation13 + $0x4c] sm:$0xf]
    %v2913 = vld [vmem:[#allocation13 + $0x50] sm:$0xf]
    %v2914 = vld [vmem:[#allocation13 + $0x54] sm:$0xf]
    %v2915 = vld [vmem:[#allocation13 + $0x58] sm:$0xf]
    %v2916 = vld [vmem:[#allocation13 + $0x5c] sm:$0xf]
    %v2917 = vld [vmem:[#allocation13 + $0x60] sm:$0xf]
    %v2918 = vld [vmem:[#allocation13 + $0x64] sm:$0xf]
    %v2919 = vld [vmem:[#allocation13 + $0x68] sm:$0xf]
    %v2920 = vld [vmem:[#allocation13 + $0x6c] sm:$0xf]
    %v2921 = vld [vmem:[#allocation13 + $0x70] sm:$0xf]
    %v2922 = vld [vmem:[#allocation13 + $0x74] sm:$0xf]
    %v2923 = vld [vmem:[#allocation13 + $0x78] sm:$0xf]
    %v2924 = vld [vmem:[#allocation13 + $0x7c] sm:$0xf]
    %v2925 = vld [vmem:[#allocation13 + $0x80] sm:$0xf]
    %v2926 = vld [vmem:[#allocation13 + $0x84] sm:$0xf]
    %v2927 = vld [vmem:[#allocation13 + $0x88] sm:$0xf]
    %v2928 = vld [vmem:[#allocation13 + $0x8c] sm:$0xf]
    %v2929 = vld [vmem:[#allocation13 + $0x90] sm:$0xf]
    %v2930 = vld [vmem:[#allocation13 + $0x94] sm:$0xf]
    %v2931 = vld [vmem:[#allocation13 + $0x98] sm:$0xf]
    %v2932 = vld [vmem:[#allocation13 + $0x9c] sm:$0xf]
    %v2933 = vld [vmem:[#allocation13 + $0xa0] sm:$0xf]
    %v2934 = vld [vmem:[#allocation13 + $0xa4] sm:$0xf]
    %v2935 = vld [vmem:[#allocation13 + $0xa8] sm:$0xf]
    %v2936 = vld [vmem:[#allocation13 + $0xac] sm:$0xf]
    %v2937 = vld [vmem:[#allocation13 + $0xb0] sm:$0xf]
    %v2938 = vld [vmem:[#allocation13 + $0xb4] sm:$0xf]
    %v2939 = vld [vmem:[#allocation13 + $0xb8] sm:$0xf]
    %v2940 = vld [vmem:[#allocation13 + $0xbc] sm:$0xf]
    %v2941 = vld [vmem:[#allocation13 + $0xc0] sm:$0xf]
    %v2942 = vld [vmem:[#allocation13 + $0xc4] sm:$0xf]
    %v2943 = vld [vmem:[#allocation13 + $0xc8] sm:$0xf]
    %v2944 = vld [vmem:[#allocation13 + $0xcc] sm:$0xf]
    %v2945 = vld [vmem:[#allocation13 + $0xd0] sm:$0xf]
    %v2946 = vld [vmem:[#allocation13 + $0xd4] sm:$0xf]
    %v2947 = vld [vmem:[#allocation13 + $0xd8] sm:$0xf]
    %v2948 = vld [vmem:[#allocation13 + $0xdc] sm:$0xf]
    %v2949 = vld [vmem:[#allocation13 + $0xe0] sm:$0xf]
    %v2950 = vld [vmem:[#allocation13 + $0xe4] sm:$0xf]
    %v2951 = vld [vmem:[#allocation13 + $0xe8] sm:$0xf]
    %v2952 = vld [vmem:[#allocation13 + $0xec] sm:$0xf]
    %v2953 = vld [vmem:[#allocation13 + $0xf0] sm:$0xf]
    %v2954 = vld [vmem:[#allocation13 + $0xf4] sm:$0xf]
    %v2955 = vld [vmem:[#allocation13 + $0xf8] sm:$0xf]
    %v2956 = vld [vmem:[#allocation13 + $0xfc] sm:$0xf]
    %v2957 = vld [vmem:[#allocation13 + $0x100] sm:$0xf]
    %v2958 = vld [vmem:[#allocation13 + $0x104] sm:$0xf]
    %v2959 = vld [vmem:[#allocation13 + $0x108] sm:$0xf]
    %v2960 = vld [vmem:[#allocation13 + $0x10c] sm:$0xf]
    %v2961 = vld [vmem:[#allocation13 + $0x110] sm:$0xf]
    %v2962 = vld [vmem:[#allocation13 + $0x114] sm:$0xf]
    %v2963 = vld [vmem:[#allocation13 + $0x118] sm:$0xf]
    %v2964 = vld [vmem:[#allocation13 + $0x11c] sm:$0xf]
    %v2965 = vld [vmem:[#allocation13 + $0x120] sm:$0xf]
    %v2966 = vld [vmem:[#allocation13 + $0x124] sm:$0xf]
    %v2967 = vld [vmem:[#allocation13 + $0x128] sm:$0xf]
    %v2968 = vld [vmem:[#allocation13 + $0x12c] sm:$0xf]
    %v2969 = vld [vmem:[#allocation13 + $0x130] sm:$0xf]
    %v2970 = vld [vmem:[#allocation13 + $0x134] sm:$0xf]
    %v2971 = vld [vmem:[#allocation13 + $0x138] sm:$0xf]
    %v2972 = vld [vmem:[#allocation13 + $0x13c] sm:$0xf]
    %v2973 = vld [vmem:[#allocation13 + $0x140] sm:$0xf]
    %v2974 = vld [vmem:[#allocation13 + $0x144] sm:$0xf]
    %v2975 = vld [vmem:[#allocation13 + $0x148] sm:$0xf]
    %v2976 = vld [vmem:[#allocation13 + $0x14c] sm:$0xf]
    %v2977 = vld [vmem:[#allocation13 + $0x150] sm:$0xf]
    %v2978 = vld [vmem:[#allocation13 + $0x154] sm:$0xf]
    %v2979 = vld [vmem:[#allocation13 + $0x158] sm:$0xf]
    %v2980 = vld [vmem:[#allocation13 + $0x15c] sm:$0xf]
    %v2981 = vld [vmem:[#allocation13 + $0x160] sm:$0xf]
    %v2982 = vld [vmem:[#allocation13 + $0x164] sm:$0xf]
    %v2983 = vld [vmem:[#allocation13 + $0x168] sm:$0xf]
    %v2984 = vld [vmem:[#allocation13 + $0x16c] sm:$0xf]
    %v2985 = vld [vmem:[#allocation13 + $0x170] sm:$0xf]
    %v2986 = vld [vmem:[#allocation13 + $0x174] sm:$0xf]
    %v2987 = vld [vmem:[#allocation13 + $0x178] sm:$0xf]
    %v2988 = vld [vmem:[#allocation13 + $0x17c] sm:$0xf]
    %v2989 = vld [vmem:[#allocation13 + $0x180] sm:$0xf]
    %v2990 = vld [vmem:[#allocation13 + $0x184] sm:$0xf]
    %v2991 = vld [vmem:[#allocation13 + $0x188] sm:$0xf]
    %v2992 = vld [vmem:[#allocation13 + $0x18c] sm:$0xf]
    %v2993 = vld [vmem:[#allocation13 + $0x190] sm:$0xf]
    %v2994 = vld [vmem:[#allocation13 + $0x194] sm:$0xf]
    %v2995 = vld [vmem:[#allocation13 + $0x198] sm:$0xf]
    %v2996 = vld [vmem:[#allocation13 + $0x19c] sm:$0xf]
    %v2997 = vld [vmem:[#allocation13 + $0x1a0] sm:$0xf]
    %v2998 = vld [vmem:[#allocation13 + $0x1a4] sm:$0xf]
    %v2999 = vld [vmem:[#allocation13 + $0x1a8] sm:$0xf]
    %v3000 = vld [vmem:[#allocation13 + $0x1ac] sm:$0xf]
    %v3001 = vld [vmem:[#allocation13 + $0x1b0] sm:$0xf]
    %v3002 = vld [vmem:[#allocation13 + $0x1b4] sm:$0xf]
    %v3003 = vld [vmem:[#allocation13 + $0x1b8] sm:$0xf]
    %v3004 = vld [vmem:[#allocation13 + $0x1bc] sm:$0xf]
    %v3005 = vld [vmem:[#allocation13 + $0x1c0] sm:$0xf]
    %v3006 = vld [vmem:[#allocation13 + $0x1c4] sm:$0xf]
    %v3007 = vld [vmem:[#allocation13 + $0x1c8] sm:$0xf]
    %v3008 = vld [vmem:[#allocation13 + $0x1cc] sm:$0xf]
    %v3009 = vld [vmem:[#allocation13 + $0x1d0] sm:$0xf]
    %v3010 = vld [vmem:[#allocation13 + $0x1d4] sm:$0xf]
    %v3011 = vld [vmem:[#allocation13 + $0x1d8] sm:$0xf]
    %v3012 = vld [vmem:[#allocation13 + $0x1dc] sm:$0xf]
    %v3013 = vld [vmem:[#allocation13 + $0x1e0] sm:$0xf]
    %v3014 = vld [vmem:[#allocation13 + $0x1e4] sm:$0xf]
    %v3015 = vld [vmem:[#allocation13 + $0x1e8] sm:$0xf]
    %v3016 = vld [vmem:[#allocation13 + $0x1ec] sm:$0xf]
    %v3017 = vld [vmem:[#allocation13 + $0x1f0] sm:$0xf]
    %v3018 = vld [vmem:[#allocation13 + $0x1f4] sm:$0xf]
    %v3019 = vld [vmem:[#allocation13 + $0x1f8] sm:$0xf]
    %v3020 = vld [vmem:[#allocation13 + $0x1fc] sm:$0xf]
    %v3021 = vld [vmem:[%s10] sm:$0x1]
    %v3023 = vlaneseq
    %v3024 = vshrl.u32 %v3023, 7
    %v3025 = vsub.s32 0, %v3024
    %v3026 = vrot.slane %v3021, %v3025
    %v3156 = vunpack.c.l.b16 %v2893
    %v3157 = vunpack.c.l.b16 %v2894
    %v3158 = vunpack.c.l.b16 %v2895
    %v3159 = vunpack.c.l.b16 %v2896
    %v3160 = vunpack.c.l.b16 %v2897
    %v3161 = vunpack.c.l.b16 %v2898
    %v3162 = vunpack.c.l.b16 %v2899
    %v3163 = vunpack.c.l.b16 %v2900
    %v3164 = vunpack.c.l.b16 %v2901
    %v3165 = vunpack.c.l.b16 %v2902
    %v3166 = vunpack.c.l.b16 %v2903
    %v3167 = vunpack.c.l.b16 %v2904
    %v3168 = vunpack.c.l.b16 %v2905
    %v3169 = vunpack.c.l.b16 %v2906
    %v3170 = vunpack.c.l.b16 %v2907
    %v3171 = vunpack.c.l.b16 %v2908
    %v3172 = vunpack.c.l.b16 %v2909
    %v3173 = vunpack.c.l.b16 %v2910
    %v3174 = vunpack.c.l.b16 %v2911
    %v3175 = vunpack.c.l.b16 %v2912
    %v3176 = vunpack.c.l.b16 %v2913
    %v3177 = vunpack.c.l.b16 %v2914
    %v3178 = vunpack.c.l.b16 %v2915
    %v3179 = vunpack.c.l.b16 %v2916
    %v3180 = vunpack.c.l.b16 %v2917
    %v3181 = vunpack.c.l.b16 %v2918
    %v3182 = vunpack.c.l.b16 %v2919
    %v3183 = vunpack.c.l.b16 %v2920
    %v3184 = vunpack.c.l.b16 %v2921
    %v3185 = vunpack.c.l.b16 %v2922
    %v3186 = vunpack.c.l.b16 %v2923
    %v3187 = vunpack.c.l.b16 %v2924
    %v3188 = vunpack.c.l.b16 %v2925
    %v3189 = vunpack.c.l.b16 %v2926
    %v3190 = vunpack.c.l.b16 %v2927
    %v3191 = vunpack.c.l.b16 %v2928
    %v3192 = vunpack.c.l.b16 %v2929
    %v3193 = vunpack.c.l.b16 %v2930
    %v3194 = vunpack.c.l.b16 %v2931
    %v3195 = vunpack.c.l.b16 %v2932
    %v3196 = vunpack.c.l.b16 %v2933
    %v3197 = vunpack.c.l.b16 %v2934
    %v3198 = vunpack.c.l.b16 %v2935
    %v3199 = vunpack.c.l.b16 %v2936
    %v3200 = vunpack.c.l.b16 %v2937
    %v3201 = vunpack.c.l.b16 %v2938
    %v3202 = vunpack.c.l.b16 %v2939
    %v3203 = vunpack.c.l.b16 %v2940
    %v3204 = vunpack.c.l.b16 %v2941
    %v3205 = vunpack.c.l.b16 %v2942
    %v3206 = vunpack.c.l.b16 %v2943
    %v3207 = vunpack.c.l.b16 %v2944
    %v3208 = vunpack.c.l.b16 %v2945
    %v3209 = vunpack.c.l.b16 %v2946
    %v3210 = vunpack.c.l.b16 %v2947
    %v3211 = vunpack.c.l.b16 %v2948
    %v3212 = vunpack.c.l.b16 %v2949
    %v3213 = vunpack.c.l.b16 %v2950
    %v3214 = vunpack.c.l.b16 %v2951
    %v3215 = vunpack.c.l.b16 %v2952
    %v3216 = vunpack.c.l.b16 %v2953
    %v3217 = vunpack.c.l.b16 %v2954
    %v3218 = vunpack.c.l.b16 %v2955
    %v3219 = vunpack.c.l.b16 %v2956
    %v3220 = vunpack.c.l.b16 %v2957
    %v3221 = vunpack.c.l.b16 %v2958
    %v3222 = vunpack.c.l.b16 %v2959
    %v3223 = vunpack.c.l.b16 %v2960
    %v3224 = vunpack.c.l.b16 %v2961
    %v3225 = vunpack.c.l.b16 %v2962
    %v3226 = vunpack.c.l.b16 %v2963
    %v3227 = vunpack.c.l.b16 %v2964
    %v3228 = vunpack.c.l.b16 %v2965
    %v3229 = vunpack.c.l.b16 %v2966
    %v3230 = vunpack.c.l.b16 %v2967
    %v3231 = vunpack.c.l.b16 %v2968
    %v3232 = vunpack.c.l.b16 %v2969
    %v3233 = vunpack.c.l.b16 %v2970
    %v3234 = vunpack.c.l.b16 %v2971
    %v3235 = vunpack.c.l.b16 %v2972
    %v3236 = vunpack.c.l.b16 %v2973
    %v3237 = vunpack.c.l.b16 %v2974
    %v3238 = vunpack.c.l.b16 %v2975
    %v3239 = vunpack.c.l.b16 %v2976
    %v3240 = vunpack.c.l.b16 %v2977
    %v3241 = vunpack.c.l.b16 %v2978
    %v3242 = vunpack.c.l.b16 %v2979
    %v3243 = vunpack.c.l.b16 %v2980
    %v3244 = vunpack.c.l.b16 %v2981
    %v3245 = vunpack.c.l.b16 %v2982
    %v3246 = vunpack.c.l.b16 %v2983
    %v3247 = vunpack.c.l.b16 %v2984
    %v3248 = vunpack.c.l.b16 %v2985
    %v3249 = vunpack.c.l.b16 %v2986
    %v3250 = vunpack.c.l.b16 %v2987
    %v3251 = vunpack.c.l.b16 %v2988
    %v3252 = vunpack.c.l.b16 %v2989
    %v3253 = vunpack.c.l.b16 %v2990
    %v3254 = vunpack.c.l.b16 %v2991
    %v3255 = vunpack.c.l.b16 %v2992
    %v3256 = vunpack.c.l.b16 %v2993
    %v3257 = vunpack.c.l.b16 %v2994
    %v3258 = vunpack.c.l.b16 %v2995
    %v3259 = vunpack.c.l.b16 %v2996
    %v3260 = vunpack.c.l.b16 %v2997
    %v3261 = vunpack.c.l.b16 %v2998
    %v3262 = vunpack.c.l.b16 %v2999
    %v3263 = vunpack.c.l.b16 %v3000
    %v3264 = vunpack.c.l.b16 %v3001
    %v3265 = vunpack.c.l.b16 %v3002
    %v3266 = vunpack.c.l.b16 %v3003
    %v3267 = vunpack.c.l.b16 %v3004
    %v3268 = vunpack.c.l.b16 %v3005
    %v3269 = vunpack.c.l.b16 %v3006
    %v3270 = vunpack.c.l.b16 %v3007
    %v3271 = vunpack.c.l.b16 %v3008
    %v3272 = vunpack.c.l.b16 %v3009
    %v3273 = vunpack.c.l.b16 %v3010
    %v3274 = vunpack.c.l.b16 %v3011
    %v3275 = vunpack.c.l.b16 %v3012
    %v3276 = vunpack.c.l.b16 %v3013
    %v3277 = vunpack.c.l.b16 %v3014
    %v3278 = vunpack.c.l.b16 %v3015
    %v3279 = vunpack.c.l.b16 %v3016
    %v3280 = vunpack.c.l.b16 %v3017
    %v3281 = vunpack.c.l.b16 %v3018
    %v3282 = vunpack.c.l.b16 %v3019
    %v3283 = vunpack.c.l.b16 %v3020
    %v3284 = vpack.c.b16 %v3157, %v3156
    %v3285 = vpack.c.b16 %v3159, %v3158
    %v3286 = vpack.c.b16 %v3161, %v3160
    %v3287 = vpack.c.b16 %v3163, %v3162
    %v3288 = vpack.c.b16 %v3165, %v3164
    %v3289 = vpack.c.b16 %v3167, %v3166
    %v3290 = vpack.c.b16 %v3169, %v3168
    %v3291 = vpack.c.b16 %v3171, %v3170
    %v3292 = vpack.c.b16 %v3173, %v3172
    %v3293 = vpack.c.b16 %v3175, %v3174
    %v3294 = vpack.c.b16 %v3177, %v3176
    %v3295 = vpack.c.b16 %v3179, %v3178
    %v3296 = vpack.c.b16 %v3181, %v3180
    %v3297 = vpack.c.b16 %v3183, %v3182
    %v3298 = vpack.c.b16 %v3185, %v3184
    %v3299 = vpack.c.b16 %v3187, %v3186
    %v3300 = vpack.c.b16 %v3189, %v3188
    %v3301 = vpack.c.b16 %v3191, %v3190
    %v3302 = vpack.c.b16 %v3193, %v3192
    %v3303 = vpack.c.b16 %v3195, %v3194
    %v3304 = vpack.c.b16 %v3197, %v3196
    %v3305 = vpack.c.b16 %v3199, %v3198
    %v3306 = vpack.c.b16 %v3201, %v3200
    %v3307 = vpack.c.b16 %v3203, %v3202
    %v3308 = vpack.c.b16 %v3205, %v3204
    %v3309 = vpack.c.b16 %v3207, %v3206
    %v3310 = vpack.c.b16 %v3209, %v3208
    %v3311 = vpack.c.b16 %v3211, %v3210
    %v3312 = vpack.c.b16 %v3213, %v3212
    %v3313 = vpack.c.b16 %v3215, %v3214
    %v3314 = vpack.c.b16 %v3217, %v3216
    %v3315 = vpack.c.b16 %v3219, %v3218
    %v3316 = vpack.c.b16 %v3221, %v3220
    %v3317 = vpack.c.b16 %v3223, %v3222
    %v3318 = vpack.c.b16 %v3225, %v3224
    %v3319 = vpack.c.b16 %v3227, %v3226
    %v3320 = vpack.c.b16 %v3229, %v3228
    %v3321 = vpack.c.b16 %v3231, %v3230
    %v3322 = vpack.c.b16 %v3233, %v3232
    %v3323 = vpack.c.b16 %v3235, %v3234
    %v3324 = vpack.c.b16 %v3237, %v3236
    %v3325 = vpack.c.b16 %v3239, %v3238
    %v3326 = vpack.c.b16 %v3241, %v3240
    %v3327 = vpack.c.b16 %v3243, %v3242
    %v3328 = vpack.c.b16 %v3245, %v3244
    %v3329 = vpack.c.b16 %v3247, %v3246
    %v3330 = vpack.c.b16 %v3249, %v3248
    %v3331 = vpack.c.b16 %v3251, %v3250
    %v3332 = vpack.c.b16 %v3253, %v3252
    %v3333 = vpack.c.b16 %v3255, %v3254
    %v3334 = vpack.c.b16 %v3257, %v3256
    %v3335 = vpack.c.b16 %v3259, %v3258
    %v3336 = vpack.c.b16 %v3261, %v3260
    %v3337 = vpack.c.b16 %v3263, %v3262
    %v3338 = vpack.c.b16 %v3265, %v3264
    %v3339 = vpack.c.b16 %v3267, %v3266
    %v3340 = vpack.c.b16 %v3269, %v3268
    %v3341 = vpack.c.b16 %v3271, %v3270
    %v3342 = vpack.c.b16 %v3273, %v3272
    %v3343 = vpack.c.b16 %v3275, %v3274
    %v3344 = vpack.c.b16 %v3277, %v3276
    %v3345 = vpack.c.b16 %v3279, %v3278
    %v3346 = vpack.c.b16 %v3281, %v3280
    %v3347 = vpack.c.b16 %v3283, %v3282
    %3412 = vmatprep.subr.bf16.mxu0 0
    %3413 = vmatpush1.bf16.msra.mxu0 %v3291
    %3414 = vmatprep.subr.bf16.mxu0 0
    %3415 = vmatpush1.bf16.msra.mxu0 %v3290
    %3416 = vmatprep.subr.bf16.mxu0 0
    %3417 = vmatpush1.bf16.msra.mxu0 %v3289
    %3418 = vmatprep.subr.bf16.mxu0 0
    %3419 = vmatpush1.bf16.msra.mxu0 %v3288
    %3420 = vmatprep.subr.bf16.mxu0 0
    %3421 = vmatpush1.bf16.msra.mxu0 %v3287
    %3422 = vmatprep.subr.bf16.mxu0 0
    %3423 = vmatpush1.bf16.msra.mxu0 %v3286
    %3424 = vmatprep.subr.bf16.mxu0 0
    %3425 = vmatpush1.bf16.msra.mxu0 %v3285
    %3426 = vmatprep.subr.bf16.mxu0 0
    %3427 = vmatpush1.bf16.msra.mxu0 %v3284
    %3428 = vmatprep.subr.bf16.mxu0 0
    %3429 = vmatpush2.bf16.msra.mxu0 %v3299
    %3430 = vmatprep.subr.bf16.mxu0 0
    %3431 = vmatpush2.bf16.msra.mxu0 %v3298
    %3432 = vmatprep.subr.bf16.mxu0 0
    %3433 = vmatpush2.bf16.msra.mxu0 %v3297
    %3434 = vmatprep.subr.bf16.mxu0 0
    %3435 = vmatpush2.bf16.msra.mxu0 %v3296
    %3436 = vmatprep.subr.bf16.mxu0 0
    %3437 = vmatpush2.bf16.msra.mxu0 %v3295
    %3438 = vmatprep.subr.bf16.mxu0 0
    %3439 = vmatpush2.bf16.msra.mxu0 %v3294
    %3440 = vmatprep.subr.bf16.mxu0 0
    %3441 = vmatpush2.bf16.msra.mxu0 %v3293
    %3442 = vmatprep.subr.bf16.mxu0 0
    %3443 = vmatpush2.bf16.msra.mxu0 %v3292
    %3444 = vmatprep.mubr.bf16.mxu0 %v2886
    %3445 = vmatmul.mubr.bf16.gmra.mxu0 %v2885
    %v3446 = vpop.f32.mrf.mxu0
    %v3447 = vadd.f32 %v3026, %v3446
    %v3448 = vpop.f32.mrf.mxu0
    %v3449 = vpop.f32.mrf.mxu0
    %v3450 = vadd.f32 %v3026, %v3449
    %v3451 = vpop.f32.mrf.mxu0
    %3452 = vdwg.mxu0
    %3453 = vmatprep.subr.bf16.mxu0 0
    %3454 = vmatpush1.bf16.msra.mxu0 %v3307
    %3455 = vmatprep.subr.bf16.mxu0 0
    %3456 = vmatpush1.bf16.msra.mxu0 %v3306
    %3457 = vmatprep.subr.bf16.mxu0 0
    %3458 = vmatpush1.bf16.msra.mxu0 %v3305
    %3459 = vmatprep.subr.bf16.mxu0 0
    %3460 = vmatpush1.bf16.msra.mxu0 %v3304
    %3461 = vmatprep.subr.bf16.mxu0 0
    %3462 = vmatpush1.bf16.msra.mxu0 %v3303
    %3463 = vmatprep.subr.bf16.mxu0 0
    %3464 = vmatpush1.bf16.msra.mxu0 %v3302
    %3465 = vmatprep.subr.bf16.mxu0 0
    %3466 = vmatpush1.bf16.msra.mxu0 %v3301
    %3467 = vmatprep.subr.bf16.mxu0 0
    %3468 = vmatpush1.bf16.msra.mxu0 %v3300
    %3469 = vmatprep.subr.bf16.mxu0 0
    %3470 = vmatpush2.bf16.msra.mxu0 %v3315
    %3471 = vmatprep.subr.bf16.mxu0 0
    %3472 = vmatpush2.bf16.msra.mxu0 %v3314
    %3473 = vmatprep.subr.bf16.mxu0 0
    %3474 = vmatpush2.bf16.msra.mxu0 %v3313
    %3475 = vmatprep.subr.bf16.mxu0 0
    %3476 = vmatpush2.bf16.msra.mxu0 %v3312
    %3477 = vmatprep.subr.bf16.mxu0 0
    %3478 = vmatpush2.bf16.msra.mxu0 %v3311
    %3479 = vmatprep.subr.bf16.mxu0 0
    %3480 = vmatpush2.bf16.msra.mxu0 %v3310
    %3481 = vmatprep.subr.bf16.mxu0 0
    %3482 = vmatpush2.bf16.msra.mxu0 %v3309
    %3483 = vmatprep.subr.bf16.mxu0 0
    %3484 = vmatpush2.bf16.msra.mxu0 %v3308
    %3485 = vmatprep.mubr.bf16.mxu0 %v2888
    %3486 = vmatmul.mubr.bf16.gmra.mxu0 %v2887
    %v3487 = vpop.f32.mrf.mxu0
    %v3488 = vadd.f32 %v3447, %v3487
    %v3489 = vpop.f32.mrf.mxu0
    %v3490 = vpop.f32.mrf.mxu0
    %v3491 = vadd.f32 %v3450, %v3490
    %v3492 = vpop.f32.mrf.mxu0
    %3493 = vdwg.mxu0
    %3494 = vmatprep.subr.bf16.mxu0 0
    %3495 = vmatpush1.bf16.msra.mxu0 %v3323
    %3496 = vmatprep.subr.bf16.mxu0 0
    %3497 = vmatpush1.bf16.msra.mxu0 %v3322
    %3498 = vmatprep.subr.bf16.mxu0 0
    %3499 = vmatpush1.bf16.msra.mxu0 %v3321
    %3500 = vmatprep.subr.bf16.mxu0 0
    %3501 = vmatpush1.bf16.msra.mxu0 %v3320
    %3502 = vmatprep.subr.bf16.mxu0 0
    %3503 = vmatpush1.bf16.msra.mxu0 %v3319
    %3504 = vmatprep.subr.bf16.mxu0 0
    %3505 = vmatpush1.bf16.msra.mxu0 %v3318
    %3506 = vmatprep.subr.bf16.mxu0 0
    %3507 = vmatpush1.bf16.msra.mxu0 %v3317
    %3508 = vmatprep.subr.bf16.mxu0 0
    %3509 = vmatpush1.bf16.msra.mxu0 %v3316
    %3510 = vmatprep.subr.bf16.mxu0 0
    %3511 = vmatpush2.bf16.msra.mxu0 %v3331
    %3512 = vmatprep.subr.bf16.mxu0 0
    %3513 = vmatpush2.bf16.msra.mxu0 %v3330
    %3514 = vmatprep.subr.bf16.mxu0 0
    %3515 = vmatpush2.bf16.msra.mxu0 %v3329
    %3516 = vmatprep.subr.bf16.mxu0 0
    %3517 = vmatpush2.bf16.msra.mxu0 %v3328
    %3518 = vmatprep.subr.bf16.mxu0 0
    %3519 = vmatpush2.bf16.msra.mxu0 %v3327
    %3520 = vmatprep.subr.bf16.mxu0 0
    %3521 = vmatpush2.bf16.msra.mxu0 %v3326
    %3522 = vmatprep.subr.bf16.mxu0 0
    %3523 = vmatpush2.bf16.msra.mxu0 %v3325
    %3524 = vmatprep.subr.bf16.mxu0 0
    %3525 = vmatpush2.bf16.msra.mxu0 %v3324
    %3526 = vmatprep.mubr.bf16.mxu0 %v2890
    %3527 = vmatmul.mubr.bf16.gmra.mxu0 %v2889
    %v3528 = vpop.f32.mrf.mxu0
    %v3529 = vadd.f32 %v3488, %v3528
    %v3530 = vpop.f32.mrf.mxu0
    %v3531 = vpop.f32.mrf.mxu0
    %v3532 = vadd.f32 %v3491, %v3531
    %v3533 = vpop.f32.mrf.mxu0
    %3534 = vdwg.mxu0
    %3535 = vmatprep.subr.bf16.mxu0 0
    %3536 = vmatpush1.bf16.msra.mxu0 %v3339
    %3537 = vmatprep.subr.bf16.mxu0 0
    %3538 = vmatpush1.bf16.msra.mxu0 %v3338
    %3539 = vmatprep.subr.bf16.mxu0 0
    %3540 = vmatpush1.bf16.msra.mxu0 %v3337
    %3541 = vmatprep.subr.bf16.mxu0 0
    %3542 = vmatpush1.bf16.msra.mxu0 %v3336
    %3543 = vmatprep.subr.bf16.mxu0 0
    %3544 = vmatpush1.bf16.msra.mxu0 %v3335
    %3545 = vmatprep.subr.bf16.mxu0 0
    %3546 = vmatpush1.bf16.msra.mxu0 %v3334
    %3547 = vmatprep.subr.bf16.mxu0 0
    %3548 = vmatpush1.bf16.msra.mxu0 %v3333
    %3549 = vmatprep.subr.bf16.mxu0 0
    %3550 = vmatpush1.bf16.msra.mxu0 %v3332
    %3551 = vmatprep.subr.bf16.mxu0 0
    %3552 = vmatpush2.bf16.msra.mxu0 %v3347
    %3553 = vmatprep.subr.bf16.mxu0 0
    %3554 = vmatpush2.bf16.msra.mxu0 %v3346
    %3555 = vmatprep.subr.bf16.mxu0 0
    %3556 = vmatpush2.bf16.msra.mxu0 %v3345
    %3557 = vmatprep.subr.bf16.mxu0 0
    %3558 = vmatpush2.bf16.msra.mxu0 %v3344
    %3559 = vmatprep.subr.bf16.mxu0 0
    %3560 = vmatpush2.bf16.msra.mxu0 %v3343
    %3561 = vmatprep.subr.bf16.mxu0 0
    %3562 = vmatpush2.bf16.msra.mxu0 %v3342
    %3563 = vmatprep.subr.bf16.mxu0 0
    %3564 = vmatpush2.bf16.msra.mxu0 %v3341
    %3565 = vmatprep.subr.bf16.mxu0 0
    %3566 = vmatpush2.bf16.msra.mxu0 %v3340
    %3567 = vmatprep.mubr.bf16.mxu0 %v2892
    %3568 = vmatmul.mubr.bf16.gmra.mxu0 %v2891
    %v3569 = vpop.f32.mrf.mxu0
    %v3570 = vadd.f32 %v3529, %v3569
    %v3571 = vpop.f32.mrf.mxu0
    %v3572 = vpop.f32.mrf.mxu0
    %v3573 = vadd.f32 %v3532, %v3572
    %v3574 = vpop.f32.mrf.mxu0
    %3575 = vdwg.mxu0
    %v3576 = vtanh.pop %v3570
    %v3577 = vtanh.pop %v3573
    %3578 = vst [vmem:[#allocation14] sm:$0xff] %v3576
    %3579 = vst [vmem:[#allocation14 + $0x8] sm:$0xff] %v3577
    // Predicated region
    $region74: #{tpu_custom_call.1} parent=1 // pred_check
      _
    $region75: #{tpu_custom_call.1} parent=1 // pred_check_branch
      %3581 = sbr.rel (0) target = $region77
    $region76: #{tpu_custom_call.1} parent=1 // pred_region
      %s3583 = ssub.s32 256, 256
      %3584 = vsyncadd [#allocation4], %s3583
      %s3585 = sshll.u32 [#allocation14], 4
      %s3586 = int_to_ptr.vmem [resolvable:$true] %s3585
      %3591 = dma.vmem_to_hbm [thread:$0]  %s3586, 256, %s11, [#allocation4], 128, 128, 8
    $region77: #{tpu_custom_call.1} parent=1 // pred_fallthru
      _
    // Predicated region
    $region78: #{tpu_custom_call.1} parent=1 // pred_check
      _
    $region79: #{tpu_custom_call.1} parent=1 // pred_check_branch
      %3593 = sbr.rel (0) target = $region81
    $region80: #{tpu_custom_call.1} parent=1 // pred_region
      %3594 = dma.done [#allocation4], 256
    $region81: #{tpu_custom_call.1} parent=1 // pred_fallthru
      _
    %3595 = vsyncpa [#allocation3], 1
    %3596 = vsyncpa [#allocation6], 1
    %3597 = vsyncpa [#allocation9], 1
    %3598 = vsyncpa [#allocation12], 1
    %3599 = vsyncpa [#allocation4], 1

</llo_original>
